<compile_context>
chip_gen: v5e
topology: v5e:2x2
jax: 0.10.0
libtpu: 0.0.40
codegen_flags: <defaults>
</compile_context>

<pallas_src>
import functools

import jax
import jax.numpy as jnp
from jax.experimental import pallas as pl
from jax.experimental.pallas import tpu as pltpu

LANE = 128

# Rows of the packed (16, 128) f32 vector-parameter slab.
_R_LN1W, _R_LN1B, _R_LN2W, _R_LN2B = 0, 1, 2, 3
_R_BQ, _R_BK, _R_BV, _R_BO = 4, 5, 6, 7
_R_BM1, _R_BM2, _R_BC = 8, 9, 10


def _layernorm(x, w, b, eps=1e-5):
    mu = jnp.mean(x, axis=-1, keepdims=True)
    var = jnp.mean(jnp.square(x - mu), axis=-1, keepdims=True)
    return (x - mu) * jax.lax.rsqrt(var + eps) * w + b


def _eftt_kernel(p_ref, w640_ref, wk64_ref, vec_ref, o_ref, *,
                 d, n_tok, block_b, kp, c1tp):
    f32, bf16 = jnp.float32, jnp.bfloat16

    vec = vec_ref[...]                                    # (16, 128) f32
    ln1w = vec[_R_LN1W:_R_LN1W + 1, :d]
    ln1b = vec[_R_LN1B:_R_LN1B + 1, :d]
    ln2w = vec[_R_LN2W:_R_LN2W + 1, :d]
    ln2b = vec[_R_LN2B:_R_LN2B + 1, :d]
    bq = vec[_R_BQ:_R_BQ + 1, :]                          # scale-folded, padded
    bk = vec[_R_BK:_R_BK + 1, :]
    bv = vec[_R_BV:_R_BV + 1, :]
    bo = vec[_R_BO:_R_BO + 1, :d]
    bm1 = vec[_R_BM1:_R_BM1 + 1, :]
    bm2 = vec[_R_BM2:_R_BM2 + 1, :d]
    bc = vec[_R_BC:_R_BC + 1, :]

    # Static, tile-aligned slices of the two packed bf16 weight slabs.
    w1bd = w640_ref[0:kp, :]                              # (384, 640) block-diag conv1
    wqkv = w640_ref[kp:kp + d, 0:3 * LANE]                # (64, 384)  q|k|v padded
    wm1 = w640_ref[kp:kp + d, 3 * LANE:4 * LANE]          # (64, 128)
    wcls = w640_ref[kp:kp + d, 4 * LANE:5 * LANE]         # (64, 128)
    w2c = wk64_ref[0:c1tp, :]                             # (640, 64)  row-concat conv2
    wo = wk64_ref[c1tp:c1tp + LANE, :]                    # (128, 64)
    wm2 = wk64_ref[c1tp + LANE:c1tp + 2 * LANE, :]        # (128, 64)

    # --- FasterNet (Embeding conv+BN+ReLU, Mering conv+BN+ReLU): the 9x conv1
    #     evaluation and the 9 conv2 taps collapse into TWO well-shaped MXU
    #     contractions; the constant-1 patch column carries both folded BN
    #     biases, so there is no separate bias add.
    p = p_ref[...]                                        # (M, 384) bf16, M = BB*144
    y1 = jnp.dot(p, w1bd, preferred_element_type=f32)     # conv1 (+b1), all taps
    y1 = jnp.maximum(y1, 0.0)
    x = jnp.dot(y1.astype(bf16), w2c, preferred_element_type=f32)   # conv2 (+b2)
    x = jnp.maximum(x, 0.0)                               # tokens (M, 64)

    # --- Residual(LN -> single-head attention).  Fused qkv projection,
    #     1/sqrt(D) folded into Wq/bq, softmax normalized AFTER the PV matmul.
    xn = _layernorm(x, ln1w, ln1b).astype(bf16)
    qkv = jnp.dot(xn, wqkv, preferred_element_type=f32)   # (M, 384)
    q = (qkv[:, 0:LANE] + bq).astype(bf16)
    k = (qkv[:, LANE:2 * LANE] + bk).astype(bf16)
    v = (qkv[:, 2 * LANE:3 * LANE] + bv).astype(bf16)
    outs = []
    for s in range(block_b):                              # per-sample (144,144) scores
        lo = s * n_tok
        qs, ks, vs = q[lo:lo + n_tok], k[lo:lo + n_tok], v[lo:lo + n_tok]
        dots = jax.lax.dot_general(qs, ks, (((1,), (1,)), ((), ())),
                                   preferred_element_type=f32)
        dots = dots - jnp.max(dots, axis=-1, keepdims=True)
        e = jnp.exp(dots)
        inv = pl.reciprocal(jnp.sum(e, axis=-1, keepdims=True), approx=True)
        pv = jnp.dot(e.astype(bf16), vs, preferred_element_type=f32)
        outs.append(pv * inv)                             # (n_tok, 128)
    att = outs[0] if block_b == 1 else jnp.concatenate(outs, axis=0)
    x = x + jnp.dot(att.astype(bf16), wo, preferred_element_type=f32) + bo

    # --- Residual(LN -> MLP); tanh-approx GELU runs on the EUP.
    # TODO(synk): PyTorch nn.GELU is exact erf; tanh approximation deviates ~1e-3.
    xn = _layernorm(x, ln2w, ln2b).astype(bf16)
    h = jnp.dot(xn, wm1, preferred_element_type=f32) + bm1
    h = jax.nn.gelu(h, approximate=True)
    x = x + jnp.dot(h.astype(bf16), wm2, preferred_element_type=f32) + bm2

    # --- Per-sample mean over tokens, classifier into a lane-dense 128 slab.
    pm = jnp.sum(x.reshape(block_b, n_tok, d), axis=1) * (1.0 / n_tok)
    logits = jnp.dot(pm.astype(bf16), wcls, preferred_element_type=f32) + bc
    o_ref[0] = logits                                     # (BB, 128)


def eftt_forward(x_nchw, kparams, num_classes, block_b=None):
    w640, wk64, vecs, dims = kparams
    kp, c1tp, d = dims

    # torch.squeeze(x): drops ALL size-1 dims.  TODO(synk): exactly like the
    # PyTorch reference, a batch of 1 would lose its batch axis here.
    x = jnp.squeeze(x_nchw)
    x = jnp.transpose(x, (0, 2, 3, 1)).astype(jnp.float32)     # NCHW -> NHWC
    B, H, W, Ci = x.shape
    Ho1, Wo1 = H - 2, W - 2
    Ho2, Wo2 = Ho1 - 2, Wo1 - 2
    n_tok = Ho2 * Wo2
    kraw = 9 * 9 * Ci
    assert kraw + 1 <= kp

    # Composed, lane-dense im2col (layout glue on a tiny input): column block
    # t=(dh2,dw2) holds conv1's 3x3xCi patch anchored at (h+dh2, w+dw2); one
    # extra constant-1 column injects the folded BN biases inside the kernel.
    # TODO(synk): at much larger batch this ~108 KB/sample im2col becomes the
    # dominant HBM term; then pass the raw NHWC image and do the tap shifts
    # in-kernel with pltpu.roll / sublane slices instead.
    cols = [x[:, dh:dh + Ho1, dw:dw + Wo1, :]
            for dh in range(3) for dw in range(3)]
    p1 = jnp.concatenate(cols, axis=-1)                        # (B,14,14,9Ci)
    taps = [p1[:, dh:dh + Ho2, dw:dw + Wo2, :]
            for dh in range(3) for dw in range(3)]
    patches = jnp.concatenate(taps, axis=-1).reshape(B, n_tok, kraw)
    patches = jnp.concatenate(
        [patches, jnp.ones((B, n_tok, 1), jnp.float32),
         jnp.zeros((B, n_tok, kp - kraw - 1), jnp.float32)], axis=-1)
    patches = patches.astype(jnp.bfloat16)

    # Samples per grid step: fatter steps amortize per-step overhead on the
    # single-TC chips (v5e/v6e) while keeping grid >= 2 so both v7x cores work.
    if block_b is None:
        block_b = max(1, min(16, pl.cdiv(B, 2)))
    nb = pl.cdiv(B, block_b)
    bpad = nb * block_b
    if bpad != B:
        patches = jnp.pad(patches, ((0, bpad - B), (0, 0), (0, 0)))
    patches = patches.reshape(bpad * n_tok, kp)

    kern = functools.partial(_eftt_kernel, d=d, n_tok=n_tok, block_b=block_b,
                             kp=kp, c1tp=c1tp)
    out = pl.pallas_call(
        kern,
        out_shape=jax.ShapeDtypeStruct((nb, block_b, LANE), jnp.float32),
        grid=(nb,),
        in_specs=[
            pl.BlockSpec((block_b * n_tok, kp), lambda i: (i, 0)),
            pl.BlockSpec(w640.shape, lambda i: (0, 0)),
            pl.BlockSpec(wk64.shape, lambda i: (0, 0)),
            pl.BlockSpec(vecs.shape, lambda i: (0, 0)),
        ],
        out_specs=pl.BlockSpec((1, block_b, LANE), lambda i: (i, 0, 0)),
        compiler_params=pltpu.CompilerParams(
            dimension_semantics=("parallel",)),
    )(patches, w640, wk64, vecs)
    return out.reshape(bpad, LANE)[:B, :num_classes]


# ----------------------------------------------------------------------------
# Deterministic synthetic parameters (BN folded, eval mode) packed for the
# kernel: two bf16 weight slabs + one (16,128) f32 slab of vector params.
# ----------------------------------------------------------------------------
def _fold_bn(key, c, eps=1e-5):
    k1, k2, k3, k4 = jax.random.split(key, 4)
    gamma = 1.0 + 0.1 * jax.random.normal(k1, (c,), jnp.float32)
    beta = 0.05 * jax.random.normal(k2, (c,), jnp.float32)
    rmean = 0.1 * jax.random.normal(k3, (c,), jnp.float32)
    rvar = 1.0 + jnp.abs(jax.random.normal(k4, (c,), jnp.float32))
    scale = gamma * jax.lax.rsqrt(rvar + eps)
    bias = beta - rmean * scale
    return scale, bias


def init_packed_params(key, channels, faster_dim, hidden_dim, dim, mlp_dim,
                       num_classes):
    assert hidden_dim == dim and mlp_dim <= LANE and num_classes <= LANE
    ks = jax.random.split(key, 16)
    u = lambda k, shape, s: jax.random.uniform(k, shape, jnp.float32, -s, s)

    ci, c1, d = channels, faster_dim, dim
    k1 = 9 * ci                              # conv1 im2col rows per tap (36)
    kraw = 9 * k1                            # composed-im2col width (324)
    kp = pl.cdiv(kraw + 1, LANE) * LANE      # + bias column, lane-padded (384)
    c1pad = 64                               # conv1 channels padded 40 -> 64
    c1t = 9 * c1pad                          # concatenated conv1 taps (576)
    c1tp = c1t + 64                          # + pad; last col carries conv2 bias (640)

    # Embeding conv (fold BN), block-diagonalised over the 9 conv2 taps; row
    # `kraw` (the constant-1 patch column) injects the conv1 bias per tap and
    # a 1.0 into column c1tp-1 so conv2's bias can ride the next matmul.
    emb_w = u(ks[0], (3, 3, ci, c1), 0.25)
    s1, bias1 = _fold_bn(ks[1], c1)
    w1f = jnp.pad(emb_w.reshape(k1, c1) * s1[None, :], ((0, 0), (0, c1pad - c1)))
    b1p = jnp.pad(bias1, (0, c1pad - c1))
    w1bd = jnp.zeros((kp, c1tp), jnp.float32)
    for t in range(9):
        w1bd = w1bd.at[t * k1:(t + 1) * k1, t * c1pad:(t + 1) * c1pad].set(w1f)
    w1bd = w1bd.at[kraw, 0:c1t].set(jnp.tile(b1p, 9))
    w1bd = w1bd.at[kraw, c1tp - 1].set(1.0)

    # Mering conv (fold BN), 9 taps row-concatenated; conv2 bias on row c1tp-1.
    mer_w = u(ks[2], (3, 3, c1, d), 0.1)
    s2, bias2 = _fold_bn(ks[3], d)
    w2f = jnp.pad(mer_w.reshape(9, c1, d) * s2[None, None, :],
                  ((0, 0), (0, c1pad - c1), (0, 0)))
    w2cat = jnp.concatenate([w2f.reshape(c1t, d),
                             jnp.zeros((c1tp - c1t - 1, d), jnp.float32),
                             bias2[None, :]], axis=0)

    # Attention: fused q|k|v, each zero-padded to a 128-lane block; 1/sqrt(D)
    # folded into Wq and bq.
    scale = d ** -0.5
    wqkv = u(ks[4], (d, 3 * d), 0.1)
    bqkv = u(ks[5], (3 * d,), 0.05)
    wo = u(ks[6], (d, d), 0.1)
    bo = u(ks[7], (d,), 0.05)
    padl = lambda w: jnp.pad(w, ((0, 0), (0, LANE - d)))
    wqkv_p = jnp.concatenate([padl(wqkv[:, 0:d] * scale),
                              padl(wqkv[:, d:2 * d]),
                              padl(wqkv[:, 2 * d:3 * d])], axis=1)   # (64, 384)
    wo_p = jnp.pad(wo, ((0, LANE - d), (0, 0)))                      # (128, 64)

    # MLP + classifier (hidden 8 and classes 10 zero-padded to 128 lanes).
    wm1 = u(ks[8], (d, mlp_dim), 0.1)
    bm1 = u(ks[9], (mlp_dim,), 0.05)
    wm2 = u(ks[10], (mlp_dim, d), 0.1)
    bm2 = u(ks[11], (d,), 0.05)
    wcls = u(ks[12], (d, num_classes), 0.2)          # xavier-uniform-like
    bcls = 1e-6 * jax.random.normal(ks[13], (num_classes,), jnp.float32)
    wm1_p = jnp.pad(wm1, ((0, 0), (0, LANE - mlp_dim)))
    wm2_p = jnp.pad(wm2, ((0, LANE - mlp_dim), (0, 0)))
    wcls_p = jnp.pad(wcls, ((0, 0), (0, LANE - num_classes)))

    # Two contiguous bf16 slabs (fewer DMA descriptors):
    #   w640 (kp+d, c1tp):  [ block-diag conv1 ; qkv | mlp1 | classifier ]
    #   wk64 (c1tp+256, d): [ conv2 taps ; attn-out ; mlp2 ]
    wd = jnp.concatenate([wqkv_p, wm1_p, wcls_p], axis=1)
    assert wd.shape == (d, c1tp)
    w640 = jnp.concatenate([w1bd, wd], axis=0).astype(jnp.bfloat16)
    wk64 = jnp.concatenate([w2cat, wo_p, wm2_p], axis=0).astype(jnp.bfloat16)

    vecs = jnp.zeros((16, LANE), jnp.float32)
    put = lambda vs, row, v: vs.at[row, :v.shape[0]].set(v)
    vecs = put(vecs, _R_LN1W, jnp.ones((d,), jnp.float32))
    vecs = put(vecs, _R_LN1B, jnp.zeros((d,), jnp.float32))
    vecs = put(vecs, _R_LN2W, jnp.ones((d,), jnp.float32))
    vecs = put(vecs, _R_LN2B, jnp.zeros((d,), jnp.float32))
    vecs = put(vecs, _R_BQ, bqkv[0:d] * scale)
    vecs = put(vecs, _R_BK, bqkv[d:2 * d])
    vecs = put(vecs, _R_BV, bqkv[2 * d:3 * d])
    vecs = put(vecs, _R_BO, bo)
    vecs = put(vecs, _R_BM1, bm1)
    vecs = put(vecs, _R_BM2, bm2)
    vecs = put(vecs, _R_BC, bcls)

    dims = (kp, c1tp, d)
    return (w640, wk64, vecs, dims)


if __name__ == "__main__":
    # TODO(synk): EFTT's default faster_dim=42 is inconsistent with Embeding's
    # hard-coded 40 output channels (the PyTorch module as written would
    # crash); we use faster_dim=40 so the pipeline is shape-consistent.
    channels, faster_dim, hidden_dim, dim = 4, 40, 64, 64
    mlp_dim, num_classes = 8, 10

    key = jax.random.PRNGKey(0)
    kx, kp_ = jax.random.split(key)
    x = jax.random.normal(kx, (2, channels, 16, 16), jnp.float32)   # NCHW
    kparams = init_packed_params(kp_, channels, faster_dim, hidden_dim, dim,
                                 mlp_dim, num_classes)

    # Default blocking: block_b = cdiv(B, 2) -> grid=(2,) "parallel" (v7x).
    fwd = jax.jit(lambda a: eftt_forward(a, kparams, num_classes))
    logits = fwd(x)
    jax.block_until_ready(logits)
    assert logits.shape == (2, num_classes)
    assert bool(jnp.all(jnp.isfinite(logits)))

    # Multi-sample-per-step path (single-TC v5e/v6e blocking): 2 samples, 1 step.
    fwd2 = jax.jit(lambda a: eftt_forward(a, kparams, num_classes, block_b=2))
    logits2 = fwd2(x)
    jax.block_until_ready(logits2)
    assert logits2.shape == (2, num_classes)
    assert bool(jnp.all(jnp.isfinite(logits2)))
    assert bool(jnp.allclose(logits, logits2, rtol=5e-2, atol=5e-2))

    print("KERNEL_OK")
</pallas_src>

<mosaic_0001>
module attributes {stable_mosaic.version = 11 : i64} {
  func.func @_eftt_kernel(%arg0: i32, %arg1: memref<144x384xbf16, #tpu.memory_space<vmem>>, %arg2: memref<448x640xbf16, #tpu.memory_space<vmem>>, %arg3: memref<896x64xbf16, #tpu.memory_space<vmem>>, %arg4: memref<16x128xf32, #tpu.memory_space<vmem>>, %arg5: memref<1x1x128xf32, #tpu.memory_space<vmem>>) attributes {dimension_semantics = [#tpu.dimension_semantics<parallel>], iteration_bounds = array<i64: 2>, scalar_prefetch = 0 : i64, scratch_operands = 0 : i64, tpu.core_type = #tpu.core_type<tc>, window_params = [{transform_indices = @transform_0, window_bounds = array<i64: 144, 384>}, {pipeline_mode = #tpu.pipeline_mode<synchronous>, transform_indices = @transform_1, window_bounds = array<i64: 448, 640>}, {pipeline_mode = #tpu.pipeline_mode<synchronous>, transform_indices = @transform_2, window_bounds = array<i64: 896, 64>}, {pipeline_mode = #tpu.pipeline_mode<synchronous>, transform_indices = @transform_3, window_bounds = array<i64: 16, 128>}, {transform_indices = @transform_4, window_bounds = array<i64: 1, 1, 128>}]} {
    %c0 = arith.constant 0 : index
    %c0_0 = arith.constant 0 : index
    %0 = vector.load %arg4[%c0, %c0_0] : memref<16x128xf32, #tpu.memory_space<vmem>>, vector<16x128xf32>
    %1 = vector.extract_strided_slice %0 {offsets = [0, 0], sizes = [1, 64], strides = [1, 1]} : vector<16x128xf32> to vector<1x64xf32>
    %2 = vector.extract_strided_slice %0 {offsets = [1, 0], sizes = [1, 64], strides = [1, 1]} : vector<16x128xf32> to vector<1x64xf32>
    %3 = vector.extract_strided_slice %0 {offsets = [2, 0], sizes = [1, 64], strides = [1, 1]} : vector<16x128xf32> to vector<1x64xf32>
    %4 = vector.extract_strided_slice %0 {offsets = [3, 0], sizes = [1, 64], strides = [1, 1]} : vector<16x128xf32> to vector<1x64xf32>
    %5 = vector.extract_strided_slice %0 {offsets = [4, 0], sizes = [1, 128], strides = [1, 1]} : vector<16x128xf32> to vector<1x128xf32>
    %6 = vector.extract_strided_slice %0 {offsets = [5, 0], sizes = [1, 128], strides = [1, 1]} : vector<16x128xf32> to vector<1x128xf32>
    %7 = vector.extract_strided_slice %0 {offsets = [6, 0], sizes = [1, 128], strides = [1, 1]} : vector<16x128xf32> to vector<1x128xf32>
    %8 = vector.extract_strided_slice %0 {offsets = [7, 0], sizes = [1, 64], strides = [1, 1]} : vector<16x128xf32> to vector<1x64xf32>
    %9 = vector.extract_strided_slice %0 {offsets = [8, 0], sizes = [1, 128], strides = [1, 1]} : vector<16x128xf32> to vector<1x128xf32>
    %10 = vector.extract_strided_slice %0 {offsets = [9, 0], sizes = [1, 64], strides = [1, 1]} : vector<16x128xf32> to vector<1x64xf32>
    %11 = vector.extract_strided_slice %0 {offsets = [10, 0], sizes = [1, 128], strides = [1, 1]} : vector<16x128xf32> to vector<1x128xf32>
    %c0_1 = arith.constant 0 : index
    %c0_2 = arith.constant 0 : index
    %12 = vector.load %arg2[%c0_1, %c0_2] : memref<448x640xbf16, #tpu.memory_space<vmem>>, vector<384x640xbf16>
    %c384 = arith.constant 384 : index
    %c0_3 = arith.constant 0 : index
    %13 = vector.load %arg2[%c384, %c0_3] : memref<448x640xbf16, #tpu.memory_space<vmem>>, vector<64x384xbf16>
    %c384_4 = arith.constant 384 : index
    %c384_5 = arith.constant 384 : index
    %14 = vector.load %arg2[%c384_4, %c384_5] : memref<448x640xbf16, #tpu.memory_space<vmem>>, vector<64x128xbf16>
    %c384_6 = arith.constant 384 : index
    %c512 = arith.constant 512 : index
    %15 = vector.load %arg2[%c384_6, %c512] : memref<448x640xbf16, #tpu.memory_space<vmem>>, vector<64x128xbf16>
    %c0_7 = arith.constant 0 : index
    %c0_8 = arith.constant 0 : index
    %16 = vector.load %arg3[%c0_7, %c0_8] : memref<896x64xbf16, #tpu.memory_space<vmem>>, vector<640x64xbf16>
    %c640 = arith.constant 640 : index
    %c0_9 = arith.constant 0 : index
    %17 = vector.load %arg3[%c640, %c0_9] : memref<896x64xbf16, #tpu.memory_space<vmem>>, vector<128x64xbf16>
    %c768 = arith.constant 768 : index
    %c0_10 = arith.constant 0 : index
    %18 = vector.load %arg3[%c768, %c0_10] : memref<896x64xbf16, #tpu.memory_space<vmem>>, vector<128x64xbf16>
    %c0_11 = arith.constant 0 : index
    %c0_12 = arith.constant 0 : index
    %19 = vector.load %arg1[%c0_11, %c0_12] : memref<144x384xbf16, #tpu.memory_space<vmem>>, vector<144x384xbf16>
    %cst = arith.constant dense<0.000000e+00> : vector<144x640xf32>
    %20 = tpu.matmul %19, %12, %cst {dimension_numbers = #tpu.dot_dimension_numbers<[1], [0], [0], [1], [0, 0, 1, 1], [], []>} : vector<144x384xbf16>, vector<384x640xbf16>, vector<144x640xf32> -> vector<144x640xf32>
    %cst_13 = arith.constant 0.000000e+00 : f32
    %21 = vector.broadcast %cst_13 : f32 to vector<144x640xf32>
    %22 = arith.maximumf %20, %21 : vector<144x640xf32>
    %23 = arith.truncf %22 : vector<144x640xf32> to vector<144x640xbf16>
    %cst_14 = arith.constant dense<0.000000e+00> : vector<144x64xf32>
    %24 = tpu.matmul %23, %16, %cst_14 {dimension_numbers = #tpu.dot_dimension_numbers<[1], [0], [0], [1], [0, 0, 1, 1], [], []>} : vector<144x640xbf16>, vector<640x64xbf16>, vector<144x64xf32> -> vector<144x64xf32>
    %cst_15 = arith.constant 0.000000e+00 : f32
    %25 = vector.broadcast %cst_15 : f32 to vector<144x64xf32>
    %26 = arith.maximumf %24, %25 : vector<144x64xf32>
    %cst_16 = arith.constant dense<0.000000e+00> : vector<144xf32>
    %27 = vector.multi_reduction <add>, %26, %cst_16 [1] : vector<144x64xf32> to vector<144xf32>
    %28 = vector.shape_cast %27 : vector<144xf32> to vector<144x1xf32>
    %cst_17 = arith.constant 6.400000e+01 : f32
    %29 = vector.broadcast %cst_17 : f32 to vector<144x1xf32>
    %30 = arith.divf %28, %29 : vector<144x1xf32>
    %31 = vector.broadcast %30 : vector<144x1xf32> to vector<144x64xf32>
    %32 = arith.subf %26, %31 : vector<144x64xf32>
    %33 = arith.mulf %32, %32 : vector<144x64xf32>
    %cst_18 = arith.constant dense<0.000000e+00> : vector<144xf32>
    %34 = vector.multi_reduction <add>, %33, %cst_18 [1] : vector<144x64xf32> to vector<144xf32>
    %35 = vector.shape_cast %34 : vector<144xf32> to vector<144x1xf32>
    %cst_19 = arith.constant 6.400000e+01 : f32
    %36 = vector.broadcast %cst_19 : f32 to vector<144x1xf32>
    %37 = arith.divf %35, %36 : vector<144x1xf32>
    %38 = vector.broadcast %30 : vector<144x1xf32> to vector<144x64xf32>
    %39 = arith.subf %26, %38 : vector<144x64xf32>
    %cst_20 = arith.constant 9.99999974E-6 : f32
    %40 = vector.broadcast %cst_20 : f32 to vector<144x1xf32>
    %41 = arith.addf %37, %40 : vector<144x1xf32>
    %42 = math.rsqrt %41 : vector<144x1xf32>
    %43 = vector.broadcast %42 : vector<144x1xf32> to vector<144x64xf32>
    %44 = arith.mulf %39, %43 : vector<144x64xf32>
    %45 = vector.broadcast %1 : vector<1x64xf32> to vector<144x64xf32>
    %46 = arith.mulf %44, %45 : vector<144x64xf32>
    %47 = vector.broadcast %2 : vector<1x64xf32> to vector<144x64xf32>
    %48 = arith.addf %46, %47 : vector<144x64xf32>
    %49 = arith.truncf %48 : vector<144x64xf32> to vector<144x64xbf16>
    %cst_21 = arith.constant dense<0.000000e+00> : vector<144x384xf32>
    %50 = tpu.matmul %49, %13, %cst_21 {dimension_numbers = #tpu.dot_dimension_numbers<[1], [0], [0], [1], [0, 0, 1, 1], [], []>} : vector<144x64xbf16>, vector<64x384xbf16>, vector<144x384xf32> -> vector<144x384xf32>
    %51 = vector.extract_strided_slice %50 {offsets = [0, 0], sizes = [144, 128], strides = [1, 1]} : vector<144x384xf32> to vector<144x128xf32>
    %52 = vector.broadcast %5 : vector<1x128xf32> to vector<144x128xf32>
    %53 = arith.addf %51, %52 : vector<144x128xf32>
    %54 = arith.truncf %53 : vector<144x128xf32> to vector<144x128xbf16>
    %55 = vector.extract_strided_slice %50 {offsets = [0, 128], sizes = [144, 128], strides = [1, 1]} : vector<144x384xf32> to vector<144x128xf32>
    %56 = vector.broadcast %6 : vector<1x128xf32> to vector<144x128xf32>
    %57 = arith.addf %55, %56 : vector<144x128xf32>
    %58 = arith.truncf %57 : vector<144x128xf32> to vector<144x128xbf16>
    %59 = vector.extract_strided_slice %50 {offsets = [0, 256], sizes = [144, 128], strides = [1, 1]} : vector<144x384xf32> to vector<144x128xf32>
    %60 = vector.broadcast %7 : vector<1x128xf32> to vector<144x128xf32>
    %61 = arith.addf %59, %60 : vector<144x128xf32>
    %62 = arith.truncf %61 : vector<144x128xf32> to vector<144x128xbf16>
    %cst_22 = arith.constant dense<0.000000e+00> : vector<144x144xf32>
    %63 = tpu.matmul %54, %58, %cst_22 {dimension_numbers = #tpu.dot_dimension_numbers<[1], [1], [0], [0], [0, 0, 1, 0], [], []>} : vector<144x128xbf16>, vector<144x128xbf16>, vector<144x144xf32> -> vector<144x144xf32>
    %cst_23 = arith.constant dense<0xFF800000> : vector<144xf32>
    %64 = vector.multi_reduction <maximumf>, %63, %cst_23 [1] : vector<144x144xf32> to vector<144xf32>
    %65 = vector.shape_cast %64 : vector<144xf32> to vector<144x1xf32>
    %66 = vector.broadcast %65 : vector<144x1xf32> to vector<144x144xf32>
    %67 = arith.subf %63, %66 : vector<144x144xf32>
    %68 = math.exp %67 : vector<144x144xf32>
    %cst_24 = arith.constant dense<0.000000e+00> : vector<144xf32>
    %69 = vector.multi_reduction <add>, %68, %cst_24 [1] : vector<144x144xf32> to vector<144xf32>
    %70 = vector.shape_cast %69 : vector<144xf32> to vector<144x1xf32>
    %71 = tpu.reciprocal %70 {approx = true} : vector<144x1xf32> -> vector<144x1xf32>
    %72 = arith.truncf %68 : vector<144x144xf32> to vector<144x144xbf16>
    %cst_25 = arith.constant dense<0.000000e+00> : vector<144x128xf32>
    %73 = tpu.matmul %72, %62, %cst_25 {dimension_numbers = #tpu.dot_dimension_numbers<[1], [0], [0], [1], [0, 0, 1, 1], [], []>} : vector<144x144xbf16>, vector<144x128xbf16>, vector<144x128xf32> -> vector<144x128xf32>
    %74 = vector.broadcast %71 : vector<144x1xf32> to vector<144x128xf32>
    %75 = arith.mulf %73, %74 : vector<144x128xf32>
    %76 = arith.truncf %75 : vector<144x128xf32> to vector<144x128xbf16>
    %cst_26 = arith.constant dense<0.000000e+00> : vector<144x64xf32>
    %77 = tpu.matmul %76, %17, %cst_26 {dimension_numbers = #tpu.dot_dimension_numbers<[1], [0], [0], [1], [0, 0, 1, 1], [], []>} : vector<144x128xbf16>, vector<128x64xbf16>, vector<144x64xf32> -> vector<144x64xf32>
    %78 = arith.addf %26, %77 : vector<144x64xf32>
    %79 = vector.broadcast %8 : vector<1x64xf32> to vector<144x64xf32>
    %80 = arith.addf %78, %79 : vector<144x64xf32>
    %cst_27 = arith.constant dense<0.000000e+00> : vector<144xf32>
    %81 = vector.multi_reduction <add>, %80, %cst_27 [1] : vector<144x64xf32> to vector<144xf32>
    %82 = vector.shape_cast %81 : vector<144xf32> to vector<144x1xf32>
    %cst_28 = arith.constant 6.400000e+01 : f32
    %83 = vector.broadcast %cst_28 : f32 to vector<144x1xf32>
    %84 = arith.divf %82, %83 : vector<144x1xf32>
    %85 = vector.broadcast %84 : vector<144x1xf32> to vector<144x64xf32>
    %86 = arith.subf %80, %85 : vector<144x64xf32>
    %87 = arith.mulf %86, %86 : vector<144x64xf32>
    %cst_29 = arith.constant dense<0.000000e+00> : vector<144xf32>
    %88 = vector.multi_reduction <add>, %87, %cst_29 [1] : vector<144x64xf32> to vector<144xf32>
    %89 = vector.shape_cast %88 : vector<144xf32> to vector<144x1xf32>
    %cst_30 = arith.constant 6.400000e+01 : f32
    %90 = vector.broadcast %cst_30 : f32 to vector<144x1xf32>
    %91 = arith.divf %89, %90 : vector<144x1xf32>
    %92 = vector.broadcast %84 : vector<144x1xf32> to vector<144x64xf32>
    %93 = arith.subf %80, %92 : vector<144x64xf32>
    %cst_31 = arith.constant 9.99999974E-6 : f32
    %94 = vector.broadcast %cst_31 : f32 to vector<144x1xf32>
    %95 = arith.addf %91, %94 : vector<144x1xf32>
    %96 = math.rsqrt %95 : vector<144x1xf32>
    %97 = vector.broadcast %96 : vector<144x1xf32> to vector<144x64xf32>
    %98 = arith.mulf %93, %97 : vector<144x64xf32>
    %99 = vector.broadcast %3 : vector<1x64xf32> to vector<144x64xf32>
    %100 = arith.mulf %98, %99 : vector<144x64xf32>
    %101 = vector.broadcast %4 : vector<1x64xf32> to vector<144x64xf32>
    %102 = arith.addf %100, %101 : vector<144x64xf32>
    %103 = arith.truncf %102 : vector<144x64xf32> to vector<144x64xbf16>
    %cst_32 = arith.constant dense<0.000000e+00> : vector<144x128xf32>
    %104 = tpu.matmul %103, %14, %cst_32 {dimension_numbers = #tpu.dot_dimension_numbers<[1], [0], [0], [1], [0, 0, 1, 1], [], []>} : vector<144x64xbf16>, vector<64x128xbf16>, vector<144x128xf32> -> vector<144x128xf32>
    %105 = vector.broadcast %9 : vector<1x128xf32> to vector<144x128xf32>
    %106 = arith.addf %104, %105 : vector<144x128xf32>
    %107 = arith.mulf %106, %106 : vector<144x128xf32>
    %108 = arith.mulf %106, %107 : vector<144x128xf32>
    %cst_33 = arith.constant 4.471500e-02 : f32
    %109 = vector.broadcast %cst_33 : f32 to vector<144x128xf32>
    %110 = arith.mulf %109, %108 : vector<144x128xf32>
    %111 = arith.addf %106, %110 : vector<144x128xf32>
    %cst_34 = arith.constant 0.797884583 : f32
    %112 = vector.broadcast %cst_34 : f32 to vector<144x128xf32>
    %113 = arith.mulf %112, %111 : vector<144x128xf32>
    %114 = math.tanh %113 : vector<144x128xf32>
    %cst_35 = arith.constant 1.000000e+00 : f32
    %115 = vector.broadcast %cst_35 : f32 to vector<144x128xf32>
    %116 = arith.addf %115, %114 : vector<144x128xf32>
    %cst_36 = arith.constant 5.000000e-01 : f32
    %117 = vector.broadcast %cst_36 : f32 to vector<144x128xf32>
    %118 = arith.mulf %117, %116 : vector<144x128xf32>
    %119 = arith.mulf %106, %118 : vector<144x128xf32>
    %120 = arith.truncf %119 : vector<144x128xf32> to vector<144x128xbf16>
    %cst_37 = arith.constant dense<0.000000e+00> : vector<144x64xf32>
    %121 = tpu.matmul %120, %18, %cst_37 {dimension_numbers = #tpu.dot_dimension_numbers<[1], [0], [0], [1], [0, 0, 1, 1], [], []>} : vector<144x128xbf16>, vector<128x64xbf16>, vector<144x64xf32> -> vector<144x64xf32>
    %122 = arith.addf %80, %121 : vector<144x64xf32>
    %123 = vector.broadcast %10 : vector<1x64xf32> to vector<144x64xf32>
    %124 = arith.addf %122, %123 : vector<144x64xf32>
    %125 = vector.shape_cast %124 : vector<144x64xf32> to vector<1x144x64xf32>
    %cst_38 = arith.constant dense<0.000000e+00> : vector<1x64xf32>
    %126 = vector.multi_reduction <add>, %125, %cst_38 [1] : vector<1x144x64xf32> to vector<1x64xf32>
    %cst_39 = arith.constant 0.0069444445 : f32
    %127 = vector.broadcast %cst_39 : f32 to vector<1x64xf32>
    %128 = arith.mulf %126, %127 : vector<1x64xf32>
    %129 = arith.truncf %128 : vector<1x64xf32> to vector<1x64xbf16>
    %cst_40 = arith.constant dense<0.000000e+00> : vector<1x128xf32>
    %130 = tpu.matmul %129, %15, %cst_40 {dimension_numbers = #tpu.dot_dimension_numbers<[1], [0], [0], [1], [0, 0, 1, 1], [], []>} : vector<1x64xbf16>, vector<64x128xbf16>, vector<1x128xf32> -> vector<1x128xf32>
    %131 = arith.addf %130, %11 : vector<1x128xf32>
    %c0_41 = arith.constant 0 : index
    %c0_42 = arith.constant 0 : index
    %c0_43 = arith.constant 0 : index
    %132 = vector.load %arg5[%c0_41, %c0_42, %c0_43] : memref<1x1x128xf32, #tpu.memory_space<vmem>>, vector<1x1x128xf32>
    %133 = vector.shape_cast %132 : vector<1x1x128xf32> to vector<1x128xf32>
    %134 = vector.shape_cast %131 : vector<1x128xf32> to vector<1x1x128xf32>
    tpu.vector_store %arg5[%c0_41, %c0_42, %c0_43], %134 {strides = array<i32>} : memref<1x1x128xf32, #tpu.memory_space<vmem>>, vector<1x1x128xf32>,
    return
  }
  func.func @transform_0(%arg0: i32) -> (i32, i32) {
    %c0_i32 = arith.constant 0 : i32
    %c0_i32_0 = arith.constant 0 : i32
    return %arg0, %c0_i32 : i32, i32
  }
  func.func @transform_1(%arg0: i32) -> (i32, i32) {
    %c0_i32 = arith.constant 0 : i32
    %c0_i32_0 = arith.constant 0 : i32
    %c0_i32_1 = arith.constant 0 : i32
    return %c0_i32, %c0_i32_0 : i32, i32
  }
  func.func @transform_2(%arg0: i32) -> (i32, i32) {
    %c0_i32 = arith.constant 0 : i32
    %c0_i32_0 = arith.constant 0 : i32
    %c0_i32_1 = arith.constant 0 : i32
    return %c0_i32, %c0_i32_0 : i32, i32
  }
  func.func @transform_3(%arg0: i32) -> (i32, i32) {
    %c0_i32 = arith.constant 0 : i32
    %c0_i32_0 = arith.constant 0 : i32
    %c0_i32_1 = arith.constant 0 : i32
    return %c0_i32, %c0_i32_0 : i32, i32
  }
  func.func @transform_4(%arg0: i32) -> (i32, i32, i32) {
    %c0_i32 = arith.constant 0 : i32
    %c0_i32_0 = arith.constant 0 : i32
    %c0_i32_1 = arith.constant 0 : i32
    return %arg0, %c0_i32, %c0_i32_0 : i32, i32, i32
  }
}

</mosaic_0001>

<llo_original>
// kernel: _lambda_.1
$region0: #{_lambda_.1}
  #allocation0 [shape = 'u32[]', space=smem, size = 0x4, offset = 0x4, fixed_abs, tag = 'smem constant byte address 0x4 - core index']
  #allocation1 [shape = 'u32[72,128]{1,0:T(1,128)}', space=vmem, size = 0x9000, scoped, tag = 'internal scratch']
  %s0 = inlined_call_operand.vmem [shape: bf16[288,384], index: 0, kind: input, shape index: {}]
  %s1 = inlined_call_operand.vmem [shape: bf16[448,640], index: 1, kind: input, shape index: {}]
  %s2 = inlined_call_operand.vmem [shape: bf16[896,64], index: 2, kind: input, shape index: {}]
  %s3 = inlined_call_operand.vmem [shape: f32[16,128], index: 3, kind: input, shape index: {}]
  %s4 = inlined_call_operand.hbm [shape: f32[2,1,128], index: 4, kind: output, shape index: {}]
  %s5 = sld [smem:[#allocation0]]
  $region49: #{_lambda_.1} parent=0
    _
  %s7 = ssub.s32 1, %s5
  %s8 = scalar_select 0, %s7, %s5
  $region1: #{_lambda_.1} parent=0
    #allocation2 [shape = 'u8[1024]{0}', space=vmem, size = 0x400, scoped, tag = 'output window, operand 0']
    #allocation3 [shape = 's32[2]{0}', space=sflag, size = 0x8, scoped, tag = 'scoped memory for _lambda_.1']
    %9 = vsyncpa [#allocation3], 0
    %s10 = scalar_lea.sflag [#allocation3], 1
    %11 = vsyncpa %s10, 0
    loop: start=0, step=1, limit=4
    $region2: #{_lambda_.1} parent=1 // loop_pre_header
      _
    $region3: #{_lambda_.1} parent=1 // loop_header
      %s13 = sphi 0, %s17
      %p14 = scmp.ge.s32.totalorder %s13, 4
      %s23 = sphi 0, %s25
      %s26 = sphi 0, %s23
      %s27 = sphi 0, %s26
      %s43 = sphi 0, %s27
      %s47 = sphi 0, %s47
      %s49 = sphi 0, %s47
      %s50 = sphi 0, %s49
      %s64 = sphi 0, %s50
      %s68 = sphi 0, %s68
      %s70 = sphi 0, %s68
      %s71 = sphi 0, %s70
      %s85 = sphi 0, %s71
      %s89 = sphi 0, %s89
      %s91 = sphi 0, %s89
      %s92 = sphi 0, %s91
      %s106 = sphi 0, %s92
      %s112 = sphi 0, %s114
      %s115 = sphi 0, %s112
      %s116 = sphi 0, %s115
      %s132 = sphi 0, %s116
    $region4: #{_lambda_.1} parent=1 // loop_header_branch
      %16 = sbr.rel (%p14) target = $region8
    $region5: #{_lambda_.1} parent=1 // loop_body
      %s18 = ssub.s32 %s13, 1
      %s19 = ssub.s32 %s13, 2
      %s20 = sadd.s32 %s13, 1
      %s21 = ssub.s32 %s13, %s20
      %p22 = scmp.eq.s32.totalorder %s21, 0
      %s24 = sadd.s32 %s23, 1
      %s25 = scalar_select %p22, %s23, %s24
      %p28 = pneg %p22
      %p29 = scmp.eq.s32.totalorder %s13, 1
      %p30 = por %p28, %p29
      %p31 = scmp.ne.s32.totalorder %s23, %s26
      %p32 = scmp.eq.s32.totalorder %s13, 0
      %p33 = por %p31, %p32
      %p34 = scmp.ne.s32.totalorder %s23, %s26
      %p35 = scmp.eq.s32.totalorder %s18, 1
      %p36 = por %p34, %p35
      %p37 = scmp.ne.s32.totalorder %s26, %s27
      %p38 = scmp.eq.s32.totalorder %s18, 0
      %p39 = por %p37, %p38
      %p40 = scmp.ne.s32.totalorder %s26, %s27
      %p41 = scmp.eq.s32.totalorder %s19, 1
      %p42 = por %p40, %p41
      %p44 = scmp.ne.s32.totalorder %s27, %s43
      %p45 = scmp.eq.s32.totalorder %s19, 0
      %p46 = por %p44, %p45
      %s48 = sadd.s32 %s47, 1
      %p51 = scmp.eq.s32.totalorder %s13, 1
      %p52 = scmp.ne.s32.totalorder %s47, %s49
      %p53 = scmp.eq.s32.totalorder %s13, 0
      %p54 = por %p52, %p53
      %p55 = scmp.ne.s32.totalorder %s47, %s49
      %p56 = scmp.eq.s32.totalorder %s18, 1
      %p57 = por %p55, %p56
      %p58 = scmp.ne.s32.totalorder %s49, %s50
      %p59 = scmp.eq.s32.totalorder %s18, 0
      %p60 = por %p58, %p59
      %p61 = scmp.ne.s32.totalorder %s49, %s50
      %p62 = scmp.eq.s32.totalorder %s19, 1
      %p63 = por %p61, %p62
      %p65 = scmp.ne.s32.totalorder %s50, %s64
      %p66 = scmp.eq.s32.totalorder %s19, 0
      %p67 = por %p65, %p66
      %s69 = sadd.s32 %s68, 1
      %p72 = scmp.eq.s32.totalorder %s13, 1
      %p73 = scmp.ne.s32.totalorder %s68, %s70
      %p74 = scmp.eq.s32.totalorder %s13, 0
      %p75 = por %p73, %p74
      %p76 = scmp.ne.s32.totalorder %s68, %s70
      %p77 = scmp.eq.s32.totalorder %s18, 1
      %p78 = por %p76, %p77
      %p79 = scmp.ne.s32.totalorder %s70, %s71
      %p80 = scmp.eq.s32.totalorder %s18, 0
      %p81 = por %p79, %p80
      %p82 = scmp.ne.s32.totalorder %s70, %s71
      %p83 = scmp.eq.s32.totalorder %s19, 1
      %p84 = por %p82, %p83
      %p86 = scmp.ne.s32.totalorder %s71, %s85
      %p87 = scmp.eq.s32.totalorder %s19, 0
      %p88 = por %p86, %p87
      %s90 = sadd.s32 %s89, 1
      %p93 = scmp.eq.s32.totalorder %s13, 1
      %p94 = scmp.ne.s32.totalorder %s89, %s91
      %p95 = scmp.eq.s32.totalorder %s13, 0
      %p96 = por %p94, %p95
      %p97 = scmp.ne.s32.totalorder %s89, %s91
      %p98 = scmp.eq.s32.totalorder %s18, 1
      %p99 = por %p97, %p98
      %p100 = scmp.ne.s32.totalorder %s91, %s92
      %p101 = scmp.eq.s32.totalorder %s18, 0
      %p102 = por %p100, %p101
      %p103 = scmp.ne.s32.totalorder %s91, %s92
      %p104 = scmp.eq.s32.totalorder %s19, 1
      %p105 = por %p103, %p104
      %p107 = scmp.ne.s32.totalorder %s92, %s106
      %p108 = scmp.eq.s32.totalorder %s19, 0
      %p109 = por %p107, %p108
      %s110 = ssub.s32 %s13, %s20
      %p111 = scmp.eq.s32.totalorder %s110, 0
      %s113 = sadd.s32 %s112, 1
      %s114 = scalar_select %p111, %s112, %s113
      %p117 = pneg %p111
      %p118 = scmp.eq.s32.totalorder %s13, 1
      %p119 = por %p117, %p118
      %p120 = scmp.ne.s32.totalorder %s112, %s115
      %p121 = scmp.eq.s32.totalorder %s13, 0
      %p122 = por %p120, %p121
      %p123 = scmp.ne.s32.totalorder %s112, %s115
      %p124 = scmp.eq.s32.totalorder %s18, 1
      %p125 = por %p123, %p124
      %p126 = scmp.ne.s32.totalorder %s115, %s116
      %p127 = scmp.eq.s32.totalorder %s18, 0
      %p128 = por %p126, %p127
      %p129 = scmp.ne.s32.totalorder %s115, %s116
      %p130 = scmp.eq.s32.totalorder %s19, 1
      %p131 = por %p129, %p130
      %p133 = scmp.ne.s32.totalorder %s116, %s132
      %p134 = scmp.eq.s32.totalorder %s19, 0
      %p135 = por %p133, %p134
      %p136 = scmp.le.s32.totalorder 1, %s13
      %p137 = scmp.lt.s32.totalorder %s13, 3
      %p138 = pnand %p136, %p137
      %p139 = pneg %p138
      // Predicated region
      $region9: #{_lambda_.1} parent=5 // pred_check
        _
      $region10: #{_lambda_.1} parent=5 // pred_check_branch
        %141 = sbr.rel (%p138) target = $region12
      $region11: #{_lambda_.1} parent=5 // pred_region
        %s142 = ssub.s32 %s13, 1
        // Predicated region
        $region13: #{_lambda_.1} parent=11 // pred_check
          %p143 = pneg %p60
        $region14: #{_lambda_.1} parent=11 // pred_check_branch
          %145 = sbr.rel (%p143) target = $region16
        $region15: #{_lambda_.1} parent=11 // pred_region
          _
        $region16: #{_lambda_.1} parent=11 // pred_fallthru
          _
        // Predicated region
        $region17: #{_lambda_.1} parent=11 // pred_check
          %p146 = pneg %p81
        $region18: #{_lambda_.1} parent=11 // pred_check_branch
          %148 = sbr.rel (%p146) target = $region20
        $region19: #{_lambda_.1} parent=11 // pred_region
          _
        $region20: #{_lambda_.1} parent=11 // pred_fallthru
          _
        // Predicated region
        $region21: #{_lambda_.1} parent=11 // pred_check
          %p149 = pneg %p102
        $region22: #{_lambda_.1} parent=11 // pred_check_branch
          %151 = sbr.rel (%p149) target = $region24
        $region23: #{_lambda_.1} parent=11 // pred_region
          _
        $region24: #{_lambda_.1} parent=11 // pred_fallthru
          _
      $region12: #{_lambda_.1} parent=5 // pred_fallthru
        _
      %p152 = scmp.lt.s32.totalorder %s13, 2
      // Predicated region
      $region25: #{_lambda_.1} parent=5 // pred_check
        %p153 = pneg %p152
      $region26: #{_lambda_.1} parent=5 // pred_check_branch
        %155 = sbr.rel (%p153) target = $region28
      $region27: #{_lambda_.1} parent=5 // pred_region
        // Predicated region
        $region29: #{_lambda_.1} parent=27 // pred_check
          %p156 = pneg %p33
        $region30: #{_lambda_.1} parent=27 // pred_check_branch
          %158 = sbr.rel (%p156) target = $region32
        $region31: #{_lambda_.1} parent=27 // pred_region
          %s159 = smul.u32 18, %s13
          %p160 = scmp.lt.s32.totalorder %s159, 35
          %s161 = scalar_select %p160, %s159, 35
          %s162 = smul.addr %s161, 3
          %s163 = smul.addr %s162, 4
          %s164 = scalar_lea.vmem %s0, %s163
          %s165 = smul.u32 18, %s13
        $region32: #{_lambda_.1} parent=27 // pred_fallthru
          _
      $region28: #{_lambda_.1} parent=5 // pred_fallthru
        _
      %p166 = scmp.le.s32.totalorder 1, %s13
      %p167 = scmp.lt.s32.totalorder %s13, 3
      %p168 = pnand %p166, %p167
      %p169 = pneg %p168
      // Predicated region
      $region33: #{_lambda_.1} parent=5 // pred_check
        _
      $region34: #{_lambda_.1} parent=5 // pred_check_branch
        %171 = sbr.rel (%p168) target = $region36
      $region35: #{_lambda_.1} parent=5 // pred_region
        %s172 = ssub.s32 %s13, 1
        %s173 = smul.u32 18, %s18
        %p174 = scmp.lt.s32.totalorder %s173, 35
        %s175 = scalar_select %p174, %s173, 35
        %s176 = smul.addr %s175, 3
        %s177 = smul.addr %s176, 4
        %s178 = scalar_lea.vmem %s0, %s177
        %p179 = pneg %p39
        %p180 = pneg %p36
        %p181 = pneg %p60
        %p182 = pneg %p57
        %p183 = pneg %p81
        %p184 = pneg %p78
        %p185 = pneg %p102
        %p186 = pneg %p99
        %p187 = pneg %p128
        %p188 = pneg %p125
        %s189 = sand.u32 %s115, 1
        %s190 = scalar_lea.sflag [#allocation3], %s189
        %s191 = sand.u32 %s115, 1
        %s192 = scalar_lea.vmem [#allocation2], %s191
        %s193 = smul.u32 18, %s18
        %p194 = scmp.lt.s32.totalorder %s193, 35
        %s195 = scalar_select %p194, %s193, 35
        %s196 = smul.addr %s195, 3
        %s197 = smul.addr %s196, 4
        %s198 = scalar_lea.vmem %s0, %s197
        %s199 = smul.u32 18, %s18
        %v201 = vld [vmem:[%s3] sm:$0xff]
        %v202 = vld [vmem:[%s3 + $0x8] sm:$0xff]
        %v203 = vld [vmem:[%s1] sm:$0xff]
        %v204 = vld [vmem:[%s1 + $0x8] sm:$0xff]
        %v205 = vld [vmem:[%s1 + $0x10] sm:$0xf]
        %v206 = vld [vmem:[%s1 + $0x14] sm:$0xff]
        %v207 = vld [vmem:[%s1 + $0x1c] sm:$0xff]
        %v208 = vld [vmem:[%s1 + $0x24] sm:$0xf]
        %v209 = vld [vmem:[%s1 + $0x28] sm:$0xff]
        %v210 = vld [vmem:[%s1 + $0x30] sm:$0xff]
        %v211 = vld [vmem:[%s1 + $0x38] sm:$0xf]
        %v212 = vld [vmem:[%s1 + $0x3c] sm:$0xff]
        %v213 = vld [vmem:[%s1 + $0x44] sm:$0xff]
        %v214 = vld [vmem:[%s1 + $0x4c] sm:$0xf]
        %v215 = vld [vmem:[%s1 + $0x50] sm:$0xff]
        %v216 = vld [vmem:[%s1 + $0x58] sm:$0xff]
        %v217 = vld [vmem:[%s1 + $0x60] sm:$0xf]
        %v218 = vld [vmem:[%s1 + $0x64] sm:$0xff]
        %v219 = vld [vmem:[%s1 + $0x6c] sm:$0xff]
        %v220 = vld [vmem:[%s1 + $0x74] sm:$0xf]
        %v221 = vld [vmem:[%s1 + $0x78] sm:$0xff]
        %v222 = vld [vmem:[%s1 + $0x80] sm:$0xff]
        %v223 = vld [vmem:[%s1 + $0x88] sm:$0xf]
        %v224 = vld [vmem:[%s1 + $0x8c] sm:$0xff]
        %v225 = vld [vmem:[%s1 + $0x94] sm:$0xff]
        %v226 = vld [vmem:[%s1 + $0x9c] sm:$0xf]
        %v227 = vld [vmem:[%s1 + $0xa0] sm:$0xff]
        %v228 = vld [vmem:[%s1 + $0xa8] sm:$0xff]
        %v229 = vld [vmem:[%s1 + $0xb0] sm:$0xf]
        %v230 = vld [vmem:[%s1 + $0xb4] sm:$0xff]
        %v231 = vld [vmem:[%s1 + $0xbc] sm:$0xff]
        %v232 = vld [vmem:[%s1 + $0xc4] sm:$0xf]
        %v233 = vld [vmem:[%s1 + $0xc8] sm:$0xff]
        %v234 = vld [vmem:[%s1 + $0xd0] sm:$0xff]
        %v235 = vld [vmem:[%s1 + $0xd8] sm:$0xf]
        %v236 = vld [vmem:[%s1 + $0xdc] sm:$0xff]
        %v237 = vld [vmem:[%s1 + $0xe4] sm:$0xff]
        %v238 = vld [vmem:[%s1 + $0xec] sm:$0xf]
        %v239 = vld [vmem:[%s1 + $0xf0] sm:$0xff]
        %v240 = vld [vmem:[%s1 + $0xf8] sm:$0xff]
        %v241 = vld [vmem:[%s1 + $0x100] sm:$0xf]
        %v242 = vld [vmem:[%s1 + $0x104] sm:$0xff]
        %v243 = vld [vmem:[%s1 + $0x10c] sm:$0xff]
        %v244 = vld [vmem:[%s1 + $0x114] sm:$0xf]
        %v245 = vld [vmem:[%s1 + $0x118] sm:$0xff]
        %v246 = vld [vmem:[%s1 + $0x120] sm:$0xff]
        %v247 = vld [vmem:[%s1 + $0x128] sm:$0xf]
        %v248 = vld [vmem:[%s1 + $0x12c] sm:$0xff]
        %v249 = vld [vmem:[%s1 + $0x134] sm:$0xff]
        %v250 = vld [vmem:[%s1 + $0x13c] sm:$0xf]
        %v251 = vld [vmem:[%s1 + $0x140] sm:$0xff]
        %v252 = vld [vmem:[%s1 + $0x148] sm:$0xff]
        %v253 = vld [vmem:[%s1 + $0x150] sm:$0xf]
        %v254 = vld [vmem:[%s1 + $0x154] sm:$0xff]
        %v255 = vld [vmem:[%s1 + $0x15c] sm:$0xff]
        %v256 = vld [vmem:[%s1 + $0x164] sm:$0xf]
        %v257 = vld [vmem:[%s1 + $0x168] sm:$0xff]
        %v258 = vld [vmem:[%s1 + $0x170] sm:$0xff]
        %v259 = vld [vmem:[%s1 + $0x178] sm:$0xf]
        %v260 = vld [vmem:[%s1 + $0x17c] sm:$0xff]
        %v261 = vld [vmem:[%s1 + $0x184] sm:$0xff]
        %v262 = vld [vmem:[%s1 + $0x18c] sm:$0xf]
        %v263 = vld [vmem:[%s1 + $0x190] sm:$0xff]
        %v264 = vld [vmem:[%s1 + $0x198] sm:$0xff]
        %v265 = vld [vmem:[%s1 + $0x1a0] sm:$0xf]
        %v266 = vld [vmem:[%s1 + $0x1a4] sm:$0xff]
        %v267 = vld [vmem:[%s1 + $0x1ac] sm:$0xff]
        %v268 = vld [vmem:[%s1 + $0x1b4] sm:$0xf]
        %v269 = vld [vmem:[%s1 + $0x1b8] sm:$0xff]
        %v270 = vld [vmem:[%s1 + $0x1c0] sm:$0xff]
        %v271 = vld [vmem:[%s1 + $0x1c8] sm:$0xf]
        %v272 = vld [vmem:[%s1 + $0x1cc] sm:$0xff]
        %v273 = vld [vmem:[%s1 + $0x1d4] sm:$0xff]
        %v274 = vld [vmem:[%s1 + $0x1dc] sm:$0xf]
        %v275 = vld [vmem:[%s1 + $0x1e0] sm:$0xff]
        %v276 = vld [vmem:[%s1 + $0x1e8] sm:$0xff]
        %v277 = vld [vmem:[%s1 + $0x1f0] sm:$0xf]
        %v278 = vld [vmem:[%s1 + $0x1f4] sm:$0xff]
        %v279 = vld [vmem:[%s1 + $0x1fc] sm:$0xff]
        %v280 = vld [vmem:[%s1 + $0x204] sm:$0xf]
        %v281 = vld [vmem:[%s1 + $0x208] sm:$0xff]
        %v282 = vld [vmem:[%s1 + $0x210] sm:$0xff]
        %v283 = vld [vmem:[%s1 + $0x218] sm:$0xf]
        %v284 = vld [vmem:[%s1 + $0x21c] sm:$0xff]
        %v285 = vld [vmem:[%s1 + $0x224] sm:$0xff]
        %v286 = vld [vmem:[%s1 + $0x22c] sm:$0xf]
        %v287 = vld [vmem:[%s1 + $0x230] sm:$0xff]
        %v288 = vld [vmem:[%s1 + $0x238] sm:$0xff]
        %v289 = vld [vmem:[%s1 + $0x240] sm:$0xf]
        %v290 = vld [vmem:[%s1 + $0x244] sm:$0xff]
        %v291 = vld [vmem:[%s1 + $0x24c] sm:$0xff]
        %v292 = vld [vmem:[%s1 + $0x254] sm:$0xf]
        %v293 = vld [vmem:[%s1 + $0x258] sm:$0xff]
        %v294 = vld [vmem:[%s1 + $0x260] sm:$0xff]
        %v295 = vld [vmem:[%s1 + $0x268] sm:$0xf]
        %v296 = vld [vmem:[%s1 + $0x26c] sm:$0xff]
        %v297 = vld [vmem:[%s1 + $0x274] sm:$0xff]
        %v298 = vld [vmem:[%s1 + $0x27c] sm:$0xf]
        %v299 = vld [vmem:[%s1 + $0x280] sm:$0xff]
        %v300 = vld [vmem:[%s1 + $0x288] sm:$0xff]
        %v301 = vld [vmem:[%s1 + $0x290] sm:$0xf]
        %v302 = vld [vmem:[%s1 + $0x294] sm:$0xff]
        %v303 = vld [vmem:[%s1 + $0x29c] sm:$0xff]
        %v304 = vld [vmem:[%s1 + $0x2a4] sm:$0xf]
        %v305 = vld [vmem:[%s1 + $0x2a8] sm:$0xff]
        %v306 = vld [vmem:[%s1 + $0x2b0] sm:$0xff]
        %v307 = vld [vmem:[%s1 + $0x2b8] sm:$0xf]
        %v308 = vld [vmem:[%s1 + $0x2bc] sm:$0xff]
        %v309 = vld [vmem:[%s1 + $0x2c4] sm:$0xff]
        %v310 = vld [vmem:[%s1 + $0x2cc] sm:$0xf]
        %v311 = vld [vmem:[%s1 + $0x2d0] sm:$0xff]
        %v312 = vld [vmem:[%s1 + $0x2d8] sm:$0xff]
        %v313 = vld [vmem:[%s1 + $0x2e0] sm:$0xf]
        %v314 = vld [vmem:[%s1 + $0x2e4] sm:$0xff]
        %v315 = vld [vmem:[%s1 + $0x2ec] sm:$0xff]
        %v316 = vld [vmem:[%s1 + $0x2f4] sm:$0xf]
        %v317 = vld [vmem:[%s1 + $0x2f8] sm:$0xff]
        %v318 = vld [vmem:[%s1 + $0x300] sm:$0xff]
        %v319 = vld [vmem:[%s1 + $0x308] sm:$0xf]
        %v320 = vld [vmem:[%s1 + $0x30c] sm:$0xff]
        %v321 = vld [vmem:[%s1 + $0x314] sm:$0xff]
        %v322 = vld [vmem:[%s1 + $0x31c] sm:$0xf]
        %v323 = vld [vmem:[%s1 + $0x320] sm:$0xff]
        %v324 = vld [vmem:[%s1 + $0x328] sm:$0xff]
        %v325 = vld [vmem:[%s1 + $0x330] sm:$0xf]
        %v326 = vld [vmem:[%s1 + $0x334] sm:$0xff]
        %v327 = vld [vmem:[%s1 + $0x33c] sm:$0xff]
        %v328 = vld [vmem:[%s1 + $0x344] sm:$0xf]
        %v329 = vld [vmem:[%s1 + $0x348] sm:$0xff]
        %v330 = vld [vmem:[%s1 + $0x350] sm:$0xff]
        %v331 = vld [vmem:[%s1 + $0x358] sm:$0xf]
        %v332 = vld [vmem:[%s1 + $0x35c] sm:$0xff]
        %v333 = vld [vmem:[%s1 + $0x364] sm:$0xff]
        %v334 = vld [vmem:[%s1 + $0x36c] sm:$0xf]
        %v335 = vld [vmem:[%s1 + $0x370] sm:$0xff]
        %v336 = vld [vmem:[%s1 + $0x378] sm:$0xff]
        %v337 = vld [vmem:[%s1 + $0x380] sm:$0xf]
        %v338 = vld [vmem:[%s1 + $0x384] sm:$0xff]
        %v339 = vld [vmem:[%s1 + $0x38c] sm:$0xff]
        %v340 = vld [vmem:[%s1 + $0x394] sm:$0xf]
        %v341 = vld [vmem:[%s1 + $0x398] sm:$0xff]
        %v342 = vld [vmem:[%s1 + $0x3a0] sm:$0xff]
        %v343 = vld [vmem:[%s1 + $0x3a8] sm:$0xf]
        %v344 = vld [vmem:[%s1 + $0x3ac] sm:$0xff]
        %v345 = vld [vmem:[%s1 + $0x3b4] sm:$0xff]
        %v346 = vld [vmem:[%s1 + $0x3bc] sm:$0xf]
        %v347 = vld [vmem:[%s1 + $0x3c0] sm:$0xff]
        %v348 = vld [vmem:[%s1 + $0x3c8] sm:$0xf]
        %v349 = vld [vmem:[%s1 + $0x3d4] sm:$0xff]
        %v350 = vld [vmem:[%s1 + $0x3dc] sm:$0xf]
        %v351 = vld [vmem:[%s1 + $0x3e8] sm:$0xff]
        %v352 = vld [vmem:[%s1 + $0x3f0] sm:$0xf]
        %v353 = vld [vmem:[%s1 + $0x3fc] sm:$0xff]
        %v354 = vld [vmem:[%s1 + $0x404] sm:$0xf]
        %v355 = vld [vmem:[%s1 + $0x410] sm:$0xff]
        %v356 = vld [vmem:[%s1 + $0x418] sm:$0xf]
        %v357 = vld [vmem:[%s1 + $0x424] sm:$0xff]
        %v358 = vld [vmem:[%s1 + $0x42c] sm:$0xf]
        %v359 = vld [vmem:[%s1 + $0x438] sm:$0xff]
        %v360 = vld [vmem:[%s1 + $0x440] sm:$0xf]
        %v361 = vld [vmem:[%s1 + $0x44c] sm:$0xff]
        %v362 = vld [vmem:[%s1 + $0x454] sm:$0xf]
        %v363 = vld [vmem:[%s1 + $0x3cc] sm:$0xf]
        %v364 = vld [vmem:[%s1 + $0x3e0] sm:$0xf]
        %v365 = vld [vmem:[%s1 + $0x3f4] sm:$0xf]
        %v366 = vld [vmem:[%s1 + $0x408] sm:$0xf]
        %v367 = vld [vmem:[%s1 + $0x41c] sm:$0xf]
        %v368 = vld [vmem:[%s1 + $0x430] sm:$0xf]
        %v369 = vld [vmem:[%s1 + $0x444] sm:$0xf]
        %v370 = vld [vmem:[%s1 + $0x458] sm:$0xf]
        %v371 = vld [vmem:[%s1 + $0x3d0] sm:$0xf]
        %v372 = vld [vmem:[%s1 + $0x3e4] sm:$0xf]
        %v373 = vld [vmem:[%s1 + $0x3f8] sm:$0xf]
        %v374 = vld [vmem:[%s1 + $0x40c] sm:$0xf]
        %v375 = vld [vmem:[%s1 + $0x420] sm:$0xf]
        %v376 = vld [vmem:[%s1 + $0x434] sm:$0xf]
        %v377 = vld [vmem:[%s1 + $0x448] sm:$0xf]
        %v378 = vld [vmem:[%s1 + $0x45c] sm:$0xf]
        %v379 = vld [vmem:[%s2] sm:$0xf]
        %v380 = vld [vmem:[%s2 + $0x4] sm:$0xf]
        %v381 = vld [vmem:[%s2 + $0x8] sm:$0xf]
        %v382 = vld [vmem:[%s2 + $0xc] sm:$0xf]
        %v383 = vld [vmem:[%s2 + $0x10] sm:$0xf]
        %v384 = vld [vmem:[%s2 + $0x14] sm:$0xf]
        %v385 = vld [vmem:[%s2 + $0x18] sm:$0xf]
        %v386 = vld [vmem:[%s2 + $0x1c] sm:$0xf]
        %v387 = vld [vmem:[%s2 + $0x20] sm:$0xf]
        %v388 = vld [vmem:[%s2 + $0x24] sm:$0xf]
        %v389 = vld [vmem:[%s2 + $0x28] sm:$0xf]
        %v390 = vld [vmem:[%s2 + $0x2c] sm:$0xf]
        %v391 = vld [vmem:[%s2 + $0x30] sm:$0xf]
        %v392 = vld [vmem:[%s2 + $0x34] sm:$0xf]
        %v393 = vld [vmem:[%s2 + $0x38] sm:$0xf]
        %v394 = vld [vmem:[%s2 + $0x3c] sm:$0xf]
        %v395 = vld [vmem:[%s2 + $0x40] sm:$0xf]
        %v396 = vld [vmem:[%s2 + $0x44] sm:$0xf]
        %v397 = vld [vmem:[%s2 + $0x48] sm:$0xf]
        %v398 = vld [vmem:[%s2 + $0x4c] sm:$0xf]
        %v399 = vld [vmem:[%s2 + $0x50] sm:$0xf]
        %v400 = vld [vmem:[%s2 + $0x54] sm:$0xf]
        %v401 = vld [vmem:[%s2 + $0x58] sm:$0xf]
        %v402 = vld [vmem:[%s2 + $0x5c] sm:$0xf]
        %v403 = vld [vmem:[%s2 + $0x60] sm:$0xf]
        %v404 = vld [vmem:[%s2 + $0x64] sm:$0xf]
        %v405 = vld [vmem:[%s2 + $0x68] sm:$0xf]
        %v406 = vld [vmem:[%s2 + $0x6c] sm:$0xf]
        %v407 = vld [vmem:[%s2 + $0x70] sm:$0xf]
        %v408 = vld [vmem:[%s2 + $0x74] sm:$0xf]
        %v409 = vld [vmem:[%s2 + $0x78] sm:$0xf]
        %v410 = vld [vmem:[%s2 + $0x7c] sm:$0xf]
        %v411 = vld [vmem:[%s2 + $0x80] sm:$0xf]
        %v412 = vld [vmem:[%s2 + $0x84] sm:$0xf]
        %v413 = vld [vmem:[%s2 + $0x88] sm:$0xf]
        %v414 = vld [vmem:[%s2 + $0x8c] sm:$0xf]
        %v415 = vld [vmem:[%s2 + $0x90] sm:$0xf]
        %v416 = vld [vmem:[%s2 + $0x94] sm:$0xf]
        %v417 = vld [vmem:[%s2 + $0x98] sm:$0xf]
        %v418 = vld [vmem:[%s2 + $0x9c] sm:$0xf]
        %v419 = vld [vmem:[%s2 + $0xa0] sm:$0xf]
        %v420 = vld [vmem:[%s2 + $0xa4] sm:$0xf]
        %v421 = vld [vmem:[%s2 + $0xa8] sm:$0xf]
        %v422 = vld [vmem:[%s2 + $0xac] sm:$0xf]
        %v423 = vld [vmem:[%s2 + $0xb0] sm:$0xf]
        %v424 = vld [vmem:[%s2 + $0xb4] sm:$0xf]
        %v425 = vld [vmem:[%s2 + $0xb8] sm:$0xf]
        %v426 = vld [vmem:[%s2 + $0xbc] sm:$0xf]
        %v427 = vld [vmem:[%s2 + $0xc0] sm:$0xf]
        %v428 = vld [vmem:[%s2 + $0xc4] sm:$0xf]
        %v429 = vld [vmem:[%s2 + $0xc8] sm:$0xf]
        %v430 = vld [vmem:[%s2 + $0xcc] sm:$0xf]
        %v431 = vld [vmem:[%s2 + $0xd0] sm:$0xf]
        %v432 = vld [vmem:[%s2 + $0xd4] sm:$0xf]
        %v433 = vld [vmem:[%s2 + $0xd8] sm:$0xf]
        %v434 = vld [vmem:[%s2 + $0xdc] sm:$0xf]
        %v435 = vld [vmem:[%s2 + $0xe0] sm:$0xf]
        %v436 = vld [vmem:[%s2 + $0xe4] sm:$0xf]
        %v437 = vld [vmem:[%s2 + $0xe8] sm:$0xf]
        %v438 = vld [vmem:[%s2 + $0xec] sm:$0xf]
        %v439 = vld [vmem:[%s2 + $0xf0] sm:$0xf]
        %v440 = vld [vmem:[%s2 + $0xf4] sm:$0xf]
        %v441 = vld [vmem:[%s2 + $0xf8] sm:$0xf]
        %v442 = vld [vmem:[%s2 + $0xfc] sm:$0xf]
        %v443 = vld [vmem:[%s2 + $0x100] sm:$0xf]
        %v444 = vld [vmem:[%s2 + $0x104] sm:$0xf]
        %v445 = vld [vmem:[%s2 + $0x108] sm:$0xf]
        %v446 = vld [vmem:[%s2 + $0x10c] sm:$0xf]
        %v447 = vld [vmem:[%s2 + $0x110] sm:$0xf]
        %v448 = vld [vmem:[%s2 + $0x114] sm:$0xf]
        %v449 = vld [vmem:[%s2 + $0x118] sm:$0xf]
        %v450 = vld [vmem:[%s2 + $0x11c] sm:$0xf]
        %v451 = vld [vmem:[%s2 + $0x120] sm:$0xf]
        %v452 = vld [vmem:[%s2 + $0x124] sm:$0xf]
        %v453 = vld [vmem:[%s2 + $0x128] sm:$0xf]
        %v454 = vld [vmem:[%s2 + $0x12c] sm:$0xf]
        %v455 = vld [vmem:[%s2 + $0x130] sm:$0xf]
        %v456 = vld [vmem:[%s2 + $0x134] sm:$0xf]
        %v457 = vld [vmem:[%s2 + $0x138] sm:$0xf]
        %v458 = vld [vmem:[%s2 + $0x13c] sm:$0xf]
        %v459 = vld [vmem:[%s2 + $0x140] sm:$0xf]
        %v460 = vld [vmem:[%s2 + $0x144] sm:$0xf]
        %v461 = vld [vmem:[%s2 + $0x148] sm:$0xf]
        %v462 = vld [vmem:[%s2 + $0x14c] sm:$0xf]
        %v463 = vld [vmem:[%s2 + $0x150] sm:$0xf]
        %v464 = vld [vmem:[%s2 + $0x154] sm:$0xf]
        %v465 = vld [vmem:[%s2 + $0x158] sm:$0xf]
        %v466 = vld [vmem:[%s2 + $0x15c] sm:$0xf]
        %v467 = vld [vmem:[%s2 + $0x160] sm:$0xf]
        %v468 = vld [vmem:[%s2 + $0x164] sm:$0xf]
        %v469 = vld [vmem:[%s2 + $0x168] sm:$0xf]
        %v470 = vld [vmem:[%s2 + $0x16c] sm:$0xf]
        %v471 = vld [vmem:[%s2 + $0x170] sm:$0xf]
        %v472 = vld [vmem:[%s2 + $0x174] sm:$0xf]
        %v473 = vld [vmem:[%s2 + $0x178] sm:$0xf]
        %v474 = vld [vmem:[%s2 + $0x17c] sm:$0xf]
        %v475 = vld [vmem:[%s2 + $0x180] sm:$0xf]
        %v476 = vld [vmem:[%s2 + $0x184] sm:$0xf]
        %v477 = vld [vmem:[%s2 + $0x188] sm:$0xf]
        %v478 = vld [vmem:[%s2 + $0x18c] sm:$0xf]
        %v479 = vld [vmem:[%s2 + $0x190] sm:$0xf]
        %v480 = vld [vmem:[%s2 + $0x194] sm:$0xf]
        %v481 = vld [vmem:[%s2 + $0x198] sm:$0xf]
        %v482 = vld [vmem:[%s2 + $0x19c] sm:$0xf]
        %v483 = vld [vmem:[%s2 + $0x1a0] sm:$0xf]
        %v484 = vld [vmem:[%s2 + $0x1a4] sm:$0xf]
        %v485 = vld [vmem:[%s2 + $0x1a8] sm:$0xf]
        %v486 = vld [vmem:[%s2 + $0x1ac] sm:$0xf]
        %v487 = vld [vmem:[%s2 + $0x1b0] sm:$0xf]
        %v488 = vld [vmem:[%s2 + $0x1b4] sm:$0xf]
        %v489 = vld [vmem:[%s2 + $0x1b8] sm:$0xf]
        %v490 = vld [vmem:[%s2 + $0x1bc] sm:$0xf]
        %v491 = vld [vmem:[%s198] sm:$0xff]
        %v492 = vld [vmem:[%s198 + $0x8] sm:$0xf]
        %v493 = vld [vmem:[%s198 + $0xc] sm:$0xff]
        %v494 = vld [vmem:[%s198 + $0x14] sm:$0xf]
        %v495 = vld [vmem:[%s198 + $0x18] sm:$0xff]
        %v496 = vld [vmem:[%s198 + $0x20] sm:$0xf]
        %v497 = vld [vmem:[%s198 + $0x24] sm:$0xff]
        %v498 = vld [vmem:[%s198 + $0x2c] sm:$0xf]
        %v499 = vld [vmem:[%s198 + $0x30] sm:$0xff]
        %v500 = vld [vmem:[%s198 + $0x38] sm:$0xf]
        %v501 = vld [vmem:[%s198 + $0x3c] sm:$0xff]
        %v502 = vld [vmem:[%s198 + $0x44] sm:$0xf]
        %v503 = vld [vmem:[%s198 + $0x48] sm:$0xff]
        %v504 = vld [vmem:[%s198 + $0x50] sm:$0xf]
        %v505 = vld [vmem:[%s198 + $0x54] sm:$0xff]
        %v506 = vld [vmem:[%s198 + $0x5c] sm:$0xf]
        %v507 = vld [vmem:[%s198 + $0x60] sm:$0xff]
        %v508 = vld [vmem:[%s198 + $0x68] sm:$0xf]
        %v509 = vld [vmem:[%s198 + $0x6c] sm:$0xff]
        %v510 = vld [vmem:[%s198 + $0x74] sm:$0xf]
        %v511 = vld [vmem:[%s198 + $0x78] sm:$0xff]
        %v512 = vld [vmem:[%s198 + $0x80] sm:$0xf]
        %v513 = vld [vmem:[%s198 + $0x84] sm:$0xff]
        %v514 = vld [vmem:[%s198 + $0x8c] sm:$0xf]
        %v515 = vld [vmem:[%s198 + $0x90] sm:$0xff]
        %v516 = vld [vmem:[%s198 + $0x98] sm:$0xf]
        %v517 = vld [vmem:[%s198 + $0x9c] sm:$0xff]
        %v518 = vld [vmem:[%s198 + $0xa4] sm:$0xf]
        %v519 = vld [vmem:[%s198 + $0xa8] sm:$0xff]
        %v520 = vld [vmem:[%s198 + $0xb0] sm:$0xf]
        %v521 = vld [vmem:[%s198 + $0xb4] sm:$0xff]
        %v522 = vld [vmem:[%s198 + $0xbc] sm:$0xf]
        %v523 = vld [vmem:[%s198 + $0xc0] sm:$0xff]
        %v524 = vld [vmem:[%s198 + $0xc8] sm:$0xf]
        %v525 = vld [vmem:[%s198 + $0xcc] sm:$0xff]
        %v526 = vld [vmem:[%s198 + $0xd4] sm:$0xf]
        %v563 = vunpack.c.l.b16 %v491
        %v564 = vunpack.c.h.b16 %v491
        %v565 = vunpack.c.l.b16 %v492
        %v566 = vunpack.c.l.b16 %v493
        %v567 = vunpack.c.h.b16 %v493
        %v568 = vunpack.c.l.b16 %v494
        %v569 = vunpack.c.l.b16 %v495
        %v570 = vunpack.c.h.b16 %v495
        %v571 = vunpack.c.l.b16 %v496
        %v572 = vunpack.c.l.b16 %v497
        %v573 = vunpack.c.h.b16 %v497
        %v574 = vunpack.c.l.b16 %v498
        %v575 = vunpack.c.l.b16 %v499
        %v576 = vunpack.c.h.b16 %v499
        %v577 = vunpack.c.l.b16 %v500
        %v578 = vunpack.c.l.b16 %v501
        %v579 = vunpack.c.h.b16 %v501
        %v580 = vunpack.c.l.b16 %v502
        %v581 = vunpack.c.l.b16 %v503
        %v582 = vunpack.c.h.b16 %v503
        %v583 = vunpack.c.l.b16 %v504
        %v584 = vunpack.c.l.b16 %v505
        %v585 = vunpack.c.h.b16 %v505
        %v586 = vunpack.c.l.b16 %v506
        %v587 = vunpack.c.l.b16 %v507
        %v588 = vunpack.c.h.b16 %v507
        %v589 = vunpack.c.l.b16 %v508
        %v590 = vunpack.c.l.b16 %v509
        %v591 = vunpack.c.h.b16 %v509
        %v592 = vunpack.c.l.b16 %v510
        %v593 = vunpack.c.l.b16 %v511
        %v594 = vunpack.c.h.b16 %v511
        %v595 = vunpack.c.l.b16 %v512
        %v596 = vunpack.c.l.b16 %v513
        %v597 = vunpack.c.h.b16 %v513
        %v598 = vunpack.c.l.b16 %v514
        %v599 = vunpack.c.l.b16 %v515
        %v600 = vunpack.c.h.b16 %v515
        %v601 = vunpack.c.l.b16 %v516
        %v602 = vunpack.c.l.b16 %v517
        %v603 = vunpack.c.h.b16 %v517
        %v604 = vunpack.c.l.b16 %v518
        %v605 = vunpack.c.l.b16 %v519
        %v606 = vunpack.c.h.b16 %v519
        %v607 = vunpack.c.l.b16 %v520
        %v608 = vunpack.c.l.b16 %v521
        %v609 = vunpack.c.h.b16 %v521
        %v610 = vunpack.c.l.b16 %v522
        %v611 = vunpack.c.l.b16 %v523
        %v612 = vunpack.c.h.b16 %v523
        %v613 = vunpack.c.l.b16 %v524
        %v614 = vunpack.c.l.b16 %v525
        %v615 = vunpack.c.h.b16 %v525
        %v616 = vunpack.c.l.b16 %v526
        %v617 = vpack.c.b16 %v566, %v563
        %v618 = vpack.c.b16 %v567, %v564
        %v619 = vpack.c.b16 %v568, %v565
        %v620 = vpack.c.b16 %v572, %v569
        %v621 = vpack.c.b16 %v573, %v570
        %v622 = vpack.c.b16 %v574, %v571
        %v623 = vpack.c.b16 %v578, %v575
        %v624 = vpack.c.b16 %v579, %v576
        %v625 = vpack.c.b16 %v580, %v577
        %v626 = vpack.c.b16 %v584, %v581
        %v627 = vpack.c.b16 %v585, %v582
        %v628 = vpack.c.b16 %v586, %v583
        %v629 = vpack.c.b16 %v590, %v587
        %v630 = vpack.c.b16 %v591, %v588
        %v631 = vpack.c.b16 %v592, %v589
        %v632 = vpack.c.b16 %v596, %v593
        %v633 = vpack.c.b16 %v597, %v594
        %v634 = vpack.c.b16 %v598, %v595
        %v635 = vpack.c.b16 %v602, %v599
        %v636 = vpack.c.b16 %v603, %v600
        %v637 = vpack.c.b16 %v604, %v601
        %v638 = vpack.c.b16 %v608, %v605
        %v639 = vpack.c.b16 %v609, %v606
        %v640 = vpack.c.b16 %v610, %v607
        %v641 = vpack.c.b16 %v614, %v611
        %v642 = vpack.c.b16 %v615, %v612
        %v643 = vpack.c.b16 %v616, %v613
        %v815 = vunpack.c.l.b16 %v203
        %v816 = vunpack.c.h.b16 %v203
        %v817 = vunpack.c.l.b16 %v204
        %v818 = vunpack.c.h.b16 %v204
        %v819 = vunpack.c.l.b16 %v205
        %v820 = vunpack.c.l.b16 %v206
        %v821 = vunpack.c.h.b16 %v206
        %v822 = vunpack.c.l.b16 %v207
        %v823 = vunpack.c.h.b16 %v207
        %v824 = vunpack.c.l.b16 %v208
        %v825 = vunpack.c.l.b16 %v209
        %v826 = vunpack.c.h.b16 %v209
        %v827 = vunpack.c.l.b16 %v210
        %v828 = vunpack.c.h.b16 %v210
        %v829 = vunpack.c.l.b16 %v211
        %v830 = vunpack.c.l.b16 %v212
        %v831 = vunpack.c.h.b16 %v212
        %v832 = vunpack.c.l.b16 %v213
        %v833 = vunpack.c.h.b16 %v213
        %v834 = vunpack.c.l.b16 %v214
        %v835 = vunpack.c.l.b16 %v215
        %v836 = vunpack.c.h.b16 %v215
        %v837 = vunpack.c.l.b16 %v216
        %v838 = vunpack.c.h.b16 %v216
        %v839 = vunpack.c.l.b16 %v217
        %v840 = vunpack.c.l.b16 %v218
        %v841 = vunpack.c.h.b16 %v218
        %v842 = vunpack.c.l.b16 %v219
        %v843 = vunpack.c.h.b16 %v219
        %v844 = vunpack.c.l.b16 %v220
        %v845 = vunpack.c.l.b16 %v221
        %v846 = vunpack.c.h.b16 %v221
        %v847 = vunpack.c.l.b16 %v222
        %v848 = vunpack.c.h.b16 %v222
        %v849 = vunpack.c.l.b16 %v223
        %v850 = vunpack.c.l.b16 %v224
        %v851 = vunpack.c.h.b16 %v224
        %v852 = vunpack.c.l.b16 %v225
        %v853 = vunpack.c.h.b16 %v225
        %v854 = vunpack.c.l.b16 %v226
        %v855 = vunpack.c.l.b16 %v227
        %v856 = vunpack.c.h.b16 %v227
        %v857 = vunpack.c.l.b16 %v228
        %v858 = vunpack.c.h.b16 %v228
        %v859 = vunpack.c.l.b16 %v229
        %v860 = vunpack.c.l.b16 %v230
        %v861 = vunpack.c.h.b16 %v230
        %v862 = vunpack.c.l.b16 %v231
        %v863 = vunpack.c.h.b16 %v231
        %v864 = vunpack.c.l.b16 %v232
        %v865 = vunpack.c.l.b16 %v233
        %v866 = vunpack.c.h.b16 %v233
        %v867 = vunpack.c.l.b16 %v234
        %v868 = vunpack.c.h.b16 %v234
        %v869 = vunpack.c.l.b16 %v235
        %v870 = vunpack.c.l.b16 %v236
        %v871 = vunpack.c.h.b16 %v236
        %v872 = vunpack.c.l.b16 %v237
        %v873 = vunpack.c.h.b16 %v237
        %v874 = vunpack.c.l.b16 %v238
        %v875 = vunpack.c.l.b16 %v239
        %v876 = vunpack.c.h.b16 %v239
        %v877 = vunpack.c.l.b16 %v240
        %v878 = vunpack.c.h.b16 %v240
        %v879 = vunpack.c.l.b16 %v241
        %v880 = vunpack.c.l.b16 %v242
        %v881 = vunpack.c.h.b16 %v242
        %v882 = vunpack.c.l.b16 %v243
        %v883 = vunpack.c.h.b16 %v243
        %v884 = vunpack.c.l.b16 %v244
        %v885 = vunpack.c.l.b16 %v245
        %v886 = vunpack.c.h.b16 %v245
        %v887 = vunpack.c.l.b16 %v246
        %v888 = vunpack.c.h.b16 %v246
        %v889 = vunpack.c.l.b16 %v247
        %v890 = vunpack.c.l.b16 %v248
        %v891 = vunpack.c.h.b16 %v248
        %v892 = vunpack.c.l.b16 %v249
        %v893 = vunpack.c.h.b16 %v249
        %v894 = vunpack.c.l.b16 %v250
        %v895 = vunpack.c.l.b16 %v251
        %v896 = vunpack.c.h.b16 %v251
        %v897 = vunpack.c.l.b16 %v252
        %v898 = vunpack.c.h.b16 %v252
        %v899 = vunpack.c.l.b16 %v253
        %v900 = vunpack.c.l.b16 %v254
        %v901 = vunpack.c.h.b16 %v254
        %v902 = vunpack.c.l.b16 %v255
        %v903 = vunpack.c.h.b16 %v255
        %v904 = vunpack.c.l.b16 %v256
        %v905 = vunpack.c.l.b16 %v257
        %v906 = vunpack.c.h.b16 %v257
        %v907 = vunpack.c.l.b16 %v258
        %v908 = vunpack.c.h.b16 %v258
        %v909 = vunpack.c.l.b16 %v259
        %v910 = vunpack.c.l.b16 %v260
        %v911 = vunpack.c.h.b16 %v260
        %v912 = vunpack.c.l.b16 %v261
        %v913 = vunpack.c.h.b16 %v261
        %v914 = vunpack.c.l.b16 %v262
        %v915 = vunpack.c.l.b16 %v263
        %v916 = vunpack.c.h.b16 %v263
        %v917 = vunpack.c.l.b16 %v264
        %v918 = vunpack.c.h.b16 %v264
        %v919 = vunpack.c.l.b16 %v265
        %v920 = vunpack.c.l.b16 %v266
        %v921 = vunpack.c.h.b16 %v266
        %v922 = vunpack.c.l.b16 %v267
        %v923 = vunpack.c.h.b16 %v267
        %v924 = vunpack.c.l.b16 %v268
        %v925 = vunpack.c.l.b16 %v269
        %v926 = vunpack.c.h.b16 %v269
        %v927 = vunpack.c.l.b16 %v270
        %v928 = vunpack.c.h.b16 %v270
        %v929 = vunpack.c.l.b16 %v271
        %v930 = vunpack.c.l.b16 %v272
        %v931 = vunpack.c.h.b16 %v272
        %v932 = vunpack.c.l.b16 %v273
        %v933 = vunpack.c.h.b16 %v273
        %v934 = vunpack.c.l.b16 %v274
        %v935 = vunpack.c.l.b16 %v275
        %v936 = vunpack.c.h.b16 %v275
        %v937 = vunpack.c.l.b16 %v276
        %v938 = vunpack.c.h.b16 %v276
        %v939 = vunpack.c.l.b16 %v277
        %v940 = vunpack.c.l.b16 %v278
        %v941 = vunpack.c.h.b16 %v278
        %v942 = vunpack.c.l.b16 %v279
        %v943 = vunpack.c.h.b16 %v279
        %v944 = vunpack.c.l.b16 %v280
        %v945 = vunpack.c.l.b16 %v281
        %v946 = vunpack.c.h.b16 %v281
        %v947 = vunpack.c.l.b16 %v282
        %v948 = vunpack.c.h.b16 %v282
        %v949 = vunpack.c.l.b16 %v283
        %v950 = vunpack.c.l.b16 %v284
        %v951 = vunpack.c.h.b16 %v284
        %v952 = vunpack.c.l.b16 %v285
        %v953 = vunpack.c.h.b16 %v285
        %v954 = vunpack.c.l.b16 %v286
        %v955 = vunpack.c.l.b16 %v287
        %v956 = vunpack.c.h.b16 %v287
        %v957 = vunpack.c.l.b16 %v288
        %v958 = vunpack.c.h.b16 %v288
        %v959 = vunpack.c.l.b16 %v289
        %v960 = vunpack.c.l.b16 %v290
        %v961 = vunpack.c.h.b16 %v290
        %v962 = vunpack.c.l.b16 %v291
        %v963 = vunpack.c.h.b16 %v291
        %v964 = vunpack.c.l.b16 %v292
        %v965 = vunpack.c.l.b16 %v293
        %v966 = vunpack.c.h.b16 %v293
        %v967 = vunpack.c.l.b16 %v294
        %v968 = vunpack.c.h.b16 %v294
        %v969 = vunpack.c.l.b16 %v295
        %v970 = vunpack.c.l.b16 %v296
        %v971 = vunpack.c.h.b16 %v296
        %v972 = vunpack.c.l.b16 %v297
        %v973 = vunpack.c.h.b16 %v297
        %v974 = vunpack.c.l.b16 %v298
        %v975 = vunpack.c.l.b16 %v299
        %v976 = vunpack.c.h.b16 %v299
        %v977 = vunpack.c.l.b16 %v300
        %v978 = vunpack.c.h.b16 %v300
        %v979 = vunpack.c.l.b16 %v301
        %v980 = vunpack.c.l.b16 %v302
        %v981 = vunpack.c.h.b16 %v302
        %v982 = vunpack.c.l.b16 %v303
        %v983 = vunpack.c.h.b16 %v303
        %v984 = vunpack.c.l.b16 %v304
        %v985 = vunpack.c.l.b16 %v305
        %v986 = vunpack.c.h.b16 %v305
        %v987 = vunpack.c.l.b16 %v306
        %v988 = vunpack.c.h.b16 %v306
        %v989 = vunpack.c.l.b16 %v307
        %v990 = vunpack.c.l.b16 %v308
        %v991 = vunpack.c.h.b16 %v308
        %v992 = vunpack.c.l.b16 %v309
        %v993 = vunpack.c.h.b16 %v309
        %v994 = vunpack.c.l.b16 %v310
        %v995 = vunpack.c.l.b16 %v311
        %v996 = vunpack.c.h.b16 %v311
        %v997 = vunpack.c.l.b16 %v312
        %v998 = vunpack.c.h.b16 %v312
        %v999 = vunpack.c.l.b16 %v313
        %v1000 = vunpack.c.l.b16 %v314
        %v1001 = vunpack.c.h.b16 %v314
        %v1002 = vunpack.c.l.b16 %v315
        %v1003 = vunpack.c.h.b16 %v315
        %v1004 = vunpack.c.l.b16 %v316
        %v1005 = vunpack.c.l.b16 %v317
        %v1006 = vunpack.c.h.b16 %v317
        %v1007 = vunpack.c.l.b16 %v318
        %v1008 = vunpack.c.h.b16 %v318
        %v1009 = vunpack.c.l.b16 %v319
        %v1010 = vunpack.c.l.b16 %v320
        %v1011 = vunpack.c.h.b16 %v320
        %v1012 = vunpack.c.l.b16 %v321
        %v1013 = vunpack.c.h.b16 %v321
        %v1014 = vunpack.c.l.b16 %v322
        %v1015 = vunpack.c.l.b16 %v323
        %v1016 = vunpack.c.h.b16 %v323
        %v1017 = vunpack.c.l.b16 %v324
        %v1018 = vunpack.c.h.b16 %v324
        %v1019 = vunpack.c.l.b16 %v325
        %v1020 = vunpack.c.l.b16 %v326
        %v1021 = vunpack.c.h.b16 %v326
        %v1022 = vunpack.c.l.b16 %v327
        %v1023 = vunpack.c.h.b16 %v327
        %v1024 = vunpack.c.l.b16 %v328
        %v1025 = vunpack.c.l.b16 %v329
        %v1026 = vunpack.c.h.b16 %v329
        %v1027 = vunpack.c.l.b16 %v330
        %v1028 = vunpack.c.h.b16 %v330
        %v1029 = vunpack.c.l.b16 %v331
        %v1030 = vunpack.c.l.b16 %v332
        %v1031 = vunpack.c.h.b16 %v332
        %v1032 = vunpack.c.l.b16 %v333
        %v1033 = vunpack.c.h.b16 %v333
        %v1034 = vunpack.c.l.b16 %v334
        %v1035 = vunpack.c.l.b16 %v335
        %v1036 = vunpack.c.h.b16 %v335
        %v1037 = vunpack.c.l.b16 %v336
        %v1038 = vunpack.c.h.b16 %v336
        %v1039 = vunpack.c.l.b16 %v337
        %v1040 = vunpack.c.l.b16 %v338
        %v1041 = vunpack.c.h.b16 %v338
        %v1042 = vunpack.c.l.b16 %v339
        %v1043 = vunpack.c.h.b16 %v339
        %v1044 = vunpack.c.l.b16 %v340
        %v1045 = vunpack.c.l.b16 %v341
        %v1046 = vunpack.c.h.b16 %v341
        %v1047 = vunpack.c.l.b16 %v342
        %v1048 = vunpack.c.h.b16 %v342
        %v1049 = vunpack.c.l.b16 %v343
        %v1050 = vunpack.c.l.b16 %v344
        %v1051 = vunpack.c.h.b16 %v344
        %v1052 = vunpack.c.l.b16 %v345
        %v1053 = vunpack.c.h.b16 %v345
        %v1054 = vunpack.c.l.b16 %v346
        %v1055 = vpack.c.b16 %v820, %v815
        %v1056 = vpack.c.b16 %v821, %v816
        %v1057 = vpack.c.b16 %v822, %v817
        %v1058 = vpack.c.b16 %v823, %v818
        %v1059 = vpack.c.b16 %v824, %v819
        %v1060 = vpack.c.b16 %v830, %v825
        %v1061 = vpack.c.b16 %v831, %v826
        %v1062 = vpack.c.b16 %v832, %v827
        %v1063 = vpack.c.b16 %v833, %v828
        %v1064 = vpack.c.b16 %v834, %v829
        %v1065 = vpack.c.b16 %v840, %v835
        %v1066 = vpack.c.b16 %v841, %v836
        %v1067 = vpack.c.b16 %v842, %v837
        %v1068 = vpack.c.b16 %v843, %v838
        %v1069 = vpack.c.b16 %v844, %v839
        %v1070 = vpack.c.b16 %v850, %v845
        %v1071 = vpack.c.b16 %v851, %v846
        %v1072 = vpack.c.b16 %v852, %v847
        %v1073 = vpack.c.b16 %v853, %v848
        %v1074 = vpack.c.b16 %v854, %v849
        %v1075 = vpack.c.b16 %v860, %v855
        %v1076 = vpack.c.b16 %v861, %v856
        %v1077 = vpack.c.b16 %v862, %v857
        %v1078 = vpack.c.b16 %v863, %v858
        %v1079 = vpack.c.b16 %v864, %v859
        %v1080 = vpack.c.b16 %v870, %v865
        %v1081 = vpack.c.b16 %v871, %v866
        %v1082 = vpack.c.b16 %v872, %v867
        %v1083 = vpack.c.b16 %v873, %v868
        %v1084 = vpack.c.b16 %v874, %v869
        %v1085 = vpack.c.b16 %v880, %v875
        %v1086 = vpack.c.b16 %v881, %v876
        %v1087 = vpack.c.b16 %v882, %v877
        %v1088 = vpack.c.b16 %v883, %v878
        %v1089 = vpack.c.b16 %v884, %v879
        %v1090 = vpack.c.b16 %v890, %v885
        %v1091 = vpack.c.b16 %v891, %v886
        %v1092 = vpack.c.b16 %v892, %v887
        %v1093 = vpack.c.b16 %v893, %v888
        %v1094 = vpack.c.b16 %v894, %v889
        %v1095 = vpack.c.b16 %v900, %v895
        %v1096 = vpack.c.b16 %v901, %v896
        %v1097 = vpack.c.b16 %v902, %v897
        %v1098 = vpack.c.b16 %v903, %v898
        %v1099 = vpack.c.b16 %v904, %v899
        %v1100 = vpack.c.b16 %v910, %v905
        %v1101 = vpack.c.b16 %v911, %v906
        %v1102 = vpack.c.b16 %v912, %v907
        %v1103 = vpack.c.b16 %v913, %v908
        %v1104 = vpack.c.b16 %v914, %v909
        %v1105 = vpack.c.b16 %v920, %v915
        %v1106 = vpack.c.b16 %v921, %v916
        %v1107 = vpack.c.b16 %v922, %v917
        %v1108 = vpack.c.b16 %v923, %v918
        %v1109 = vpack.c.b16 %v924, %v919
        %v1110 = vpack.c.b16 %v930, %v925
        %v1111 = vpack.c.b16 %v931, %v926
        %v1112 = vpack.c.b16 %v932, %v927
        %v1113 = vpack.c.b16 %v933, %v928
        %v1114 = vpack.c.b16 %v934, %v929
        %v1115 = vpack.c.b16 %v940, %v935
        %v1116 = vpack.c.b16 %v941, %v936
        %v1117 = vpack.c.b16 %v942, %v937
        %v1118 = vpack.c.b16 %v943, %v938
        %v1119 = vpack.c.b16 %v944, %v939
        %v1120 = vpack.c.b16 %v950, %v945
        %v1121 = vpack.c.b16 %v951, %v946
        %v1122 = vpack.c.b16 %v952, %v947
        %v1123 = vpack.c.b16 %v953, %v948
        %v1124 = vpack.c.b16 %v954, %v949
        %v1125 = vpack.c.b16 %v960, %v955
        %v1126 = vpack.c.b16 %v961, %v956
        %v1127 = vpack.c.b16 %v962, %v957
        %v1128 = vpack.c.b16 %v963, %v958
        %v1129 = vpack.c.b16 %v964, %v959
        %v1130 = vpack.c.b16 %v970, %v965
        %v1131 = vpack.c.b16 %v971, %v966
        %v1132 = vpack.c.b16 %v972, %v967
        %v1133 = vpack.c.b16 %v973, %v968
        %v1134 = vpack.c.b16 %v974, %v969
        %v1135 = vpack.c.b16 %v980, %v975
        %v1136 = vpack.c.b16 %v981, %v976
        %v1137 = vpack.c.b16 %v982, %v977
        %v1138 = vpack.c.b16 %v983, %v978
        %v1139 = vpack.c.b16 %v984, %v979
        %v1140 = vpack.c.b16 %v990, %v985
        %v1141 = vpack.c.b16 %v991, %v986
        %v1142 = vpack.c.b16 %v992, %v987
        %v1143 = vpack.c.b16 %v993, %v988
        %v1144 = vpack.c.b16 %v994, %v989
        %v1145 = vpack.c.b16 %v1000, %v995
        %v1146 = vpack.c.b16 %v1001, %v996
        %v1147 = vpack.c.b16 %v1002, %v997
        %v1148 = vpack.c.b16 %v1003, %v998
        %v1149 = vpack.c.b16 %v1004, %v999
        %v1150 = vpack.c.b16 %v1010, %v1005
        %v1151 = vpack.c.b16 %v1011, %v1006
        %v1152 = vpack.c.b16 %v1012, %v1007
        %v1153 = vpack.c.b16 %v1013, %v1008
        %v1154 = vpack.c.b16 %v1014, %v1009
        %v1155 = vpack.c.b16 %v1020, %v1015
        %v1156 = vpack.c.b16 %v1021, %v1016
        %v1157 = vpack.c.b16 %v1022, %v1017
        %v1158 = vpack.c.b16 %v1023, %v1018
        %v1159 = vpack.c.b16 %v1024, %v1019
        %v1160 = vpack.c.b16 %v1030, %v1025
        %v1161 = vpack.c.b16 %v1031, %v1026
        %v1162 = vpack.c.b16 %v1032, %v1027
        %v1163 = vpack.c.b16 %v1033, %v1028
        %v1164 = vpack.c.b16 %v1034, %v1029
        %v1165 = vpack.c.b16 %v1040, %v1035
        %v1166 = vpack.c.b16 %v1041, %v1036
        %v1167 = vpack.c.b16 %v1042, %v1037
        %v1168 = vpack.c.b16 %v1043, %v1038
        %v1169 = vpack.c.b16 %v1044, %v1039
        %v1170 = vpack.c.b16 %v1050, %v1045
        %v1171 = vpack.c.b16 %v1051, %v1046
        %v1172 = vpack.c.b16 %v1052, %v1047
        %v1173 = vpack.c.b16 %v1053, %v1048
        %v1174 = vpack.c.b16 %v1054, %v1049
        %1295 = vmatpush.bf16.msra.mxu0 %v1090
        %1296 = vmatpush.bf16.msra.mxu0 %v1085
        %1297 = vmatpush.bf16.msra.mxu0 %v1080
        %1298 = vmatpush.bf16.msra.mxu0 %v1075
        %1299 = vmatpush.bf16.msra.mxu0 %v1070
        %1300 = vmatpush.bf16.msra.mxu0 %v1065
        %1301 = vmatpush.bf16.msra.mxu0 %v1060
        %1302 = vmatpush.bf16.msra.mxu0 %v1055
        %1303 = vmatmul.bf16.gmra.mxu0 %v617
        %v1304 = vpop.f32.mrf.mxu0
        %v1305 = vadd.f32 0.0, %v1304
        %v1306 = vpop.f32.mrf.mxu0
        %v1307 = vadd.f32 0.0, %v1306
        %1308 = vmatmul.bf16.gmra.mxu0 %v620
        %v1309 = vpop.f32.mrf.mxu0
        %v1310 = vadd.f32 0.0, %v1309
        %v1311 = vpop.f32.mrf.mxu0
        %v1312 = vadd.f32 0.0, %v1311
        %1313 = vmatmul.bf16.gmra.mxu0 %v623
        %v1314 = vpop.f32.mrf.mxu0
        %v1315 = vadd.f32 0.0, %v1314
        %v1316 = vpop.f32.mrf.mxu0
        %v1317 = vadd.f32 0.0, %v1316
        %1318 = vmatmul.bf16.gmra.mxu0 %v626
        %v1319 = vpop.f32.mrf.mxu0
        %v1320 = vadd.f32 0.0, %v1319
        %v1321 = vpop.f32.mrf.mxu0
        %v1322 = vadd.f32 0.0, %v1321
        %1323 = vmatmul.bf16.gmra.mxu0 %v629
        %v1324 = vpop.f32.mrf.mxu0
        %v1325 = vadd.f32 0.0, %v1324
        %v1326 = vpop.f32.mrf.mxu0
        %v1327 = vadd.f32 0.0, %v1326
        %1328 = vmatmul.bf16.gmra.mxu0 %v632
        %v1329 = vpop.f32.mrf.mxu0
        %v1330 = vadd.f32 0.0, %v1329
        %v1331 = vpop.f32.mrf.mxu0
        %v1332 = vadd.f32 0.0, %v1331
        %1333 = vmatmul.bf16.gmra.mxu0 %v635
        %v1334 = vpop.f32.mrf.mxu0
        %v1335 = vadd.f32 0.0, %v1334
        %v1336 = vpop.f32.mrf.mxu0
        %v1337 = vadd.f32 0.0, %v1336
        %1338 = vmatmul.bf16.gmra.mxu0 %v638
        %v1339 = vpop.f32.mrf.mxu0
        %v1340 = vadd.f32 0.0, %v1339
        %v1341 = vpop.f32.mrf.mxu0
        %v1342 = vadd.f32 0.0, %v1341
        %1343 = vmatmul.bf16.gmra.mxu0 %v641
        %v1344 = vpop.f32.mrf.mxu0
        %v1345 = vadd.f32 0.0, %v1344
        %v1346 = vpop.f32.mrf.mxu0
        %v1347 = vadd.f32 0.0, %v1346
        %1348 = vdwg.mxu0
        %1349 = vmatpush.bf16.msra.mxu0 %v1130
        %1350 = vmatpush.bf16.msra.mxu0 %v1125
        %1351 = vmatpush.bf16.msra.mxu0 %v1120
        %1352 = vmatpush.bf16.msra.mxu0 %v1115
        %1353 = vmatpush.bf16.msra.mxu0 %v1110
        %1354 = vmatpush.bf16.msra.mxu0 %v1105
        %1355 = vmatpush.bf16.msra.mxu0 %v1100
        %1356 = vmatpush.bf16.msra.mxu0 %v1095
        %1357 = vmatmul.bf16.gmra.mxu0 %v618
        %v1358 = vpop.f32.mrf.mxu0
        %v1359 = vadd.f32 %v1305, %v1358
        %v1360 = vpop.f32.mrf.mxu0
        %v1361 = vadd.f32 %v1307, %v1360
        %1362 = vmatmul.bf16.gmra.mxu0 %v621
        %v1363 = vpop.f32.mrf.mxu0
        %v1364 = vadd.f32 %v1310, %v1363
        %v1365 = vpop.f32.mrf.mxu0
        %v1366 = vadd.f32 %v1312, %v1365
        %1367 = vmatmul.bf16.gmra.mxu0 %v624
        %v1368 = vpop.f32.mrf.mxu0
        %v1369 = vadd.f32 %v1315, %v1368
        %v1370 = vpop.f32.mrf.mxu0
        %v1371 = vadd.f32 %v1317, %v1370
        %1372 = vmatmul.bf16.gmra.mxu0 %v627
        %v1373 = vpop.f32.mrf.mxu0
        %v1374 = vadd.f32 %v1320, %v1373
        %v1375 = vpop.f32.mrf.mxu0
        %v1376 = vadd.f32 %v1322, %v1375
        %1377 = vmatmul.bf16.gmra.mxu0 %v630
        %v1378 = vpop.f32.mrf.mxu0
        %v1379 = vadd.f32 %v1325, %v1378
        %v1380 = vpop.f32.mrf.mxu0
        %v1381 = vadd.f32 %v1327, %v1380
        %1382 = vmatmul.bf16.gmra.mxu0 %v633
        %v1383 = vpop.f32.mrf.mxu0
        %v1384 = vadd.f32 %v1330, %v1383
        %v1385 = vpop.f32.mrf.mxu0
        %v1386 = vadd.f32 %v1332, %v1385
        %1387 = vmatmul.bf16.gmra.mxu0 %v636
        %v1388 = vpop.f32.mrf.mxu0
        %v1389 = vadd.f32 %v1335, %v1388
        %v1390 = vpop.f32.mrf.mxu0
        %v1391 = vadd.f32 %v1337, %v1390
        %1392 = vmatmul.bf16.gmra.mxu0 %v639
        %v1393 = vpop.f32.mrf.mxu0
        %v1394 = vadd.f32 %v1340, %v1393
        %v1395 = vpop.f32.mrf.mxu0
        %v1396 = vadd.f32 %v1342, %v1395
        %1397 = vmatmul.bf16.gmra.mxu0 %v642
        %v1398 = vpop.f32.mrf.mxu0
        %v1399 = vadd.f32 %v1345, %v1398
        %v1400 = vpop.f32.mrf.mxu0
        %v1401 = vadd.f32 %v1347, %v1400
        %1402 = vdwg.mxu0
        %1403 = vmatpush.bf16.msra.mxu0 %v1170
        %1404 = vmatpush.bf16.msra.mxu0 %v1165
        %1405 = vmatpush.bf16.msra.mxu0 %v1160
        %1406 = vmatpush.bf16.msra.mxu0 %v1155
        %1407 = vmatpush.bf16.msra.mxu0 %v1150
        %1408 = vmatpush.bf16.msra.mxu0 %v1145
        %1409 = vmatpush.bf16.msra.mxu0 %v1140
        %1410 = vmatpush.bf16.msra.mxu0 %v1135
        %1411 = vmatmul.bf16.gmra.mxu0 %v619
        %v1412 = vpop.f32.mrf.mxu0
        %v1413 = vadd.f32 %v1359, %v1412
        %v1414 = vpop.f32.mrf.mxu0
        %v1415 = vadd.f32 %v1361, %v1414
        %1416 = vmatmul.bf16.gmra.mxu0 %v622
        %v1417 = vpop.f32.mrf.mxu0
        %v1418 = vadd.f32 %v1364, %v1417
        %v1419 = vpop.f32.mrf.mxu0
        %v1420 = vadd.f32 %v1366, %v1419
        %1421 = vmatmul.bf16.gmra.mxu0 %v625
        %v1422 = vpop.f32.mrf.mxu0
        %v1423 = vadd.f32 %v1369, %v1422
        %v1424 = vpop.f32.mrf.mxu0
        %v1425 = vadd.f32 %v1371, %v1424
        %1426 = vmatmul.bf16.gmra.mxu0 %v628
        %v1427 = vpop.f32.mrf.mxu0
        %v1428 = vadd.f32 %v1374, %v1427
        %v1429 = vpop.f32.mrf.mxu0
        %v1430 = vadd.f32 %v1376, %v1429
        %1431 = vmatmul.bf16.gmra.mxu0 %v631
        %v1432 = vpop.f32.mrf.mxu0
        %v1433 = vadd.f32 %v1379, %v1432
        %v1434 = vpop.f32.mrf.mxu0
        %v1435 = vadd.f32 %v1381, %v1434
        %1436 = vmatmul.bf16.gmra.mxu0 %v634
        %v1437 = vpop.f32.mrf.mxu0
        %v1438 = vadd.f32 %v1384, %v1437
        %v1439 = vpop.f32.mrf.mxu0
        %v1440 = vadd.f32 %v1386, %v1439
        %1441 = vmatmul.bf16.gmra.mxu0 %v637
        %v1442 = vpop.f32.mrf.mxu0
        %v1443 = vadd.f32 %v1389, %v1442
        %v1444 = vpop.f32.mrf.mxu0
        %v1445 = vadd.f32 %v1391, %v1444
        %1446 = vmatmul.bf16.gmra.mxu0 %v640
        %v1447 = vpop.f32.mrf.mxu0
        %v1448 = vadd.f32 %v1394, %v1447
        %v1449 = vpop.f32.mrf.mxu0
        %v1450 = vadd.f32 %v1396, %v1449
        %1451 = vmatmul.bf16.gmra.mxu0 %v643
        %v1452 = vpop.f32.mrf.mxu0
        %v1453 = vadd.f32 %v1399, %v1452
        %v1454 = vpop.f32.mrf.mxu0
        %v1455 = vadd.f32 %v1401, %v1454
        %1456 = vdwg.mxu0
        %1457 = vmatpush.bf16.msra.mxu0 %v1091
        %1458 = vmatpush.bf16.msra.mxu0 %v1086
        %1459 = vmatpush.bf16.msra.mxu0 %v1081
        %1460 = vmatpush.bf16.msra.mxu0 %v1076
        %1461 = vmatpush.bf16.msra.mxu0 %v1071
        %1462 = vmatpush.bf16.msra.mxu0 %v1066
        %1463 = vmatpush.bf16.msra.mxu0 %v1061
        %1464 = vmatpush.bf16.msra.mxu0 %v1056
        %1465 = vmatmul.bf16.gmra.mxu0 %v617
        %v1466 = vpop.f32.mrf.mxu0
        %v1467 = vadd.f32 0.0, %v1466
        %v1468 = vpop.f32.mrf.mxu0
        %v1469 = vadd.f32 0.0, %v1468
        %1470 = vmatmul.bf16.gmra.mxu0 %v620
        %v1471 = vpop.f32.mrf.mxu0
        %v1472 = vadd.f32 0.0, %v1471
        %v1473 = vpop.f32.mrf.mxu0
        %v1474 = vadd.f32 0.0, %v1473
        %1475 = vmatmul.bf16.gmra.mxu0 %v623
        %v1476 = vpop.f32.mrf.mxu0
        %v1477 = vadd.f32 0.0, %v1476
        %v1478 = vpop.f32.mrf.mxu0
        %v1479 = vadd.f32 0.0, %v1478
        %1480 = vmatmul.bf16.gmra.mxu0 %v626
        %v1481 = vpop.f32.mrf.mxu0
        %v1482 = vadd.f32 0.0, %v1481
        %v1483 = vpop.f32.mrf.mxu0
        %v1484 = vadd.f32 0.0, %v1483
        %1485 = vmatmul.bf16.gmra.mxu0 %v629
        %v1486 = vpop.f32.mrf.mxu0
        %v1487 = vadd.f32 0.0, %v1486
        %v1488 = vpop.f32.mrf.mxu0
        %v1489 = vadd.f32 0.0, %v1488
        %1490 = vmatmul.bf16.gmra.mxu0 %v632
        %v1491 = vpop.f32.mrf.mxu0
        %v1492 = vadd.f32 0.0, %v1491
        %v1493 = vpop.f32.mrf.mxu0
        %v1494 = vadd.f32 0.0, %v1493
        %1495 = vmatmul.bf16.gmra.mxu0 %v635
        %v1496 = vpop.f32.mrf.mxu0
        %v1497 = vadd.f32 0.0, %v1496
        %v1498 = vpop.f32.mrf.mxu0
        %v1499 = vadd.f32 0.0, %v1498
        %1500 = vmatmul.bf16.gmra.mxu0 %v638
        %v1501 = vpop.f32.mrf.mxu0
        %v1502 = vadd.f32 0.0, %v1501
        %v1503 = vpop.f32.mrf.mxu0
        %v1504 = vadd.f32 0.0, %v1503
        %1505 = vmatmul.bf16.gmra.mxu0 %v641
        %v1506 = vpop.f32.mrf.mxu0
        %v1507 = vadd.f32 0.0, %v1506
        %v1508 = vpop.f32.mrf.mxu0
        %v1509 = vadd.f32 0.0, %v1508
        %1510 = vdwg.mxu0
        %1511 = vmatpush.bf16.msra.mxu0 %v1131
        %1512 = vmatpush.bf16.msra.mxu0 %v1126
        %1513 = vmatpush.bf16.msra.mxu0 %v1121
        %1514 = vmatpush.bf16.msra.mxu0 %v1116
        %1515 = vmatpush.bf16.msra.mxu0 %v1111
        %1516 = vmatpush.bf16.msra.mxu0 %v1106
        %1517 = vmatpush.bf16.msra.mxu0 %v1101
        %1518 = vmatpush.bf16.msra.mxu0 %v1096
        %1519 = vmatmul.bf16.gmra.mxu0 %v618
        %v1520 = vpop.f32.mrf.mxu0
        %v1521 = vadd.f32 %v1467, %v1520
        %v1522 = vpop.f32.mrf.mxu0
        %v1523 = vadd.f32 %v1469, %v1522
        %1524 = vmatmul.bf16.gmra.mxu0 %v621
        %v1525 = vpop.f32.mrf.mxu0
        %v1526 = vadd.f32 %v1472, %v1525
        %v1527 = vpop.f32.mrf.mxu0
        %v1528 = vadd.f32 %v1474, %v1527
        %1529 = vmatmul.bf16.gmra.mxu0 %v624
        %v1530 = vpop.f32.mrf.mxu0
        %v1531 = vadd.f32 %v1477, %v1530
        %v1532 = vpop.f32.mrf.mxu0
        %v1533 = vadd.f32 %v1479, %v1532
        %1534 = vmatmul.bf16.gmra.mxu0 %v627
        %v1535 = vpop.f32.mrf.mxu0
        %v1536 = vadd.f32 %v1482, %v1535
        %v1537 = vpop.f32.mrf.mxu0
        %v1538 = vadd.f32 %v1484, %v1537
        %1539 = vmatmul.bf16.gmra.mxu0 %v630
        %v1540 = vpop.f32.mrf.mxu0
        %v1541 = vadd.f32 %v1487, %v1540
        %v1542 = vpop.f32.mrf.mxu0
        %v1543 = vadd.f32 %v1489, %v1542
        %1544 = vmatmul.bf16.gmra.mxu0 %v633
        %v1545 = vpop.f32.mrf.mxu0
        %v1546 = vadd.f32 %v1492, %v1545
        %v1547 = vpop.f32.mrf.mxu0
        %v1548 = vadd.f32 %v1494, %v1547
        %1549 = vmatmul.bf16.gmra.mxu0 %v636
        %v1550 = vpop.f32.mrf.mxu0
        %v1551 = vadd.f32 %v1497, %v1550
        %v1552 = vpop.f32.mrf.mxu0
        %v1553 = vadd.f32 %v1499, %v1552
        %1554 = vmatmul.bf16.gmra.mxu0 %v639
        %v1555 = vpop.f32.mrf.mxu0
        %v1556 = vadd.f32 %v1502, %v1555
        %v1557 = vpop.f32.mrf.mxu0
        %v1558 = vadd.f32 %v1504, %v1557
        %1559 = vmatmul.bf16.gmra.mxu0 %v642
        %v1560 = vpop.f32.mrf.mxu0
        %v1561 = vadd.f32 %v1507, %v1560
        %v1562 = vpop.f32.mrf.mxu0
        %v1563 = vadd.f32 %v1509, %v1562
        %1564 = vdwg.mxu0
        %1565 = vmatpush.bf16.msra.mxu0 %v1171
        %1566 = vmatpush.bf16.msra.mxu0 %v1166
        %1567 = vmatpush.bf16.msra.mxu0 %v1161
        %1568 = vmatpush.bf16.msra.mxu0 %v1156
        %1569 = vmatpush.bf16.msra.mxu0 %v1151
        %1570 = vmatpush.bf16.msra.mxu0 %v1146
        %1571 = vmatpush.bf16.msra.mxu0 %v1141
        %1572 = vmatpush.bf16.msra.mxu0 %v1136
        %1573 = vmatmul.bf16.gmra.mxu0 %v619
        %v1574 = vpop.f32.mrf.mxu0
        %v1575 = vadd.f32 %v1521, %v1574
        %v1576 = vpop.f32.mrf.mxu0
        %v1577 = vadd.f32 %v1523, %v1576
        %1578 = vmatmul.bf16.gmra.mxu0 %v622
        %v1579 = vpop.f32.mrf.mxu0
        %v1580 = vadd.f32 %v1526, %v1579
        %v1581 = vpop.f32.mrf.mxu0
        %v1582 = vadd.f32 %v1528, %v1581
        %1583 = vmatmul.bf16.gmra.mxu0 %v625
        %v1584 = vpop.f32.mrf.mxu0
        %v1585 = vadd.f32 %v1531, %v1584
        %v1586 = vpop.f32.mrf.mxu0
        %v1587 = vadd.f32 %v1533, %v1586
        %1588 = vmatmul.bf16.gmra.mxu0 %v628
        %v1589 = vpop.f32.mrf.mxu0
        %v1590 = vadd.f32 %v1536, %v1589
        %v1591 = vpop.f32.mrf.mxu0
        %v1592 = vadd.f32 %v1538, %v1591
        %1593 = vmatmul.bf16.gmra.mxu0 %v631
        %v1594 = vpop.f32.mrf.mxu0
        %v1595 = vadd.f32 %v1541, %v1594
        %v1596 = vpop.f32.mrf.mxu0
        %v1597 = vadd.f32 %v1543, %v1596
        %1598 = vmatmul.bf16.gmra.mxu0 %v634
        %v1599 = vpop.f32.mrf.mxu0
        %v1600 = vadd.f32 %v1546, %v1599
        %v1601 = vpop.f32.mrf.mxu0
        %v1602 = vadd.f32 %v1548, %v1601
        %1603 = vmatmul.bf16.gmra.mxu0 %v637
        %v1604 = vpop.f32.mrf.mxu0
        %v1605 = vadd.f32 %v1551, %v1604
        %v1606 = vpop.f32.mrf.mxu0
        %v1607 = vadd.f32 %v1553, %v1606
        %1608 = vmatmul.bf16.gmra.mxu0 %v640
        %v1609 = vpop.f32.mrf.mxu0
        %v1610 = vadd.f32 %v1556, %v1609
        %v1611 = vpop.f32.mrf.mxu0
        %v1612 = vadd.f32 %v1558, %v1611
        %1613 = vmatmul.bf16.gmra.mxu0 %v643
        %v1614 = vpop.f32.mrf.mxu0
        %v1615 = vadd.f32 %v1561, %v1614
        %v1616 = vpop.f32.mrf.mxu0
        %v1617 = vadd.f32 %v1563, %v1616
        %1618 = vdwg.mxu0
        %1619 = vmatpush.bf16.msra.mxu0 %v1092
        %1620 = vmatpush.bf16.msra.mxu0 %v1087
        %1621 = vmatpush.bf16.msra.mxu0 %v1082
        %1622 = vmatpush.bf16.msra.mxu0 %v1077
        %1623 = vmatpush.bf16.msra.mxu0 %v1072
        %1624 = vmatpush.bf16.msra.mxu0 %v1067
        %1625 = vmatpush.bf16.msra.mxu0 %v1062
        %1626 = vmatpush.bf16.msra.mxu0 %v1057
        %1627 = vmatmul.bf16.gmra.mxu0 %v617
        %v1628 = vpop.f32.mrf.mxu0
        %v1629 = vadd.f32 0.0, %v1628
        %v1630 = vpop.f32.mrf.mxu0
        %v1631 = vadd.f32 0.0, %v1630
        %1632 = vmatmul.bf16.gmra.mxu0 %v620
        %v1633 = vpop.f32.mrf.mxu0
        %v1634 = vadd.f32 0.0, %v1633
        %v1635 = vpop.f32.mrf.mxu0
        %v1636 = vadd.f32 0.0, %v1635
        %1637 = vmatmul.bf16.gmra.mxu0 %v623
        %v1638 = vpop.f32.mrf.mxu0
        %v1639 = vadd.f32 0.0, %v1638
        %v1640 = vpop.f32.mrf.mxu0
        %v1641 = vadd.f32 0.0, %v1640
        %1642 = vmatmul.bf16.gmra.mxu0 %v626
        %v1643 = vpop.f32.mrf.mxu0
        %v1644 = vadd.f32 0.0, %v1643
        %v1645 = vpop.f32.mrf.mxu0
        %v1646 = vadd.f32 0.0, %v1645
        %1647 = vmatmul.bf16.gmra.mxu0 %v629
        %v1648 = vpop.f32.mrf.mxu0
        %v1649 = vadd.f32 0.0, %v1648
        %v1650 = vpop.f32.mrf.mxu0
        %v1651 = vadd.f32 0.0, %v1650
        %1652 = vmatmul.bf16.gmra.mxu0 %v632
        %v1653 = vpop.f32.mrf.mxu0
        %v1654 = vadd.f32 0.0, %v1653
        %v1655 = vpop.f32.mrf.mxu0
        %v1656 = vadd.f32 0.0, %v1655
        %1657 = vmatmul.bf16.gmra.mxu0 %v635
        %v1658 = vpop.f32.mrf.mxu0
        %v1659 = vadd.f32 0.0, %v1658
        %v1660 = vpop.f32.mrf.mxu0
        %v1661 = vadd.f32 0.0, %v1660
        %1662 = vmatmul.bf16.gmra.mxu0 %v638
        %v1663 = vpop.f32.mrf.mxu0
        %v1664 = vadd.f32 0.0, %v1663
        %v1665 = vpop.f32.mrf.mxu0
        %v1666 = vadd.f32 0.0, %v1665
        %1667 = vmatmul.bf16.gmra.mxu0 %v641
        %v1668 = vpop.f32.mrf.mxu0
        %v1669 = vadd.f32 0.0, %v1668
        %v1670 = vpop.f32.mrf.mxu0
        %v1671 = vadd.f32 0.0, %v1670
        %1672 = vdwg.mxu0
        %1673 = vmatpush.bf16.msra.mxu0 %v1132
        %1674 = vmatpush.bf16.msra.mxu0 %v1127
        %1675 = vmatpush.bf16.msra.mxu0 %v1122
        %1676 = vmatpush.bf16.msra.mxu0 %v1117
        %1677 = vmatpush.bf16.msra.mxu0 %v1112
        %1678 = vmatpush.bf16.msra.mxu0 %v1107
        %1679 = vmatpush.bf16.msra.mxu0 %v1102
        %1680 = vmatpush.bf16.msra.mxu0 %v1097
        %1681 = vmatmul.bf16.gmra.mxu0 %v618
        %v1682 = vpop.f32.mrf.mxu0
        %v1683 = vadd.f32 %v1629, %v1682
        %v1684 = vpop.f32.mrf.mxu0
        %v1685 = vadd.f32 %v1631, %v1684
        %1686 = vmatmul.bf16.gmra.mxu0 %v621
        %v1687 = vpop.f32.mrf.mxu0
        %v1688 = vadd.f32 %v1634, %v1687
        %v1689 = vpop.f32.mrf.mxu0
        %v1690 = vadd.f32 %v1636, %v1689
        %1691 = vmatmul.bf16.gmra.mxu0 %v624
        %v1692 = vpop.f32.mrf.mxu0
        %v1693 = vadd.f32 %v1639, %v1692
        %v1694 = vpop.f32.mrf.mxu0
        %v1695 = vadd.f32 %v1641, %v1694
        %1696 = vmatmul.bf16.gmra.mxu0 %v627
        %v1697 = vpop.f32.mrf.mxu0
        %v1698 = vadd.f32 %v1644, %v1697
        %v1699 = vpop.f32.mrf.mxu0
        %v1700 = vadd.f32 %v1646, %v1699
        %1701 = vmatmul.bf16.gmra.mxu0 %v630
        %v1702 = vpop.f32.mrf.mxu0
        %v1703 = vadd.f32 %v1649, %v1702
        %v1704 = vpop.f32.mrf.mxu0
        %v1705 = vadd.f32 %v1651, %v1704
        %1706 = vmatmul.bf16.gmra.mxu0 %v633
        %v1707 = vpop.f32.mrf.mxu0
        %v1708 = vadd.f32 %v1654, %v1707
        %v1709 = vpop.f32.mrf.mxu0
        %v1710 = vadd.f32 %v1656, %v1709
        %1711 = vmatmul.bf16.gmra.mxu0 %v636
        %v1712 = vpop.f32.mrf.mxu0
        %v1713 = vadd.f32 %v1659, %v1712
        %v1714 = vpop.f32.mrf.mxu0
        %v1715 = vadd.f32 %v1661, %v1714
        %1716 = vmatmul.bf16.gmra.mxu0 %v639
        %v1717 = vpop.f32.mrf.mxu0
        %v1718 = vadd.f32 %v1664, %v1717
        %v1719 = vpop.f32.mrf.mxu0
        %v1720 = vadd.f32 %v1666, %v1719
        %1721 = vmatmul.bf16.gmra.mxu0 %v642
        %v1722 = vpop.f32.mrf.mxu0
        %v1723 = vadd.f32 %v1669, %v1722
        %v1724 = vpop.f32.mrf.mxu0
        %v1725 = vadd.f32 %v1671, %v1724
        %1726 = vdwg.mxu0
        %1727 = vmatpush.bf16.msra.mxu0 %v1172
        %1728 = vmatpush.bf16.msra.mxu0 %v1167
        %1729 = vmatpush.bf16.msra.mxu0 %v1162
        %1730 = vmatpush.bf16.msra.mxu0 %v1157
        %1731 = vmatpush.bf16.msra.mxu0 %v1152
        %1732 = vmatpush.bf16.msra.mxu0 %v1147
        %1733 = vmatpush.bf16.msra.mxu0 %v1142
        %1734 = vmatpush.bf16.msra.mxu0 %v1137
        %1735 = vmatmul.bf16.gmra.mxu0 %v619
        %v1736 = vpop.f32.mrf.mxu0
        %v1737 = vadd.f32 %v1683, %v1736
        %v1738 = vpop.f32.mrf.mxu0
        %v1739 = vadd.f32 %v1685, %v1738
        %1740 = vmatmul.bf16.gmra.mxu0 %v622
        %v1741 = vpop.f32.mrf.mxu0
        %v1742 = vadd.f32 %v1688, %v1741
        %v1743 = vpop.f32.mrf.mxu0
        %v1744 = vadd.f32 %v1690, %v1743
        %1745 = vmatmul.bf16.gmra.mxu0 %v625
        %v1746 = vpop.f32.mrf.mxu0
        %v1747 = vadd.f32 %v1693, %v1746
        %v1748 = vpop.f32.mrf.mxu0
        %v1749 = vadd.f32 %v1695, %v1748
        %1750 = vmatmul.bf16.gmra.mxu0 %v628
        %v1751 = vpop.f32.mrf.mxu0
        %v1752 = vadd.f32 %v1698, %v1751
        %v1753 = vpop.f32.mrf.mxu0
        %v1754 = vadd.f32 %v1700, %v1753
        %1755 = vmatmul.bf16.gmra.mxu0 %v631
        %v1756 = vpop.f32.mrf.mxu0
        %v1757 = vadd.f32 %v1703, %v1756
        %v1758 = vpop.f32.mrf.mxu0
        %v1759 = vadd.f32 %v1705, %v1758
        %1760 = vmatmul.bf16.gmra.mxu0 %v634
        %v1761 = vpop.f32.mrf.mxu0
        %v1762 = vadd.f32 %v1708, %v1761
        %v1763 = vpop.f32.mrf.mxu0
        %v1764 = vadd.f32 %v1710, %v1763
        %1765 = vmatmul.bf16.gmra.mxu0 %v637
        %v1766 = vpop.f32.mrf.mxu0
        %v1767 = vadd.f32 %v1713, %v1766
        %v1768 = vpop.f32.mrf.mxu0
        %v1769 = vadd.f32 %v1715, %v1768
        %1770 = vmatmul.bf16.gmra.mxu0 %v640
        %v1771 = vpop.f32.mrf.mxu0
        %v1772 = vadd.f32 %v1718, %v1771
        %v1773 = vpop.f32.mrf.mxu0
        %v1774 = vadd.f32 %v1720, %v1773
        %1775 = vmatmul.bf16.gmra.mxu0 %v643
        %v1776 = vpop.f32.mrf.mxu0
        %v1777 = vadd.f32 %v1723, %v1776
        %v1778 = vpop.f32.mrf.mxu0
        %v1779 = vadd.f32 %v1725, %v1778
        %1780 = vdwg.mxu0
        %1781 = vmatpush.bf16.msra.mxu0 %v1093
        %1782 = vmatpush.bf16.msra.mxu0 %v1088
        %1783 = vmatpush.bf16.msra.mxu0 %v1083
        %1784 = vmatpush.bf16.msra.mxu0 %v1078
        %1785 = vmatpush.bf16.msra.mxu0 %v1073
        %1786 = vmatpush.bf16.msra.mxu0 %v1068
        %1787 = vmatpush.bf16.msra.mxu0 %v1063
        %1788 = vmatpush.bf16.msra.mxu0 %v1058
        %1789 = vmatmul.bf16.gmra.mxu0 %v617
        %v1790 = vpop.f32.mrf.mxu0
        %v1791 = vadd.f32 0.0, %v1790
        %v1792 = vpop.f32.mrf.mxu0
        %v1793 = vadd.f32 0.0, %v1792
        %1794 = vmatmul.bf16.gmra.mxu0 %v620
        %v1795 = vpop.f32.mrf.mxu0
        %v1796 = vadd.f32 0.0, %v1795
        %v1797 = vpop.f32.mrf.mxu0
        %v1798 = vadd.f32 0.0, %v1797
        %1799 = vmatmul.bf16.gmra.mxu0 %v623
        %v1800 = vpop.f32.mrf.mxu0
        %v1801 = vadd.f32 0.0, %v1800
        %v1802 = vpop.f32.mrf.mxu0
        %v1803 = vadd.f32 0.0, %v1802
        %1804 = vmatmul.bf16.gmra.mxu0 %v626
        %v1805 = vpop.f32.mrf.mxu0
        %v1806 = vadd.f32 0.0, %v1805
        %v1807 = vpop.f32.mrf.mxu0
        %v1808 = vadd.f32 0.0, %v1807
        %1809 = vmatmul.bf16.gmra.mxu0 %v629
        %v1810 = vpop.f32.mrf.mxu0
        %v1811 = vadd.f32 0.0, %v1810
        %v1812 = vpop.f32.mrf.mxu0
        %v1813 = vadd.f32 0.0, %v1812
        %1814 = vmatmul.bf16.gmra.mxu0 %v632
        %v1815 = vpop.f32.mrf.mxu0
        %v1816 = vadd.f32 0.0, %v1815
        %v1817 = vpop.f32.mrf.mxu0
        %v1818 = vadd.f32 0.0, %v1817
        %1819 = vmatmul.bf16.gmra.mxu0 %v635
        %v1820 = vpop.f32.mrf.mxu0
        %v1821 = vadd.f32 0.0, %v1820
        %v1822 = vpop.f32.mrf.mxu0
        %v1823 = vadd.f32 0.0, %v1822
        %1824 = vmatmul.bf16.gmra.mxu0 %v638
        %v1825 = vpop.f32.mrf.mxu0
        %v1826 = vadd.f32 0.0, %v1825
        %v1827 = vpop.f32.mrf.mxu0
        %v1828 = vadd.f32 0.0, %v1827
        %1829 = vmatmul.bf16.gmra.mxu0 %v641
        %v1830 = vpop.f32.mrf.mxu0
        %v1831 = vadd.f32 0.0, %v1830
        %v1832 = vpop.f32.mrf.mxu0
        %v1833 = vadd.f32 0.0, %v1832
        %1834 = vdwg.mxu0
        %1835 = vmatpush.bf16.msra.mxu0 %v1133
        %1836 = vmatpush.bf16.msra.mxu0 %v1128
        %1837 = vmatpush.bf16.msra.mxu0 %v1123
        %1838 = vmatpush.bf16.msra.mxu0 %v1118
        %1839 = vmatpush.bf16.msra.mxu0 %v1113
        %1840 = vmatpush.bf16.msra.mxu0 %v1108
        %1841 = vmatpush.bf16.msra.mxu0 %v1103
        %1842 = vmatpush.bf16.msra.mxu0 %v1098
        %1843 = vmatmul.bf16.gmra.mxu0 %v618
        %v1844 = vpop.f32.mrf.mxu0
        %v1845 = vadd.f32 %v1791, %v1844
        %v1846 = vpop.f32.mrf.mxu0
        %v1847 = vadd.f32 %v1793, %v1846
        %1848 = vmatmul.bf16.gmra.mxu0 %v621
        %v1849 = vpop.f32.mrf.mxu0
        %v1850 = vadd.f32 %v1796, %v1849
        %v1851 = vpop.f32.mrf.mxu0
        %v1852 = vadd.f32 %v1798, %v1851
        %1853 = vmatmul.bf16.gmra.mxu0 %v624
        %v1854 = vpop.f32.mrf.mxu0
        %v1855 = vadd.f32 %v1801, %v1854
        %v1856 = vpop.f32.mrf.mxu0
        %v1857 = vadd.f32 %v1803, %v1856
        %1858 = vmatmul.bf16.gmra.mxu0 %v627
        %v1859 = vpop.f32.mrf.mxu0
        %v1860 = vadd.f32 %v1806, %v1859
        %v1861 = vpop.f32.mrf.mxu0
        %v1862 = vadd.f32 %v1808, %v1861
        %1863 = vmatmul.bf16.gmra.mxu0 %v630
        %v1864 = vpop.f32.mrf.mxu0
        %v1865 = vadd.f32 %v1811, %v1864
        %v1866 = vpop.f32.mrf.mxu0
        %v1867 = vadd.f32 %v1813, %v1866
        %1868 = vmatmul.bf16.gmra.mxu0 %v633
        %v1869 = vpop.f32.mrf.mxu0
        %v1870 = vadd.f32 %v1816, %v1869
        %v1871 = vpop.f32.mrf.mxu0
        %v1872 = vadd.f32 %v1818, %v1871
        %1873 = vmatmul.bf16.gmra.mxu0 %v636
        %v1874 = vpop.f32.mrf.mxu0
        %v1875 = vadd.f32 %v1821, %v1874
        %v1876 = vpop.f32.mrf.mxu0
        %v1877 = vadd.f32 %v1823, %v1876
        %1878 = vmatmul.bf16.gmra.mxu0 %v639
        %v1879 = vpop.f32.mrf.mxu0
        %v1880 = vadd.f32 %v1826, %v1879
        %v1881 = vpop.f32.mrf.mxu0
        %v1882 = vadd.f32 %v1828, %v1881
        %1883 = vmatmul.bf16.gmra.mxu0 %v642
        %v1884 = vpop.f32.mrf.mxu0
        %v1885 = vadd.f32 %v1831, %v1884
        %v1886 = vpop.f32.mrf.mxu0
        %v1887 = vadd.f32 %v1833, %v1886
        %1888 = vdwg.mxu0
        %1889 = vmatpush.bf16.msra.mxu0 %v1173
        %1890 = vmatpush.bf16.msra.mxu0 %v1168
        %1891 = vmatpush.bf16.msra.mxu0 %v1163
        %1892 = vmatpush.bf16.msra.mxu0 %v1158
        %1893 = vmatpush.bf16.msra.mxu0 %v1153
        %1894 = vmatpush.bf16.msra.mxu0 %v1148
        %1895 = vmatpush.bf16.msra.mxu0 %v1143
        %1896 = vmatpush.bf16.msra.mxu0 %v1138
        %1897 = vmatmul.bf16.gmra.mxu0 %v619
        %v1898 = vpop.f32.mrf.mxu0
        %v1899 = vadd.f32 %v1845, %v1898
        %v1900 = vpop.f32.mrf.mxu0
        %v1901 = vadd.f32 %v1847, %v1900
        %1902 = vmatmul.bf16.gmra.mxu0 %v622
        %v1903 = vpop.f32.mrf.mxu0
        %v1904 = vadd.f32 %v1850, %v1903
        %v1905 = vpop.f32.mrf.mxu0
        %v1906 = vadd.f32 %v1852, %v1905
        %1907 = vmatmul.bf16.gmra.mxu0 %v625
        %v1908 = vpop.f32.mrf.mxu0
        %v1909 = vadd.f32 %v1855, %v1908
        %v1910 = vpop.f32.mrf.mxu0
        %v1911 = vadd.f32 %v1857, %v1910
        %1912 = vmatmul.bf16.gmra.mxu0 %v628
        %v1913 = vpop.f32.mrf.mxu0
        %v1914 = vadd.f32 %v1860, %v1913
        %v1915 = vpop.f32.mrf.mxu0
        %v1916 = vadd.f32 %v1862, %v1915
        %1917 = vmatmul.bf16.gmra.mxu0 %v631
        %v1918 = vpop.f32.mrf.mxu0
        %v1919 = vadd.f32 %v1865, %v1918
        %v1920 = vpop.f32.mrf.mxu0
        %v1921 = vadd.f32 %v1867, %v1920
        %1922 = vmatmul.bf16.gmra.mxu0 %v634
        %v1923 = vpop.f32.mrf.mxu0
        %v1924 = vadd.f32 %v1870, %v1923
        %v1925 = vpop.f32.mrf.mxu0
        %v1926 = vadd.f32 %v1872, %v1925
        %1927 = vmatmul.bf16.gmra.mxu0 %v637
        %v1928 = vpop.f32.mrf.mxu0
        %v1929 = vadd.f32 %v1875, %v1928
        %v1930 = vpop.f32.mrf.mxu0
        %v1931 = vadd.f32 %v1877, %v1930
        %1932 = vmatmul.bf16.gmra.mxu0 %v640
        %v1933 = vpop.f32.mrf.mxu0
        %v1934 = vadd.f32 %v1880, %v1933
        %v1935 = vpop.f32.mrf.mxu0
        %v1936 = vadd.f32 %v1882, %v1935
        %1937 = vmatmul.bf16.gmra.mxu0 %v643
        %v1938 = vpop.f32.mrf.mxu0
        %v1939 = vadd.f32 %v1885, %v1938
        %v1940 = vpop.f32.mrf.mxu0
        %v1941 = vadd.f32 %v1887, %v1940
        %1942 = vdwg.mxu0
        %1943 = vmatpush.bf16.msra.mxu0 %v1094
        %1944 = vmatpush.bf16.msra.mxu0 %v1089
        %1945 = vmatpush.bf16.msra.mxu0 %v1084
        %1946 = vmatpush.bf16.msra.mxu0 %v1079
        %1947 = vmatpush.bf16.msra.mxu0 %v1074
        %1948 = vmatpush.bf16.msra.mxu0 %v1069
        %1949 = vmatpush.bf16.msra.mxu0 %v1064
        %1950 = vmatpush.bf16.msra.mxu0 %v1059
        %1951 = vmatmul.bf16.gmra.mxu0 %v617
        %v1952 = vpop.f32.mrf.mxu0
        %v1953 = vadd.f32 0.0, %v1952
        %v1954 = vpop.f32.mrf.mxu0
        %v1955 = vadd.f32 0.0, %v1954
        %1956 = vmatmul.bf16.gmra.mxu0 %v620
        %v1957 = vpop.f32.mrf.mxu0
        %v1958 = vadd.f32 0.0, %v1957
        %v1959 = vpop.f32.mrf.mxu0
        %v1960 = vadd.f32 0.0, %v1959
        %1961 = vmatmul.bf16.gmra.mxu0 %v623
        %v1962 = vpop.f32.mrf.mxu0
        %v1963 = vadd.f32 0.0, %v1962
        %v1964 = vpop.f32.mrf.mxu0
        %v1965 = vadd.f32 0.0, %v1964
        %1966 = vmatmul.bf16.gmra.mxu0 %v626
        %v1967 = vpop.f32.mrf.mxu0
        %v1968 = vadd.f32 0.0, %v1967
        %v1969 = vpop.f32.mrf.mxu0
        %v1970 = vadd.f32 0.0, %v1969
        %1971 = vmatmul.bf16.gmra.mxu0 %v629
        %v1972 = vpop.f32.mrf.mxu0
        %v1973 = vadd.f32 0.0, %v1972
        %v1974 = vpop.f32.mrf.mxu0
        %v1975 = vadd.f32 0.0, %v1974
        %1976 = vmatmul.bf16.gmra.mxu0 %v632
        %v1977 = vpop.f32.mrf.mxu0
        %v1978 = vadd.f32 0.0, %v1977
        %v1979 = vpop.f32.mrf.mxu0
        %v1980 = vadd.f32 0.0, %v1979
        %1981 = vmatmul.bf16.gmra.mxu0 %v635
        %v1982 = vpop.f32.mrf.mxu0
        %v1983 = vadd.f32 0.0, %v1982
        %v1984 = vpop.f32.mrf.mxu0
        %v1985 = vadd.f32 0.0, %v1984
        %1986 = vmatmul.bf16.gmra.mxu0 %v638
        %v1987 = vpop.f32.mrf.mxu0
        %v1988 = vadd.f32 0.0, %v1987
        %v1989 = vpop.f32.mrf.mxu0
        %v1990 = vadd.f32 0.0, %v1989
        %1991 = vmatmul.bf16.gmra.mxu0 %v641
        %v1992 = vpop.f32.mrf.mxu0
        %v1993 = vadd.f32 0.0, %v1992
        %v1994 = vpop.f32.mrf.mxu0
        %v1995 = vadd.f32 0.0, %v1994
        %1996 = vdwg.mxu0
        %1997 = vmatpush.bf16.msra.mxu0 %v1134
        %1998 = vmatpush.bf16.msra.mxu0 %v1129
        %1999 = vmatpush.bf16.msra.mxu0 %v1124
        %2000 = vmatpush.bf16.msra.mxu0 %v1119
        %2001 = vmatpush.bf16.msra.mxu0 %v1114
        %2002 = vmatpush.bf16.msra.mxu0 %v1109
        %2003 = vmatpush.bf16.msra.mxu0 %v1104
        %2004 = vmatpush.bf16.msra.mxu0 %v1099
        %2005 = vmatmul.bf16.gmra.mxu0 %v618
        %v2006 = vpop.f32.mrf.mxu0
        %v2007 = vadd.f32 %v1953, %v2006
        %v2008 = vpop.f32.mrf.mxu0
        %v2009 = vadd.f32 %v1955, %v2008
        %2010 = vmatmul.bf16.gmra.mxu0 %v621
        %v2011 = vpop.f32.mrf.mxu0
        %v2012 = vadd.f32 %v1958, %v2011
        %v2013 = vpop.f32.mrf.mxu0
        %v2014 = vadd.f32 %v1960, %v2013
        %2015 = vmatmul.bf16.gmra.mxu0 %v624
        %v2016 = vpop.f32.mrf.mxu0
        %v2017 = vadd.f32 %v1963, %v2016
        %v2018 = vpop.f32.mrf.mxu0
        %v2019 = vadd.f32 %v1965, %v2018
        %2020 = vmatmul.bf16.gmra.mxu0 %v627
        %v2021 = vpop.f32.mrf.mxu0
        %v2022 = vadd.f32 %v1968, %v2021
        %v2023 = vpop.f32.mrf.mxu0
        %v2024 = vadd.f32 %v1970, %v2023
        %2025 = vmatmul.bf16.gmra.mxu0 %v630
        %v2026 = vpop.f32.mrf.mxu0
        %v2027 = vadd.f32 %v1973, %v2026
        %v2028 = vpop.f32.mrf.mxu0
        %v2029 = vadd.f32 %v1975, %v2028
        %2030 = vmatmul.bf16.gmra.mxu0 %v633
        %v2031 = vpop.f32.mrf.mxu0
        %v2032 = vadd.f32 %v1978, %v2031
        %v2033 = vpop.f32.mrf.mxu0
        %v2034 = vadd.f32 %v1980, %v2033
        %2035 = vmatmul.bf16.gmra.mxu0 %v636
        %v2036 = vpop.f32.mrf.mxu0
        %v2037 = vadd.f32 %v1983, %v2036
        %v2038 = vpop.f32.mrf.mxu0
        %v2039 = vadd.f32 %v1985, %v2038
        %2040 = vmatmul.bf16.gmra.mxu0 %v639
        %v2041 = vpop.f32.mrf.mxu0
        %v2042 = vadd.f32 %v1988, %v2041
        %v2043 = vpop.f32.mrf.mxu0
        %v2044 = vadd.f32 %v1990, %v2043
        %2045 = vmatmul.bf16.gmra.mxu0 %v642
        %v2046 = vpop.f32.mrf.mxu0
        %v2047 = vadd.f32 %v1993, %v2046
        %v2048 = vpop.f32.mrf.mxu0
        %v2049 = vadd.f32 %v1995, %v2048
        %2050 = vdwg.mxu0
        %2051 = vmatpush.bf16.msra.mxu0 %v1174
        %2052 = vmatpush.bf16.msra.mxu0 %v1169
        %2053 = vmatpush.bf16.msra.mxu0 %v1164
        %2054 = vmatpush.bf16.msra.mxu0 %v1159
        %2055 = vmatpush.bf16.msra.mxu0 %v1154
        %2056 = vmatpush.bf16.msra.mxu0 %v1149
        %2057 = vmatpush.bf16.msra.mxu0 %v1144
        %2058 = vmatpush.bf16.msra.mxu0 %v1139
        %2059 = vmatmul.bf16.gmra.mxu0 %v619
        %v2060 = vpop.f32.mrf.mxu0
        %v2061 = vadd.f32 %v2007, %v2060
        %v2062 = vpop.f32.mrf.mxu0
        %v2063 = vadd.f32 %v2009, %v2062
        %2064 = vmatmul.bf16.gmra.mxu0 %v622
        %v2065 = vpop.f32.mrf.mxu0
        %v2066 = vadd.f32 %v2012, %v2065
        %v2067 = vpop.f32.mrf.mxu0
        %v2068 = vadd.f32 %v2014, %v2067
        %2069 = vmatmul.bf16.gmra.mxu0 %v625
        %v2070 = vpop.f32.mrf.mxu0
        %v2071 = vadd.f32 %v2017, %v2070
        %v2072 = vpop.f32.mrf.mxu0
        %v2073 = vadd.f32 %v2019, %v2072
        %2074 = vmatmul.bf16.gmra.mxu0 %v628
        %v2075 = vpop.f32.mrf.mxu0
        %v2076 = vadd.f32 %v2022, %v2075
        %v2077 = vpop.f32.mrf.mxu0
        %v2078 = vadd.f32 %v2024, %v2077
        %2079 = vmatmul.bf16.gmra.mxu0 %v631
        %v2080 = vpop.f32.mrf.mxu0
        %v2081 = vadd.f32 %v2027, %v2080
        %v2082 = vpop.f32.mrf.mxu0
        %v2083 = vadd.f32 %v2029, %v2082
        %2084 = vmatmul.bf16.gmra.mxu0 %v634
        %v2085 = vpop.f32.mrf.mxu0
        %v2086 = vadd.f32 %v2032, %v2085
        %v2087 = vpop.f32.mrf.mxu0
        %v2088 = vadd.f32 %v2034, %v2087
        %2089 = vmatmul.bf16.gmra.mxu0 %v637
        %v2090 = vpop.f32.mrf.mxu0
        %v2091 = vadd.f32 %v2037, %v2090
        %v2092 = vpop.f32.mrf.mxu0
        %v2093 = vadd.f32 %v2039, %v2092
        %2094 = vmatmul.bf16.gmra.mxu0 %v640
        %v2095 = vpop.f32.mrf.mxu0
        %v2096 = vadd.f32 %v2042, %v2095
        %v2097 = vpop.f32.mrf.mxu0
        %v2098 = vadd.f32 %v2044, %v2097
        %2099 = vmatmul.bf16.gmra.mxu0 %v643
        %v2100 = vpop.f32.mrf.mxu0
        %v2101 = vadd.f32 %v2047, %v2100
        %v2102 = vpop.f32.mrf.mxu0
        %v2103 = vadd.f32 %v2049, %v2102
        %2104 = vdwg.mxu0
        %v2105 = vmax.f32 %v1413, 0.0
        %v2106 = vmax.f32 %v1575, 0.0
        %v2107 = vmax.f32 %v1737, 0.0
        %v2108 = vmax.f32 %v1899, 0.0
        %v2109 = vmax.f32 %v2061, 0.0
        %v2110 = vmax.f32 %v1415, 0.0
        %v2111 = vmax.f32 %v1577, 0.0
        %v2112 = vmax.f32 %v1739, 0.0
        %v2113 = vmax.f32 %v1901, 0.0
        %v2114 = vmax.f32 %v2063, 0.0
        %v2115 = vmax.f32 %v1418, 0.0
        %v2116 = vmax.f32 %v1580, 0.0
        %v2117 = vmax.f32 %v1742, 0.0
        %v2118 = vmax.f32 %v1904, 0.0
        %v2119 = vmax.f32 %v2066, 0.0
        %v2120 = vmax.f32 %v1420, 0.0
        %v2121 = vmax.f32 %v1582, 0.0
        %v2122 = vmax.f32 %v1744, 0.0
        %v2123 = vmax.f32 %v1906, 0.0
        %v2124 = vmax.f32 %v2068, 0.0
        %v2125 = vmax.f32 %v1423, 0.0
        %v2126 = vmax.f32 %v1585, 0.0
        %v2127 = vmax.f32 %v1747, 0.0
        %v2128 = vmax.f32 %v1909, 0.0
        %v2129 = vmax.f32 %v2071, 0.0
        %v2130 = vmax.f32 %v1425, 0.0
        %v2131 = vmax.f32 %v1587, 0.0
        %v2132 = vmax.f32 %v1749, 0.0
        %v2133 = vmax.f32 %v1911, 0.0
        %v2134 = vmax.f32 %v2073, 0.0
        %v2135 = vmax.f32 %v1428, 0.0
        %v2136 = vmax.f32 %v1590, 0.0
        %v2137 = vmax.f32 %v1752, 0.0
        %v2138 = vmax.f32 %v1914, 0.0
        %v2139 = vmax.f32 %v2076, 0.0
        %v2140 = vmax.f32 %v1430, 0.0
        %v2141 = vmax.f32 %v1592, 0.0
        %v2142 = vmax.f32 %v1754, 0.0
        %v2143 = vmax.f32 %v1916, 0.0
        %v2144 = vmax.f32 %v2078, 0.0
        %v2145 = vmax.f32 %v1433, 0.0
        %v2146 = vmax.f32 %v1595, 0.0
        %v2147 = vmax.f32 %v1757, 0.0
        %v2148 = vmax.f32 %v1919, 0.0
        %v2149 = vmax.f32 %v2081, 0.0
        %v2150 = vmax.f32 %v1435, 0.0
        %v2151 = vmax.f32 %v1597, 0.0
        %v2152 = vmax.f32 %v1759, 0.0
        %v2153 = vmax.f32 %v1921, 0.0
        %v2154 = vmax.f32 %v2083, 0.0
        %v2155 = vmax.f32 %v1438, 0.0
        %v2156 = vmax.f32 %v1600, 0.0
        %v2157 = vmax.f32 %v1762, 0.0
        %v2158 = vmax.f32 %v1924, 0.0
        %v2159 = vmax.f32 %v2086, 0.0
        %v2160 = vmax.f32 %v1440, 0.0
        %v2161 = vmax.f32 %v1602, 0.0
        %v2162 = vmax.f32 %v1764, 0.0
        %v2163 = vmax.f32 %v1926, 0.0
        %v2164 = vmax.f32 %v2088, 0.0
        %v2165 = vmax.f32 %v1443, 0.0
        %v2166 = vmax.f32 %v1605, 0.0
        %v2167 = vmax.f32 %v1767, 0.0
        %v2168 = vmax.f32 %v1929, 0.0
        %v2169 = vmax.f32 %v2091, 0.0
        %v2170 = vmax.f32 %v1445, 0.0
        %v2171 = vmax.f32 %v1607, 0.0
        %v2172 = vmax.f32 %v1769, 0.0
        %v2173 = vmax.f32 %v1931, 0.0
        %v2174 = vmax.f32 %v2093, 0.0
        %v2175 = vmax.f32 %v1448, 0.0
        %v2176 = vmax.f32 %v1610, 0.0
        %v2177 = vmax.f32 %v1772, 0.0
        %v2178 = vmax.f32 %v1934, 0.0
        %v2179 = vmax.f32 %v2096, 0.0
        %v2180 = vmax.f32 %v1450, 0.0
        %v2181 = vmax.f32 %v1612, 0.0
        %v2182 = vmax.f32 %v1774, 0.0
        %v2183 = vmax.f32 %v1936, 0.0
        %v2184 = vmax.f32 %v2098, 0.0
        %v2185 = vmax.f32 %v1453, 0.0
        %v2186 = vmax.f32 %v1615, 0.0
        %v2187 = vmax.f32 %v1777, 0.0
        %v2188 = vmax.f32 %v1939, 0.0
        %v2189 = vmax.f32 %v2101, 0.0
        %v2190 = vmax.f32 %v1455, 0.0
        %v2191 = vmax.f32 %v1617, 0.0
        %v2192 = vmax.f32 %v1779, 0.0
        %v2193 = vmax.f32 %v1941, 0.0
        %v2194 = vmax.f32 %v2103, 0.0
        %v2195 = vpack.c.bf16 %v2110, %v2105
        %v2196 = vpack.c.bf16 %v2111, %v2106
        %v2197 = vpack.c.bf16 %v2112, %v2107
        %v2198 = vpack.c.bf16 %v2113, %v2108
        %v2199 = vpack.c.bf16 %v2114, %v2109
        %v2200 = vpack.c.bf16 %v2120, %v2115
        %v2201 = vpack.c.bf16 %v2121, %v2116
        %v2202 = vpack.c.bf16 %v2122, %v2117
        %v2203 = vpack.c.bf16 %v2123, %v2118
        %v2204 = vpack.c.bf16 %v2124, %v2119
        %v2205 = vpack.c.bf16 %v2130, %v2125
        %v2206 = vpack.c.bf16 %v2131, %v2126
        %v2207 = vpack.c.bf16 %v2132, %v2127
        %v2208 = vpack.c.bf16 %v2133, %v2128
        %v2209 = vpack.c.bf16 %v2134, %v2129
        %v2210 = vpack.c.bf16 %v2140, %v2135
        %v2211 = vpack.c.bf16 %v2141, %v2136
        %v2212 = vpack.c.bf16 %v2142, %v2137
        %v2213 = vpack.c.bf16 %v2143, %v2138
        %v2214 = vpack.c.bf16 %v2144, %v2139
        %v2215 = vpack.c.bf16 %v2150, %v2145
        %v2216 = vpack.c.bf16 %v2151, %v2146
        %v2217 = vpack.c.bf16 %v2152, %v2147
        %v2218 = vpack.c.bf16 %v2153, %v2148
        %v2219 = vpack.c.bf16 %v2154, %v2149
        %v2220 = vpack.c.bf16 %v2160, %v2155
        %v2221 = vpack.c.bf16 %v2161, %v2156
        %v2222 = vpack.c.bf16 %v2162, %v2157
        %v2223 = vpack.c.bf16 %v2163, %v2158
        %v2224 = vpack.c.bf16 %v2164, %v2159
        %v2225 = vpack.c.bf16 %v2170, %v2165
        %v2226 = vpack.c.bf16 %v2171, %v2166
        %v2227 = vpack.c.bf16 %v2172, %v2167
        %v2228 = vpack.c.bf16 %v2173, %v2168
        %v2229 = vpack.c.bf16 %v2174, %v2169
        %v2230 = vpack.c.bf16 %v2180, %v2175
        %v2231 = vpack.c.bf16 %v2181, %v2176
        %v2232 = vpack.c.bf16 %v2182, %v2177
        %v2233 = vpack.c.bf16 %v2183, %v2178
        %v2234 = vpack.c.bf16 %v2184, %v2179
        %v2235 = vpack.c.bf16 %v2190, %v2185
        %v2236 = vpack.c.bf16 %v2191, %v2186
        %v2237 = vpack.c.bf16 %v2192, %v2187
        %v2238 = vpack.c.bf16 %v2193, %v2188
        %v2239 = vpack.c.bf16 %v2194, %v2189
        %v2320 = vunpack.c.l.b16 %v379
        %v2321 = vunpack.c.l.b16 %v380
        %v2322 = vunpack.c.l.b16 %v381
        %v2323 = vunpack.c.l.b16 %v382
        %v2324 = vunpack.c.l.b16 %v383
        %v2325 = vunpack.c.l.b16 %v384
        %v2326 = vunpack.c.l.b16 %v385
        %v2327 = vunpack.c.l.b16 %v386
        %v2328 = vunpack.c.l.b16 %v387
        %v2329 = vunpack.c.l.b16 %v388
        %v2330 = vunpack.c.l.b16 %v389
        %v2331 = vunpack.c.l.b16 %v390
        %v2332 = vunpack.c.l.b16 %v391
        %v2333 = vunpack.c.l.b16 %v392
        %v2334 = vunpack.c.l.b16 %v393
        %v2335 = vunpack.c.l.b16 %v394
        %v2336 = vunpack.c.l.b16 %v395
        %v2337 = vunpack.c.l.b16 %v396
        %v2338 = vunpack.c.l.b16 %v397
        %v2339 = vunpack.c.l.b16 %v398
        %v2340 = vunpack.c.l.b16 %v399
        %v2341 = vunpack.c.l.b16 %v400
        %v2342 = vunpack.c.l.b16 %v401
        %v2343 = vunpack.c.l.b16 %v402
        %v2344 = vunpack.c.l.b16 %v403
        %v2345 = vunpack.c.l.b16 %v404
        %v2346 = vunpack.c.l.b16 %v405
        %v2347 = vunpack.c.l.b16 %v406
        %v2348 = vunpack.c.l.b16 %v407
        %v2349 = vunpack.c.l.b16 %v408
        %v2350 = vunpack.c.l.b16 %v409
        %v2351 = vunpack.c.l.b16 %v410
        %v2352 = vunpack.c.l.b16 %v411
        %v2353 = vunpack.c.l.b16 %v412
        %v2354 = vunpack.c.l.b16 %v413
        %v2355 = vunpack.c.l.b16 %v414
        %v2356 = vunpack.c.l.b16 %v415
        %v2357 = vunpack.c.l.b16 %v416
        %v2358 = vunpack.c.l.b16 %v417
        %v2359 = vunpack.c.l.b16 %v418
        %v2360 = vunpack.c.l.b16 %v419
        %v2361 = vunpack.c.l.b16 %v420
        %v2362 = vunpack.c.l.b16 %v421
        %v2363 = vunpack.c.l.b16 %v422
        %v2364 = vunpack.c.l.b16 %v423
        %v2365 = vunpack.c.l.b16 %v424
        %v2366 = vunpack.c.l.b16 %v425
        %v2367 = vunpack.c.l.b16 %v426
        %v2368 = vunpack.c.l.b16 %v427
        %v2369 = vunpack.c.l.b16 %v428
        %v2370 = vunpack.c.l.b16 %v429
        %v2371 = vunpack.c.l.b16 %v430
        %v2372 = vunpack.c.l.b16 %v431
        %v2373 = vunpack.c.l.b16 %v432
        %v2374 = vunpack.c.l.b16 %v433
        %v2375 = vunpack.c.l.b16 %v434
        %v2376 = vunpack.c.l.b16 %v435
        %v2377 = vunpack.c.l.b16 %v436
        %v2378 = vunpack.c.l.b16 %v437
        %v2379 = vunpack.c.l.b16 %v438
        %v2380 = vunpack.c.l.b16 %v439
        %v2381 = vunpack.c.l.b16 %v440
        %v2382 = vunpack.c.l.b16 %v441
        %v2383 = vunpack.c.l.b16 %v442
        %v2384 = vunpack.c.l.b16 %v443
        %v2385 = vunpack.c.l.b16 %v444
        %v2386 = vunpack.c.l.b16 %v445
        %v2387 = vunpack.c.l.b16 %v446
        %v2388 = vunpack.c.l.b16 %v447
        %v2389 = vunpack.c.l.b16 %v448
        %v2390 = vunpack.c.l.b16 %v449
        %v2391 = vunpack.c.l.b16 %v450
        %v2392 = vunpack.c.l.b16 %v451
        %v2393 = vunpack.c.l.b16 %v452
        %v2394 = vunpack.c.l.b16 %v453
        %v2395 = vunpack.c.l.b16 %v454
        %v2396 = vunpack.c.l.b16 %v455
        %v2397 = vunpack.c.l.b16 %v456
        %v2398 = vunpack.c.l.b16 %v457
        %v2399 = vunpack.c.l.b16 %v458
        %v2400 = vpack.c.b16 %v2321, %v2320
        %v2401 = vpack.c.b16 %v2323, %v2322
        %v2402 = vpack.c.b16 %v2325, %v2324
        %v2403 = vpack.c.b16 %v2327, %v2326
        %v2404 = vpack.c.b16 %v2329, %v2328
        %v2405 = vpack.c.b16 %v2331, %v2330
        %v2406 = vpack.c.b16 %v2333, %v2332
        %v2407 = vpack.c.b16 %v2335, %v2334
        %v2408 = vpack.c.b16 %v2337, %v2336
        %v2409 = vpack.c.b16 %v2339, %v2338
        %v2410 = vpack.c.b16 %v2341, %v2340
        %v2411 = vpack.c.b16 %v2343, %v2342
        %v2412 = vpack.c.b16 %v2345, %v2344
        %v2413 = vpack.c.b16 %v2347, %v2346
        %v2414 = vpack.c.b16 %v2349, %v2348
        %v2415 = vpack.c.b16 %v2351, %v2350
        %v2416 = vpack.c.b16 %v2353, %v2352
        %v2417 = vpack.c.b16 %v2355, %v2354
        %v2418 = vpack.c.b16 %v2357, %v2356
        %v2419 = vpack.c.b16 %v2359, %v2358
        %v2420 = vpack.c.b16 %v2361, %v2360
        %v2421 = vpack.c.b16 %v2363, %v2362
        %v2422 = vpack.c.b16 %v2365, %v2364
        %v2423 = vpack.c.b16 %v2367, %v2366
        %v2424 = vpack.c.b16 %v2369, %v2368
        %v2425 = vpack.c.b16 %v2371, %v2370
        %v2426 = vpack.c.b16 %v2373, %v2372
        %v2427 = vpack.c.b16 %v2375, %v2374
        %v2428 = vpack.c.b16 %v2377, %v2376
        %v2429 = vpack.c.b16 %v2379, %v2378
        %v2430 = vpack.c.b16 %v2381, %v2380
        %v2431 = vpack.c.b16 %v2383, %v2382
        %v2432 = vpack.c.b16 %v2385, %v2384
        %v2433 = vpack.c.b16 %v2387, %v2386
        %v2434 = vpack.c.b16 %v2389, %v2388
        %v2435 = vpack.c.b16 %v2391, %v2390
        %v2436 = vpack.c.b16 %v2393, %v2392
        %v2437 = vpack.c.b16 %v2395, %v2394
        %v2438 = vpack.c.b16 %v2397, %v2396
        %v2439 = vpack.c.b16 %v2399, %v2398
        %2480 = vmatpush.bf16.msra.mxu0 %v2407
        %2481 = vmatpush.bf16.msra.mxu0 %v2406
        %2482 = vmatpush.bf16.msra.mxu0 %v2405
        %2483 = vmatpush.bf16.msra.mxu0 %v2404
        %2484 = vmatpush.bf16.msra.mxu0 %v2403
        %2485 = vmatpush.bf16.msra.mxu0 %v2402
        %2486 = vmatpush.bf16.msra.mxu0 %v2401
        %2487 = vmatpush.bf16.msra.mxu0 %v2400
        %2488 = vmatmul.bf16.gmra.mxu0 %v2195
        %v2489 = vpop.f32.mrf.mxu0
        %v2490 = vadd.f32 0.0, %v2489
        %v2491 = vpop.f32.mrf.mxu0
        %v2492 = vadd.f32 0.0, %v2491
        %2493 = vmatmul.bf16.gmra.mxu0 %v2200
        %v2494 = vpop.f32.mrf.mxu0
        %v2495 = vadd.f32 0.0, %v2494
        %v2496 = vpop.f32.mrf.mxu0
        %v2497 = vadd.f32 0.0, %v2496
        %2498 = vmatmul.bf16.gmra.mxu0 %v2205
        %v2499 = vpop.f32.mrf.mxu0
        %v2500 = vadd.f32 0.0, %v2499
        %v2501 = vpop.f32.mrf.mxu0
        %v2502 = vadd.f32 0.0, %v2501
        %2503 = vmatmul.bf16.gmra.mxu0 %v2210
        %v2504 = vpop.f32.mrf.mxu0
        %v2505 = vadd.f32 0.0, %v2504
        %v2506 = vpop.f32.mrf.mxu0
        %v2507 = vadd.f32 0.0, %v2506
        %2508 = vmatmul.bf16.gmra.mxu0 %v2215
        %v2509 = vpop.f32.mrf.mxu0
        %v2510 = vadd.f32 0.0, %v2509
        %v2511 = vpop.f32.mrf.mxu0
        %v2512 = vadd.f32 0.0, %v2511
        %2513 = vmatmul.bf16.gmra.mxu0 %v2220
        %v2514 = vpop.f32.mrf.mxu0
        %v2515 = vadd.f32 0.0, %v2514
        %v2516 = vpop.f32.mrf.mxu0
        %v2517 = vadd.f32 0.0, %v2516
        %2518 = vmatmul.bf16.gmra.mxu0 %v2225
        %v2519 = vpop.f32.mrf.mxu0
        %v2520 = vadd.f32 0.0, %v2519
        %v2521 = vpop.f32.mrf.mxu0
        %v2522 = vadd.f32 0.0, %v2521
        %2523 = vmatmul.bf16.gmra.mxu0 %v2230
        %v2524 = vpop.f32.mrf.mxu0
        %v2525 = vadd.f32 0.0, %v2524
        %v2526 = vpop.f32.mrf.mxu0
        %v2527 = vadd.f32 0.0, %v2526
        %2528 = vmatmul.bf16.gmra.mxu0 %v2235
        %v2529 = vpop.f32.mrf.mxu0
        %v2530 = vadd.f32 0.0, %v2529
        %v2531 = vpop.f32.mrf.mxu0
        %v2532 = vadd.f32 0.0, %v2531
        %2533 = vdwg.mxu0
        %2534 = vmatpush.bf16.msra.mxu0 %v2415
        %2535 = vmatpush.bf16.msra.mxu0 %v2414
        %2536 = vmatpush.bf16.msra.mxu0 %v2413
        %2537 = vmatpush.bf16.msra.mxu0 %v2412
        %2538 = vmatpush.bf16.msra.mxu0 %v2411
        %2539 = vmatpush.bf16.msra.mxu0 %v2410
        %2540 = vmatpush.bf16.msra.mxu0 %v2409
        %2541 = vmatpush.bf16.msra.mxu0 %v2408
        %2542 = vmatmul.bf16.gmra.mxu0 %v2196
        %v2543 = vpop.f32.mrf.mxu0
        %v2544 = vadd.f32 %v2490, %v2543
        %v2545 = vpop.f32.mrf.mxu0
        %v2546 = vadd.f32 %v2492, %v2545
        %2547 = vmatmul.bf16.gmra.mxu0 %v2201
        %v2548 = vpop.f32.mrf.mxu0
        %v2549 = vadd.f32 %v2495, %v2548
        %v2550 = vpop.f32.mrf.mxu0
        %v2551 = vadd.f32 %v2497, %v2550
        %2552 = vmatmul.bf16.gmra.mxu0 %v2206
        %v2553 = vpop.f32.mrf.mxu0
        %v2554 = vadd.f32 %v2500, %v2553
        %v2555 = vpop.f32.mrf.mxu0
        %v2556 = vadd.f32 %v2502, %v2555
        %2557 = vmatmul.bf16.gmra.mxu0 %v2211
        %v2558 = vpop.f32.mrf.mxu0
        %v2559 = vadd.f32 %v2505, %v2558
        %v2560 = vpop.f32.mrf.mxu0
        %v2561 = vadd.f32 %v2507, %v2560
        %2562 = vmatmul.bf16.gmra.mxu0 %v2216
        %v2563 = vpop.f32.mrf.mxu0
        %v2564 = vadd.f32 %v2510, %v2563
        %v2565 = vpop.f32.mrf.mxu0
        %v2566 = vadd.f32 %v2512, %v2565
        %2567 = vmatmul.bf16.gmra.mxu0 %v2221
        %v2568 = vpop.f32.mrf.mxu0
        %v2569 = vadd.f32 %v2515, %v2568
        %v2570 = vpop.f32.mrf.mxu0
        %v2571 = vadd.f32 %v2517, %v2570
        %2572 = vmatmul.bf16.gmra.mxu0 %v2226
        %v2573 = vpop.f32.mrf.mxu0
        %v2574 = vadd.f32 %v2520, %v2573
        %v2575 = vpop.f32.mrf.mxu0
        %v2576 = vadd.f32 %v2522, %v2575
        %2577 = vmatmul.bf16.gmra.mxu0 %v2231
        %v2578 = vpop.f32.mrf.mxu0
        %v2579 = vadd.f32 %v2525, %v2578
        %v2580 = vpop.f32.mrf.mxu0
        %v2581 = vadd.f32 %v2527, %v2580
        %2582 = vmatmul.bf16.gmra.mxu0 %v2236
        %v2583 = vpop.f32.mrf.mxu0
        %v2584 = vadd.f32 %v2530, %v2583
        %v2585 = vpop.f32.mrf.mxu0
        %v2586 = vadd.f32 %v2532, %v2585
        %2587 = vdwg.mxu0
        %2588 = vmatpush.bf16.msra.mxu0 %v2423
        %2589 = vmatpush.bf16.msra.mxu0 %v2422
        %2590 = vmatpush.bf16.msra.mxu0 %v2421
        %2591 = vmatpush.bf16.msra.mxu0 %v2420
        %2592 = vmatpush.bf16.msra.mxu0 %v2419
        %2593 = vmatpush.bf16.msra.mxu0 %v2418
        %2594 = vmatpush.bf16.msra.mxu0 %v2417
        %2595 = vmatpush.bf16.msra.mxu0 %v2416
        %2596 = vmatmul.bf16.gmra.mxu0 %v2197
        %v2597 = vpop.f32.mrf.mxu0
        %v2598 = vadd.f32 %v2544, %v2597
        %v2599 = vpop.f32.mrf.mxu0
        %v2600 = vadd.f32 %v2546, %v2599
        %2601 = vmatmul.bf16.gmra.mxu0 %v2202
        %v2602 = vpop.f32.mrf.mxu0
        %v2603 = vadd.f32 %v2549, %v2602
        %v2604 = vpop.f32.mrf.mxu0
        %v2605 = vadd.f32 %v2551, %v2604
        %2606 = vmatmul.bf16.gmra.mxu0 %v2207
        %v2607 = vpop.f32.mrf.mxu0
        %v2608 = vadd.f32 %v2554, %v2607
        %v2609 = vpop.f32.mrf.mxu0
        %v2610 = vadd.f32 %v2556, %v2609
        %2611 = vmatmul.bf16.gmra.mxu0 %v2212
        %v2612 = vpop.f32.mrf.mxu0
        %v2613 = vadd.f32 %v2559, %v2612
        %v2614 = vpop.f32.mrf.mxu0
        %v2615 = vadd.f32 %v2561, %v2614
        %2616 = vmatmul.bf16.gmra.mxu0 %v2217
        %v2617 = vpop.f32.mrf.mxu0
        %v2618 = vadd.f32 %v2564, %v2617
        %v2619 = vpop.f32.mrf.mxu0
        %v2620 = vadd.f32 %v2566, %v2619
        %2621 = vmatmul.bf16.gmra.mxu0 %v2222
        %v2622 = vpop.f32.mrf.mxu0
        %v2623 = vadd.f32 %v2569, %v2622
        %v2624 = vpop.f32.mrf.mxu0
        %v2625 = vadd.f32 %v2571, %v2624
        %2626 = vmatmul.bf16.gmra.mxu0 %v2227
        %v2627 = vpop.f32.mrf.mxu0
        %v2628 = vadd.f32 %v2574, %v2627
        %v2629 = vpop.f32.mrf.mxu0
        %v2630 = vadd.f32 %v2576, %v2629
        %2631 = vmatmul.bf16.gmra.mxu0 %v2232
        %v2632 = vpop.f32.mrf.mxu0
        %v2633 = vadd.f32 %v2579, %v2632
        %v2634 = vpop.f32.mrf.mxu0
        %v2635 = vadd.f32 %v2581, %v2634
        %2636 = vmatmul.bf16.gmra.mxu0 %v2237
        %v2637 = vpop.f32.mrf.mxu0
        %v2638 = vadd.f32 %v2584, %v2637
        %v2639 = vpop.f32.mrf.mxu0
        %v2640 = vadd.f32 %v2586, %v2639
        %2641 = vdwg.mxu0
        %2642 = vmatpush.bf16.msra.mxu0 %v2431
        %2643 = vmatpush.bf16.msra.mxu0 %v2430
        %2644 = vmatpush.bf16.msra.mxu0 %v2429
        %2645 = vmatpush.bf16.msra.mxu0 %v2428
        %2646 = vmatpush.bf16.msra.mxu0 %v2427
        %2647 = vmatpush.bf16.msra.mxu0 %v2426
        %2648 = vmatpush.bf16.msra.mxu0 %v2425
        %2649 = vmatpush.bf16.msra.mxu0 %v2424
        %2650 = vmatmul.bf16.gmra.mxu0 %v2198
        %v2651 = vpop.f32.mrf.mxu0
        %v2652 = vadd.f32 %v2598, %v2651
        %v2653 = vpop.f32.mrf.mxu0
        %v2654 = vadd.f32 %v2600, %v2653
        %2655 = vmatmul.bf16.gmra.mxu0 %v2203
        %v2656 = vpop.f32.mrf.mxu0
        %v2657 = vadd.f32 %v2603, %v2656
        %v2658 = vpop.f32.mrf.mxu0
        %v2659 = vadd.f32 %v2605, %v2658
        %2660 = vmatmul.bf16.gmra.mxu0 %v2208
        %v2661 = vpop.f32.mrf.mxu0
        %v2662 = vadd.f32 %v2608, %v2661
        %v2663 = vpop.f32.mrf.mxu0
        %v2664 = vadd.f32 %v2610, %v2663
        %2665 = vmatmul.bf16.gmra.mxu0 %v2213
        %v2666 = vpop.f32.mrf.mxu0
        %v2667 = vadd.f32 %v2613, %v2666
        %v2668 = vpop.f32.mrf.mxu0
        %v2669 = vadd.f32 %v2615, %v2668
        %2670 = vmatmul.bf16.gmra.mxu0 %v2218
        %v2671 = vpop.f32.mrf.mxu0
        %v2672 = vadd.f32 %v2618, %v2671
        %v2673 = vpop.f32.mrf.mxu0
        %v2674 = vadd.f32 %v2620, %v2673
        %2675 = vmatmul.bf16.gmra.mxu0 %v2223
        %v2676 = vpop.f32.mrf.mxu0
        %v2677 = vadd.f32 %v2623, %v2676
        %v2678 = vpop.f32.mrf.mxu0
        %v2679 = vadd.f32 %v2625, %v2678
        %2680 = vmatmul.bf16.gmra.mxu0 %v2228
        %v2681 = vpop.f32.mrf.mxu0
        %v2682 = vadd.f32 %v2628, %v2681
        %v2683 = vpop.f32.mrf.mxu0
        %v2684 = vadd.f32 %v2630, %v2683
        %2685 = vmatmul.bf16.gmra.mxu0 %v2233
        %v2686 = vpop.f32.mrf.mxu0
        %v2687 = vadd.f32 %v2633, %v2686
        %v2688 = vpop.f32.mrf.mxu0
        %v2689 = vadd.f32 %v2635, %v2688
        %2690 = vmatmul.bf16.gmra.mxu0 %v2238
        %v2691 = vpop.f32.mrf.mxu0
        %v2692 = vadd.f32 %v2638, %v2691
        %v2693 = vpop.f32.mrf.mxu0
        %v2694 = vadd.f32 %v2640, %v2693
        %2695 = vdwg.mxu0
        %2696 = vmatpush.bf16.msra.mxu0 %v2439
        %2697 = vmatpush.bf16.msra.mxu0 %v2438
        %2698 = vmatpush.bf16.msra.mxu0 %v2437
        %2699 = vmatpush.bf16.msra.mxu0 %v2436
        %2700 = vmatpush.bf16.msra.mxu0 %v2435
        %2701 = vmatpush.bf16.msra.mxu0 %v2434
        %2702 = vmatpush.bf16.msra.mxu0 %v2433
        %2703 = vmatpush.bf16.msra.mxu0 %v2432
        %2704 = vmatmul.bf16.gmra.mxu0 %v2199
        %v2705 = vpop.f32.mrf.mxu0
        %v2706 = vadd.f32 %v2652, %v2705
        %v2707 = vpop.f32.mrf.mxu0
        %v2708 = vadd.f32 %v2654, %v2707
        %2709 = vmatmul.bf16.gmra.mxu0 %v2204
        %v2710 = vpop.f32.mrf.mxu0
        %v2711 = vadd.f32 %v2657, %v2710
        %v2712 = vpop.f32.mrf.mxu0
        %v2713 = vadd.f32 %v2659, %v2712
        %2714 = vmatmul.bf16.gmra.mxu0 %v2209
        %v2715 = vpop.f32.mrf.mxu0
        %v2716 = vadd.f32 %v2662, %v2715
        %v2717 = vpop.f32.mrf.mxu0
        %v2718 = vadd.f32 %v2664, %v2717
        %2719 = vmatmul.bf16.gmra.mxu0 %v2214
        %v2720 = vpop.f32.mrf.mxu0
        %v2721 = vadd.f32 %v2667, %v2720
        %v2722 = vpop.f32.mrf.mxu0
        %v2723 = vadd.f32 %v2669, %v2722
        %2724 = vmatmul.bf16.gmra.mxu0 %v2219
        %v2725 = vpop.f32.mrf.mxu0
        %v2726 = vadd.f32 %v2672, %v2725
        %v2727 = vpop.f32.mrf.mxu0
        %v2728 = vadd.f32 %v2674, %v2727
        %2729 = vmatmul.bf16.gmra.mxu0 %v2224
        %v2730 = vpop.f32.mrf.mxu0
        %v2731 = vadd.f32 %v2677, %v2730
        %v2732 = vpop.f32.mrf.mxu0
        %v2733 = vadd.f32 %v2679, %v2732
        %2734 = vmatmul.bf16.gmra.mxu0 %v2229
        %v2735 = vpop.f32.mrf.mxu0
        %v2736 = vadd.f32 %v2682, %v2735
        %v2737 = vpop.f32.mrf.mxu0
        %v2738 = vadd.f32 %v2684, %v2737
        %2739 = vmatmul.bf16.gmra.mxu0 %v2234
        %v2740 = vpop.f32.mrf.mxu0
        %v2741 = vadd.f32 %v2687, %v2740
        %v2742 = vpop.f32.mrf.mxu0
        %v2743 = vadd.f32 %v2689, %v2742
        %2744 = vmatmul.bf16.gmra.mxu0 %v2239
        %v2745 = vpop.f32.mrf.mxu0
        %v2746 = vadd.f32 %v2692, %v2745
        %v2747 = vpop.f32.mrf.mxu0
        %v2748 = vadd.f32 %v2694, %v2747
        %2749 = vdwg.mxu0
        %v2750 = vmax.f32 %v2706, 0.0
        %v2751 = vmax.f32 %v2708, 0.0
        %v2752 = vmax.f32 %v2711, 0.0
        %v2753 = vmax.f32 %v2713, 0.0
        %v2754 = vmax.f32 %v2716, 0.0
        %v2755 = vmax.f32 %v2718, 0.0
        %v2756 = vmax.f32 %v2721, 0.0
        %v2757 = vmax.f32 %v2723, 0.0
        %v2758 = vmax.f32 %v2726, 0.0
        %v2759 = vmax.f32 %v2728, 0.0
        %v2760 = vmax.f32 %v2731, 0.0
        %v2761 = vmax.f32 %v2733, 0.0
        %v2762 = vmax.f32 %v2736, 0.0
        %v2763 = vmax.f32 %v2738, 0.0
        %v2764 = vmax.f32 %v2741, 0.0
        %v2765 = vmax.f32 %v2743, 0.0
        %v2766 = vmax.f32 %v2746, 0.0
        %v2767 = vmax.f32 %v2748, 0.0
        %vm2768 = vcmask 523264
        %v2769 = vsel %vm2768, %v2750, 0.0
        %2770 = vadd.xlane.f32.xlu0 %v2769
        %v2771 = vpop.xlane.xlu0 %2770
        %v2772 = vsel %vm2768, %v2751, 0.0
        %2773 = vadd.xlane.f32.xlu0 %v2772
        %v2774 = vpop.xlane.xlu0 %2773
        %v2775 = vsel %vm2768, %v2752, 0.0
        %2776 = vadd.xlane.f32.xlu0 %v2775
        %v2777 = vpop.xlane.xlu0 %2776
        %v2778 = vsel %vm2768, %v2753, 0.0
        %2779 = vadd.xlane.f32.xlu0 %v2778
        %v2780 = vpop.xlane.xlu0 %2779
        %v2781 = vsel %vm2768, %v2754, 0.0
        %2782 = vadd.xlane.f32.xlu0 %v2781
        %v2783 = vpop.xlane.xlu0 %2782
        %v2784 = vsel %vm2768, %v2755, 0.0
        %2785 = vadd.xlane.f32.xlu0 %v2784
        %v2786 = vpop.xlane.xlu0 %2785
        %v2787 = vsel %vm2768, %v2756, 0.0
        %2788 = vadd.xlane.f32.xlu0 %v2787
        %v2789 = vpop.xlane.xlu0 %2788
        %v2790 = vsel %vm2768, %v2757, 0.0
        %2791 = vadd.xlane.f32.xlu0 %v2790
        %v2792 = vpop.xlane.xlu0 %2791
        %v2793 = vsel %vm2768, %v2758, 0.0
        %2794 = vadd.xlane.f32.xlu0 %v2793
        %v2795 = vpop.xlane.xlu0 %2794
        %v2796 = vsel %vm2768, %v2759, 0.0
        %2797 = vadd.xlane.f32.xlu0 %v2796
        %v2798 = vpop.xlane.xlu0 %2797
        %v2799 = vsel %vm2768, %v2760, 0.0
        %2800 = vadd.xlane.f32.xlu0 %v2799
        %v2801 = vpop.xlane.xlu0 %2800
        %v2802 = vsel %vm2768, %v2761, 0.0
        %2803 = vadd.xlane.f32.xlu0 %v2802
        %v2804 = vpop.xlane.xlu0 %2803
        %v2805 = vsel %vm2768, %v2762, 0.0
        %2806 = vadd.xlane.f32.xlu0 %v2805
        %v2807 = vpop.xlane.xlu0 %2806
        %v2808 = vsel %vm2768, %v2763, 0.0
        %2809 = vadd.xlane.f32.xlu0 %v2808
        %v2810 = vpop.xlane.xlu0 %2809
        %v2811 = vsel %vm2768, %v2764, 0.0
        %2812 = vadd.xlane.f32.xlu0 %v2811
        %v2813 = vpop.xlane.xlu0 %2812
        %v2814 = vsel %vm2768, %v2765, 0.0
        %2815 = vadd.xlane.f32.xlu0 %v2814
        %v2816 = vpop.xlane.xlu0 %2815
        %v2817 = vsel %vm2768, %v2766, 0.0
        %2818 = vadd.xlane.f32.xlu0 %v2817
        %v2819 = vpop.xlane.xlu0 %2818
        %v2820 = vsel %vm2768, %v2767, 0.0
        %2821 = vadd.xlane.f32.xlu0 %v2820
        %v2822 = vpop.xlane.xlu0 %2821
        %v2823 = vrcp.pop 64.0
        %v2824 = vmul.f32 64.0, %v2823
        %v2825 = vsub.f32 1.0, %v2824
        %v2826 = vmul.f32 %v2823, %v2825
        %v2827 = vadd.f32 %v2823, %v2826
        %vm2828 = vweird.f32 %v2823
        %v2829 = vsel %vm2828, %v2823, %v2827
        %v2830 = vmul.f32 %v2771, %v2829
        %v2831 = vmul.f32 %v2774, %v2829
        %v2832 = vmul.f32 %v2777, %v2829
        %v2833 = vmul.f32 %v2780, %v2829
        %v2834 = vmul.f32 %v2783, %v2829
        %v2835 = vmul.f32 %v2786, %v2829
        %v2836 = vmul.f32 %v2789, %v2829
        %v2837 = vmul.f32 %v2792, %v2829
        %v2838 = vmul.f32 %v2795, %v2829
        %v2839 = vmul.f32 %v2798, %v2829
        %v2840 = vmul.f32 %v2801, %v2829
        %v2841 = vmul.f32 %v2804, %v2829
        %v2842 = vmul.f32 %v2807, %v2829
        %v2843 = vmul.f32 %v2810, %v2829
        %v2844 = vmul.f32 %v2813, %v2829
        %v2845 = vmul.f32 %v2816, %v2829
        %v2846 = vmul.f32 %v2819, %v2829
        %v2847 = vmul.f32 %v2822, %v2829
        %v2848 = vsub.f32 %v2750, %v2830
        %v2849 = vsub.f32 %v2751, %v2831
        %v2850 = vsub.f32 %v2752, %v2832
        %v2851 = vsub.f32 %v2753, %v2833
        %v2852 = vsub.f32 %v2754, %v2834
        %v2853 = vsub.f32 %v2755, %v2835
        %v2854 = vsub.f32 %v2756, %v2836
        %v2855 = vsub.f32 %v2757, %v2837
        %v2856 = vsub.f32 %v2758, %v2838
        %v2857 = vsub.f32 %v2759, %v2839
        %v2858 = vsub.f32 %v2760, %v2840
        %v2859 = vsub.f32 %v2761, %v2841
        %v2860 = vsub.f32 %v2762, %v2842
        %v2861 = vsub.f32 %v2763, %v2843
        %v2862 = vsub.f32 %v2764, %v2844
        %v2863 = vsub.f32 %v2765, %v2845
        %v2864 = vsub.f32 %v2766, %v2846
        %v2865 = vsub.f32 %v2767, %v2847
        %v2866 = vmul.f32 %v2848, %v2848
        %v2867 = vmul.f32 %v2849, %v2849
        %v2868 = vmul.f32 %v2850, %v2850
        %v2869 = vmul.f32 %v2851, %v2851
        %v2870 = vmul.f32 %v2852, %v2852
        %v2871 = vmul.f32 %v2853, %v2853
        %v2872 = vmul.f32 %v2854, %v2854
        %v2873 = vmul.f32 %v2855, %v2855
        %v2874 = vmul.f32 %v2856, %v2856
        %v2875 = vmul.f32 %v2857, %v2857
        %v2876 = vmul.f32 %v2858, %v2858
        %v2877 = vmul.f32 %v2859, %v2859
        %v2878 = vmul.f32 %v2860, %v2860
        %v2879 = vmul.f32 %v2861, %v2861
        %v2880 = vmul.f32 %v2862, %v2862
        %v2881 = vmul.f32 %v2863, %v2863
        %v2882 = vmul.f32 %v2864, %v2864
        %v2883 = vmul.f32 %v2865, %v2865
        %v2884 = vsel %vm2768, %v2866, 0.0
        %2885 = vadd.xlane.f32.xlu0 %v2884
        %v2886 = vpop.xlane.xlu0 %2885
        %v2887 = vsel %vm2768, %v2867, 0.0
        %2888 = vadd.xlane.f32.xlu0 %v2887
        %v2889 = vpop.xlane.xlu0 %2888
        %v2890 = vsel %vm2768, %v2868, 0.0
        %2891 = vadd.xlane.f32.xlu0 %v2890
        %v2892 = vpop.xlane.xlu0 %2891
        %v2893 = vsel %vm2768, %v2869, 0.0
        %2894 = vadd.xlane.f32.xlu0 %v2893
        %v2895 = vpop.xlane.xlu0 %2894
        %v2896 = vsel %vm2768, %v2870, 0.0
        %2897 = vadd.xlane.f32.xlu0 %v2896
        %v2898 = vpop.xlane.xlu0 %2897
        %v2899 = vsel %vm2768, %v2871, 0.0
        %2900 = vadd.xlane.f32.xlu0 %v2899
        %v2901 = vpop.xlane.xlu0 %2900
        %v2902 = vsel %vm2768, %v2872, 0.0
        %2903 = vadd.xlane.f32.xlu0 %v2902
        %v2904 = vpop.xlane.xlu0 %2903
        %v2905 = vsel %vm2768, %v2873, 0.0
        %2906 = vadd.xlane.f32.xlu0 %v2905
        %v2907 = vpop.xlane.xlu0 %2906
        %v2908 = vsel %vm2768, %v2874, 0.0
        %2909 = vadd.xlane.f32.xlu0 %v2908
        %v2910 = vpop.xlane.xlu0 %2909
        %v2911 = vsel %vm2768, %v2875, 0.0
        %2912 = vadd.xlane.f32.xlu0 %v2911
        %v2913 = vpop.xlane.xlu0 %2912
        %v2914 = vsel %vm2768, %v2876, 0.0
        %2915 = vadd.xlane.f32.xlu0 %v2914
        %v2916 = vpop.xlane.xlu0 %2915
        %v2917 = vsel %vm2768, %v2877, 0.0
        %2918 = vadd.xlane.f32.xlu0 %v2917
        %v2919 = vpop.xlane.xlu0 %2918
        %v2920 = vsel %vm2768, %v2878, 0.0
        %2921 = vadd.xlane.f32.xlu0 %v2920
        %v2922 = vpop.xlane.xlu0 %2921
        %v2923 = vsel %vm2768, %v2879, 0.0
        %2924 = vadd.xlane.f32.xlu0 %v2923
        %v2925 = vpop.xlane.xlu0 %2924
        %v2926 = vsel %vm2768, %v2880, 0.0
        %2927 = vadd.xlane.f32.xlu0 %v2926
        %v2928 = vpop.xlane.xlu0 %2927
        %v2929 = vsel %vm2768, %v2881, 0.0
        %2930 = vadd.xlane.f32.xlu0 %v2929
        %v2931 = vpop.xlane.xlu0 %2930
        %v2932 = vsel %vm2768, %v2882, 0.0
        %2933 = vadd.xlane.f32.xlu0 %v2932
        %v2934 = vpop.xlane.xlu0 %2933
        %v2935 = vsel %vm2768, %v2883, 0.0
        %2936 = vadd.xlane.f32.xlu0 %v2935
        %v2937 = vpop.xlane.xlu0 %2936
        %v2938 = vmul.f32 %v2886, %v2829
        %v2939 = vmul.f32 %v2889, %v2829
        %v2940 = vmul.f32 %v2892, %v2829
        %v2941 = vmul.f32 %v2895, %v2829
        %v2942 = vmul.f32 %v2898, %v2829
        %v2943 = vmul.f32 %v2901, %v2829
        %v2944 = vmul.f32 %v2904, %v2829
        %v2945 = vmul.f32 %v2907, %v2829
        %v2946 = vmul.f32 %v2910, %v2829
        %v2947 = vmul.f32 %v2913, %v2829
        %v2948 = vmul.f32 %v2916, %v2829
        %v2949 = vmul.f32 %v2919, %v2829
        %v2950 = vmul.f32 %v2922, %v2829
        %v2951 = vmul.f32 %v2925, %v2829
        %v2952 = vmul.f32 %v2928, %v2829
        %v2953 = vmul.f32 %v2931, %v2829
        %v2954 = vmul.f32 %v2934, %v2829
        %v2955 = vmul.f32 %v2937, %v2829
        %v2956 = vadd.f32 %v2938, 1e-05
        %v2957 = vadd.f32 %v2939, 1e-05
        %v2958 = vadd.f32 %v2940, 1e-05
        %v2959 = vadd.f32 %v2941, 1e-05
        %v2960 = vadd.f32 %v2942, 1e-05
        %v2961 = vadd.f32 %v2943, 1e-05
        %v2962 = vadd.f32 %v2944, 1e-05
        %v2963 = vadd.f32 %v2945, 1e-05
        %v2964 = vadd.f32 %v2946, 1e-05
        %v2965 = vadd.f32 %v2947, 1e-05
        %v2966 = vadd.f32 %v2948, 1e-05
        %v2967 = vadd.f32 %v2949, 1e-05
        %v2968 = vadd.f32 %v2950, 1e-05
        %v2969 = vadd.f32 %v2951, 1e-05
        %v2970 = vadd.f32 %v2952, 1e-05
        %v2971 = vadd.f32 %v2953, 1e-05
        %v2972 = vadd.f32 %v2954, 1e-05
        %v2973 = vadd.f32 %v2955, 1e-05
        %v2974 = vrsqrt.pop %v2956
        %v2975 = vmul.f32 %v2974, %v2956
        %v2976 = vmul.f32 %v2975, %v2974
        %v2977 = vmul.f32 0.5, %v2976
        %v2978 = vsub.f32 1.5, %v2977
        %v2979 = vmul.f32 %v2974, %v2978
        %vm2980 = vweird.f32 %v2956
        %vm2981 = vweird.f32 %v2974
        %vm2982 = vmor %vm2980, %vm2981
        %v2983 = vsel %vm2982, %v2974, %v2979
        %v2984 = vrsqrt.pop %v2957
        %v2985 = vmul.f32 %v2984, %v2957
        %v2986 = vmul.f32 %v2985, %v2984
        %v2987 = vmul.f32 0.5, %v2986
        %v2988 = vsub.f32 1.5, %v2987
        %v2989 = vmul.f32 %v2984, %v2988
        %vm2990 = vweird.f32 %v2957
        %vm2991 = vweird.f32 %v2984
        %vm2992 = vmor %vm2990, %vm2991
        %v2993 = vsel %vm2992, %v2984, %v2989
        %v2994 = vrsqrt.pop %v2958
        %v2995 = vmul.f32 %v2994, %v2958
        %v2996 = vmul.f32 %v2995, %v2994
        %v2997 = vmul.f32 0.5, %v2996
        %v2998 = vsub.f32 1.5, %v2997
        %v2999 = vmul.f32 %v2994, %v2998
        %vm3000 = vweird.f32 %v2958
        %vm3001 = vweird.f32 %v2994
        %vm3002 = vmor %vm3000, %vm3001
        %v3003 = vsel %vm3002, %v2994, %v2999
        %v3004 = vrsqrt.pop %v2959
        %v3005 = vmul.f32 %v3004, %v2959
        %v3006 = vmul.f32 %v3005, %v3004
        %v3007 = vmul.f32 0.5, %v3006
        %v3008 = vsub.f32 1.5, %v3007
        %v3009 = vmul.f32 %v3004, %v3008
        %vm3010 = vweird.f32 %v2959
        %vm3011 = vweird.f32 %v3004
        %vm3012 = vmor %vm3010, %vm3011
        %v3013 = vsel %vm3012, %v3004, %v3009
        %v3014 = vrsqrt.pop %v2960
        %v3015 = vmul.f32 %v3014, %v2960
        %v3016 = vmul.f32 %v3015, %v3014
        %v3017 = vmul.f32 0.5, %v3016
        %v3018 = vsub.f32 1.5, %v3017
        %v3019 = vmul.f32 %v3014, %v3018
        %vm3020 = vweird.f32 %v2960
        %vm3021 = vweird.f32 %v3014
        %vm3022 = vmor %vm3020, %vm3021
        %v3023 = vsel %vm3022, %v3014, %v3019
        %v3024 = vrsqrt.pop %v2961
        %v3025 = vmul.f32 %v3024, %v2961
        %v3026 = vmul.f32 %v3025, %v3024
        %v3027 = vmul.f32 0.5, %v3026
        %v3028 = vsub.f32 1.5, %v3027
        %v3029 = vmul.f32 %v3024, %v3028
        %vm3030 = vweird.f32 %v2961
        %vm3031 = vweird.f32 %v3024
        %vm3032 = vmor %vm3030, %vm3031
        %v3033 = vsel %vm3032, %v3024, %v3029
        %v3034 = vrsqrt.pop %v2962
        %v3035 = vmul.f32 %v3034, %v2962
        %v3036 = vmul.f32 %v3035, %v3034
        %v3037 = vmul.f32 0.5, %v3036
        %v3038 = vsub.f32 1.5, %v3037
        %v3039 = vmul.f32 %v3034, %v3038
        %vm3040 = vweird.f32 %v2962
        %vm3041 = vweird.f32 %v3034
        %vm3042 = vmor %vm3040, %vm3041
        %v3043 = vsel %vm3042, %v3034, %v3039
        %v3044 = vrsqrt.pop %v2963
        %v3045 = vmul.f32 %v3044, %v2963
        %v3046 = vmul.f32 %v3045, %v3044
        %v3047 = vmul.f32 0.5, %v3046
        %v3048 = vsub.f32 1.5, %v3047
        %v3049 = vmul.f32 %v3044, %v3048
        %vm3050 = vweird.f32 %v2963
        %vm3051 = vweird.f32 %v3044
        %vm3052 = vmor %vm3050, %vm3051
        %v3053 = vsel %vm3052, %v3044, %v3049
        %v3054 = vrsqrt.pop %v2964
        %v3055 = vmul.f32 %v3054, %v2964
        %v3056 = vmul.f32 %v3055, %v3054
        %v3057 = vmul.f32 0.5, %v3056
        %v3058 = vsub.f32 1.5, %v3057
        %v3059 = vmul.f32 %v3054, %v3058
        %vm3060 = vweird.f32 %v2964
        %vm3061 = vweird.f32 %v3054
        %vm3062 = vmor %vm3060, %vm3061
        %v3063 = vsel %vm3062, %v3054, %v3059
        %v3064 = vrsqrt.pop %v2965
        %v3065 = vmul.f32 %v3064, %v2965
        %v3066 = vmul.f32 %v3065, %v3064
        %v3067 = vmul.f32 0.5, %v3066
        %v3068 = vsub.f32 1.5, %v3067
        %v3069 = vmul.f32 %v3064, %v3068
        %vm3070 = vweird.f32 %v2965
        %vm3071 = vweird.f32 %v3064
        %vm3072 = vmor %vm3070, %vm3071
        %v3073 = vsel %vm3072, %v3064, %v3069
        %v3074 = vrsqrt.pop %v2966
        %v3075 = vmul.f32 %v3074, %v2966
        %v3076 = vmul.f32 %v3075, %v3074
        %v3077 = vmul.f32 0.5, %v3076
        %v3078 = vsub.f32 1.5, %v3077
        %v3079 = vmul.f32 %v3074, %v3078
        %vm3080 = vweird.f32 %v2966
        %vm3081 = vweird.f32 %v3074
        %vm3082 = vmor %vm3080, %vm3081
        %v3083 = vsel %vm3082, %v3074, %v3079
        %v3084 = vrsqrt.pop %v2967
        %v3085 = vmul.f32 %v3084, %v2967
        %v3086 = vmul.f32 %v3085, %v3084
        %v3087 = vmul.f32 0.5, %v3086
        %v3088 = vsub.f32 1.5, %v3087
        %v3089 = vmul.f32 %v3084, %v3088
        %vm3090 = vweird.f32 %v2967
        %vm3091 = vweird.f32 %v3084
        %vm3092 = vmor %vm3090, %vm3091
        %v3093 = vsel %vm3092, %v3084, %v3089
        %v3094 = vrsqrt.pop %v2968
        %v3095 = vmul.f32 %v3094, %v2968
        %v3096 = vmul.f32 %v3095, %v3094
        %v3097 = vmul.f32 0.5, %v3096
        %v3098 = vsub.f32 1.5, %v3097
        %v3099 = vmul.f32 %v3094, %v3098
        %vm3100 = vweird.f32 %v2968
        %vm3101 = vweird.f32 %v3094
        %vm3102 = vmor %vm3100, %vm3101
        %v3103 = vsel %vm3102, %v3094, %v3099
        %v3104 = vrsqrt.pop %v2969
        %v3105 = vmul.f32 %v3104, %v2969
        %v3106 = vmul.f32 %v3105, %v3104
        %v3107 = vmul.f32 0.5, %v3106
        %v3108 = vsub.f32 1.5, %v3107
        %v3109 = vmul.f32 %v3104, %v3108
        %vm3110 = vweird.f32 %v2969
        %vm3111 = vweird.f32 %v3104
        %vm3112 = vmor %vm3110, %vm3111
        %v3113 = vsel %vm3112, %v3104, %v3109
        %v3114 = vrsqrt.pop %v2970
        %v3115 = vmul.f32 %v3114, %v2970
        %v3116 = vmul.f32 %v3115, %v3114
        %v3117 = vmul.f32 0.5, %v3116
        %v3118 = vsub.f32 1.5, %v3117
        %v3119 = vmul.f32 %v3114, %v3118
        %vm3120 = vweird.f32 %v2970
        %vm3121 = vweird.f32 %v3114
        %vm3122 = vmor %vm3120, %vm3121
        %v3123 = vsel %vm3122, %v3114, %v3119
        %v3124 = vrsqrt.pop %v2971
        %v3125 = vmul.f32 %v3124, %v2971
        %v3126 = vmul.f32 %v3125, %v3124
        %v3127 = vmul.f32 0.5, %v3126
        %v3128 = vsub.f32 1.5, %v3127
        %v3129 = vmul.f32 %v3124, %v3128
        %vm3130 = vweird.f32 %v2971
        %vm3131 = vweird.f32 %v3124
        %vm3132 = vmor %vm3130, %vm3131
        %v3133 = vsel %vm3132, %v3124, %v3129
        %v3134 = vrsqrt.pop %v2972
        %v3135 = vmul.f32 %v3134, %v2972
        %v3136 = vmul.f32 %v3135, %v3134
        %v3137 = vmul.f32 0.5, %v3136
        %v3138 = vsub.f32 1.5, %v3137
        %v3139 = vmul.f32 %v3134, %v3138
        %vm3140 = vweird.f32 %v2972
        %vm3141 = vweird.f32 %v3134
        %vm3142 = vmor %vm3140, %vm3141
        %v3143 = vsel %vm3142, %v3134, %v3139
        %v3144 = vrsqrt.pop %v2973
        %v3145 = vmul.f32 %v3144, %v2973
        %v3146 = vmul.f32 %v3145, %v3144
        %v3147 = vmul.f32 0.5, %v3146
        %v3148 = vsub.f32 1.5, %v3147
        %v3149 = vmul.f32 %v3144, %v3148
        %vm3150 = vweird.f32 %v2973
        %vm3151 = vweird.f32 %v3144
        %vm3152 = vmor %vm3150, %vm3151
        %v3153 = vsel %vm3152, %v3144, %v3149
        %v3154 = vmul.f32 %v2848, %v2983
        %v3155 = vmul.f32 %v2849, %v2993
        %v3156 = vmul.f32 %v2850, %v3003
        %v3157 = vmul.f32 %v2851, %v3013
        %v3158 = vmul.f32 %v2852, %v3023
        %v3159 = vmul.f32 %v2853, %v3033
        %v3160 = vmul.f32 %v2854, %v3043
        %v3161 = vmul.f32 %v2855, %v3053
        %v3162 = vmul.f32 %v2856, %v3063
        %v3163 = vmul.f32 %v2857, %v3073
        %v3164 = vmul.f32 %v2858, %v3083
        %v3165 = vmul.f32 %v2859, %v3093
        %v3166 = vmul.f32 %v2860, %v3103
        %v3167 = vmul.f32 %v2861, %v3113
        %v3168 = vmul.f32 %v2862, %v3123
        %v3169 = vmul.f32 %v2863, %v3133
        %v3170 = vmul.f32 %v2864, %v3143
        %v3171 = vmul.f32 %v2865, %v3153
        %v3172 = vperm.slane %v201, 0
        %v3173 = vmul.f32 %v3154, %v3172
        %v3174 = vmul.f32 %v3155, %v3172
        %v3175 = vmul.f32 %v3156, %v3172
        %v3176 = vmul.f32 %v3157, %v3172
        %v3177 = vmul.f32 %v3158, %v3172
        %v3178 = vmul.f32 %v3159, %v3172
        %v3179 = vmul.f32 %v3160, %v3172
        %v3180 = vmul.f32 %v3161, %v3172
        %v3181 = vmul.f32 %v3162, %v3172
        %v3182 = vmul.f32 %v3163, %v3172
        %v3183 = vmul.f32 %v3164, %v3172
        %v3184 = vmul.f32 %v3165, %v3172
        %v3185 = vmul.f32 %v3166, %v3172
        %v3186 = vmul.f32 %v3167, %v3172
        %v3187 = vmul.f32 %v3168, %v3172
        %v3188 = vmul.f32 %v3169, %v3172
        %v3189 = vmul.f32 %v3170, %v3172
        %v3190 = vmul.f32 %v3171, %v3172
        %v3191 = vperm.slane %v201, 1
        %v3192 = vadd.f32 %v3173, %v3191
        %v3193 = vadd.f32 %v3174, %v3191
        %v3194 = vadd.f32 %v3175, %v3191
        %v3195 = vadd.f32 %v3176, %v3191
        %v3196 = vadd.f32 %v3177, %v3191
        %v3197 = vadd.f32 %v3178, %v3191
        %v3198 = vadd.f32 %v3179, %v3191
        %v3199 = vadd.f32 %v3180, %v3191
        %v3200 = vadd.f32 %v3181, %v3191
        %v3201 = vadd.f32 %v3182, %v3191
        %v3202 = vadd.f32 %v3183, %v3191
        %v3203 = vadd.f32 %v3184, %v3191
        %v3204 = vadd.f32 %v3185, %v3191
        %v3205 = vadd.f32 %v3186, %v3191
        %v3206 = vadd.f32 %v3187, %v3191
        %v3207 = vadd.f32 %v3188, %v3191
        %v3208 = vadd.f32 %v3189, %v3191
        %v3209 = vadd.f32 %v3190, %v3191
        %v3210 = vpack.c.bf16 %v3193, %v3192
        %v3211 = vpack.c.bf16 %v3195, %v3194
        %v3212 = vpack.c.bf16 %v3197, %v3196
        %v3213 = vpack.c.bf16 %v3199, %v3198
        %v3214 = vpack.c.bf16 %v3201, %v3200
        %v3215 = vpack.c.bf16 %v3203, %v3202
        %v3216 = vpack.c.bf16 %v3205, %v3204
        %v3217 = vpack.c.bf16 %v3207, %v3206
        %v3218 = vpack.c.bf16 %v3209, %v3208
        %v3235 = vunpack.c.l.b16 %v347
        %v3236 = vunpack.c.h.b16 %v347
        %v3237 = vunpack.c.l.b16 %v348
        %v3238 = vunpack.c.l.b16 %v349
        %v3239 = vunpack.c.h.b16 %v349
        %v3240 = vunpack.c.l.b16 %v350
        %v3241 = vunpack.c.l.b16 %v351
        %v3242 = vunpack.c.h.b16 %v351
        %v3243 = vunpack.c.l.b16 %v352
        %v3244 = vunpack.c.l.b16 %v353
        %v3245 = vunpack.c.h.b16 %v353
        %v3246 = vunpack.c.l.b16 %v354
        %v3247 = vunpack.c.l.b16 %v355
        %v3248 = vunpack.c.h.b16 %v355
        %v3249 = vunpack.c.l.b16 %v356
        %v3250 = vunpack.c.l.b16 %v357
        %v3251 = vunpack.c.h.b16 %v357
        %v3252 = vunpack.c.l.b16 %v358
        %v3253 = vunpack.c.l.b16 %v359
        %v3254 = vunpack.c.h.b16 %v359
        %v3255 = vunpack.c.l.b16 %v360
        %v3256 = vunpack.c.l.b16 %v361
        %v3257 = vunpack.c.h.b16 %v361
        %v3258 = vunpack.c.l.b16 %v362
        %v3259 = vpack.c.b16 %v3238, %v3235
        %v3260 = vpack.c.b16 %v3239, %v3236
        %v3261 = vpack.c.b16 %v3240, %v3237
        %v3262 = vpack.c.b16 %v3244, %v3241
        %v3263 = vpack.c.b16 %v3245, %v3242
        %v3264 = vpack.c.b16 %v3246, %v3243
        %v3265 = vpack.c.b16 %v3250, %v3247
        %v3266 = vpack.c.b16 %v3251, %v3248
        %v3267 = vpack.c.b16 %v3252, %v3249
        %v3268 = vpack.c.b16 %v3256, %v3253
        %v3269 = vpack.c.b16 %v3257, %v3254
        %v3270 = vpack.c.b16 %v3258, %v3255
        %v3284 = vsel %vm2768, %v3210, 0
        %v3287 = vsel %vm2768, %v3211, 0
        %v3290 = vsel %vm2768, %v3212, 0
        %v3293 = vsel %vm2768, %v3213, 0
        %v3296 = vsel %vm2768, %v3214, 0
        %v3299 = vsel %vm2768, %v3215, 0
        %v3302 = vsel %vm2768, %v3216, 0
        %v3305 = vsel %vm2768, %v3217, 0
        %v3308 = vsel %vm2768, %v3218, 0
        %3310 = vmatpush.bf16.msra.mxu0 0
        %3311 = vmatpush.bf16.msra.mxu0 0
        %3312 = vmatpush.bf16.msra.mxu0 0
        %3313 = vmatpush.bf16.msra.mxu0 0
        %3314 = vmatpush.bf16.msra.mxu0 %v3268
        %3315 = vmatpush.bf16.msra.mxu0 %v3265
        %3316 = vmatpush.bf16.msra.mxu0 %v3262
        %3317 = vmatpush.bf16.msra.mxu0 %v3259
        %3318 = vmatmul.bf16.gmra.mxu0 %v3284
        %v3319 = vpop.f32.mrf.mxu0
        %v3320 = vadd.f32 0.0, %v3319
        %v3321 = vpop.f32.mrf.mxu0
        %v3322 = vadd.f32 0.0, %v3321
        %3323 = vmatmul.bf16.gmra.mxu0 %v3287
        %v3324 = vpop.f32.mrf.mxu0
        %v3325 = vadd.f32 0.0, %v3324
        %v3326 = vpop.f32.mrf.mxu0
        %v3327 = vadd.f32 0.0, %v3326
        %3328 = vmatmul.bf16.gmra.mxu0 %v3290
        %v3329 = vpop.f32.mrf.mxu0
        %v3330 = vadd.f32 0.0, %v3329
        %v3331 = vpop.f32.mrf.mxu0
        %v3332 = vadd.f32 0.0, %v3331
        %3333 = vmatmul.bf16.gmra.mxu0 %v3293
        %v3334 = vpop.f32.mrf.mxu0
        %v3335 = vadd.f32 0.0, %v3334
        %v3336 = vpop.f32.mrf.mxu0
        %v3337 = vadd.f32 0.0, %v3336
        %3338 = vmatmul.bf16.gmra.mxu0 %v3296
        %v3339 = vpop.f32.mrf.mxu0
        %v3340 = vadd.f32 0.0, %v3339
        %v3341 = vpop.f32.mrf.mxu0
        %v3342 = vadd.f32 0.0, %v3341
        %3343 = vmatmul.bf16.gmra.mxu0 %v3299
        %v3344 = vpop.f32.mrf.mxu0
        %v3345 = vadd.f32 0.0, %v3344
        %v3346 = vpop.f32.mrf.mxu0
        %v3347 = vadd.f32 0.0, %v3346
        %3348 = vmatmul.bf16.gmra.mxu0 %v3302
        %v3349 = vpop.f32.mrf.mxu0
        %v3350 = vadd.f32 0.0, %v3349
        %v3351 = vpop.f32.mrf.mxu0
        %v3352 = vadd.f32 0.0, %v3351
        %3353 = vmatmul.bf16.gmra.mxu0 %v3305
        %v3354 = vpop.f32.mrf.mxu0
        %v3355 = vadd.f32 0.0, %v3354
        %v3356 = vpop.f32.mrf.mxu0
        %v3357 = vadd.f32 0.0, %v3356
        %3358 = vmatmul.bf16.gmra.mxu0 %v3308
        %v3359 = vpop.f32.mrf.mxu0
        %v3360 = vadd.f32 0.0, %v3359
        %v3361 = vpop.f32.mrf.mxu0
        %v3362 = vadd.f32 0.0, %v3361
        %3363 = vdwg.mxu0
        %3364 = vmatpush.bf16.msra.mxu0 0
        %3365 = vmatpush.bf16.msra.mxu0 0
        %3366 = vmatpush.bf16.msra.mxu0 0
        %3367 = vmatpush.bf16.msra.mxu0 0
        %3368 = vmatpush.bf16.msra.mxu0 %v3269
        %3369 = vmatpush.bf16.msra.mxu0 %v3266
        %3370 = vmatpush.bf16.msra.mxu0 %v3263
        %3371 = vmatpush.bf16.msra.mxu0 %v3260
        %3372 = vmatmul.bf16.gmra.mxu0 %v3284
        %v3373 = vpop.f32.mrf.mxu0
        %v3374 = vadd.f32 0.0, %v3373
        %v3375 = vpop.f32.mrf.mxu0
        %v3376 = vadd.f32 0.0, %v3375
        %3377 = vmatmul.bf16.gmra.mxu0 %v3287
        %v3378 = vpop.f32.mrf.mxu0
        %v3379 = vadd.f32 0.0, %v3378
        %v3380 = vpop.f32.mrf.mxu0
        %v3381 = vadd.f32 0.0, %v3380
        %3382 = vmatmul.bf16.gmra.mxu0 %v3290
        %v3383 = vpop.f32.mrf.mxu0
        %v3384 = vadd.f32 0.0, %v3383
        %v3385 = vpop.f32.mrf.mxu0
        %v3386 = vadd.f32 0.0, %v3385
        %3387 = vmatmul.bf16.gmra.mxu0 %v3293
        %v3388 = vpop.f32.mrf.mxu0
        %v3389 = vadd.f32 0.0, %v3388
        %v3390 = vpop.f32.mrf.mxu0
        %v3391 = vadd.f32 0.0, %v3390
        %3392 = vmatmul.bf16.gmra.mxu0 %v3296
        %v3393 = vpop.f32.mrf.mxu0
        %v3394 = vadd.f32 0.0, %v3393
        %v3395 = vpop.f32.mrf.mxu0
        %v3396 = vadd.f32 0.0, %v3395
        %3397 = vmatmul.bf16.gmra.mxu0 %v3299
        %v3398 = vpop.f32.mrf.mxu0
        %v3399 = vadd.f32 0.0, %v3398
        %v3400 = vpop.f32.mrf.mxu0
        %v3401 = vadd.f32 0.0, %v3400
        %3402 = vmatmul.bf16.gmra.mxu0 %v3302
        %v3403 = vpop.f32.mrf.mxu0
        %v3404 = vadd.f32 0.0, %v3403
        %v3405 = vpop.f32.mrf.mxu0
        %v3406 = vadd.f32 0.0, %v3405
        %3407 = vmatmul.bf16.gmra.mxu0 %v3305
        %v3408 = vpop.f32.mrf.mxu0
        %v3409 = vadd.f32 0.0, %v3408
        %v3410 = vpop.f32.mrf.mxu0
        %v3411 = vadd.f32 0.0, %v3410
        %3412 = vmatmul.bf16.gmra.mxu0 %v3308
        %v3413 = vpop.f32.mrf.mxu0
        %v3414 = vadd.f32 0.0, %v3413
        %v3415 = vpop.f32.mrf.mxu0
        %v3416 = vadd.f32 0.0, %v3415
        %3417 = vdwg.mxu0
        %3418 = vmatpush.bf16.msra.mxu0 0
        %3419 = vmatpush.bf16.msra.mxu0 0
        %3420 = vmatpush.bf16.msra.mxu0 0
        %3421 = vmatpush.bf16.msra.mxu0 0
        %3422 = vmatpush.bf16.msra.mxu0 %v3270
        %3423 = vmatpush.bf16.msra.mxu0 %v3267
        %3424 = vmatpush.bf16.msra.mxu0 %v3264
        %3425 = vmatpush.bf16.msra.mxu0 %v3261
        %3426 = vmatmul.bf16.gmra.mxu0 %v3284
        %v3427 = vpop.f32.mrf.mxu0
        %v3428 = vadd.f32 0.0, %v3427
        %v3429 = vpop.f32.mrf.mxu0
        %v3430 = vadd.f32 0.0, %v3429
        %3431 = vmatmul.bf16.gmra.mxu0 %v3287
        %v3432 = vpop.f32.mrf.mxu0
        %v3433 = vadd.f32 0.0, %v3432
        %v3434 = vpop.f32.mrf.mxu0
        %v3435 = vadd.f32 0.0, %v3434
        %3436 = vmatmul.bf16.gmra.mxu0 %v3290
        %v3437 = vpop.f32.mrf.mxu0
        %v3438 = vadd.f32 0.0, %v3437
        %v3439 = vpop.f32.mrf.mxu0
        %v3440 = vadd.f32 0.0, %v3439
        %3441 = vmatmul.bf16.gmra.mxu0 %v3293
        %v3442 = vpop.f32.mrf.mxu0
        %v3443 = vadd.f32 0.0, %v3442
        %v3444 = vpop.f32.mrf.mxu0
        %v3445 = vadd.f32 0.0, %v3444
        %3446 = vmatmul.bf16.gmra.mxu0 %v3296
        %v3447 = vpop.f32.mrf.mxu0
        %v3448 = vadd.f32 0.0, %v3447
        %v3449 = vpop.f32.mrf.mxu0
        %v3450 = vadd.f32 0.0, %v3449
        %3451 = vmatmul.bf16.gmra.mxu0 %v3299
        %v3452 = vpop.f32.mrf.mxu0
        %v3453 = vadd.f32 0.0, %v3452
        %v3454 = vpop.f32.mrf.mxu0
        %v3455 = vadd.f32 0.0, %v3454
        %3456 = vmatmul.bf16.gmra.mxu0 %v3302
        %v3457 = vpop.f32.mrf.mxu0
        %v3458 = vadd.f32 0.0, %v3457
        %v3459 = vpop.f32.mrf.mxu0
        %v3460 = vadd.f32 0.0, %v3459
        %3461 = vmatmul.bf16.gmra.mxu0 %v3305
        %v3462 = vpop.f32.mrf.mxu0
        %v3463 = vadd.f32 0.0, %v3462
        %v3464 = vpop.f32.mrf.mxu0
        %v3465 = vadd.f32 0.0, %v3464
        %3466 = vmatmul.bf16.gmra.mxu0 %v3308
        %v3467 = vpop.f32.mrf.mxu0
        %v3468 = vadd.f32 0.0, %v3467
        %v3469 = vpop.f32.mrf.mxu0
        %v3470 = vadd.f32 0.0, %v3469
        %3471 = vdwg.mxu0
        %v3472 = vperm.slane %v201, 4
        %v3473 = vadd.f32 %v3320, %v3472
        %v3474 = vadd.f32 %v3322, %v3472
        %v3475 = vadd.f32 %v3325, %v3472
        %v3476 = vadd.f32 %v3327, %v3472
        %v3477 = vadd.f32 %v3330, %v3472
        %v3478 = vadd.f32 %v3332, %v3472
        %v3479 = vadd.f32 %v3335, %v3472
        %v3480 = vadd.f32 %v3337, %v3472
        %v3481 = vadd.f32 %v3340, %v3472
        %v3482 = vadd.f32 %v3342, %v3472
        %v3483 = vadd.f32 %v3345, %v3472
        %v3484 = vadd.f32 %v3347, %v3472
        %v3485 = vadd.f32 %v3350, %v3472
        %v3486 = vadd.f32 %v3352, %v3472
        %v3487 = vadd.f32 %v3355, %v3472
        %v3488 = vadd.f32 %v3357, %v3472
        %v3489 = vadd.f32 %v3360, %v3472
        %v3490 = vadd.f32 %v3362, %v3472
        %v3491 = vpack.c.bf16 %v3474, %v3473
        %v3492 = vpack.c.bf16 %v3476, %v3475
        %v3493 = vpack.c.bf16 %v3478, %v3477
        %v3494 = vpack.c.bf16 %v3480, %v3479
        %v3495 = vpack.c.bf16 %v3482, %v3481
        %v3496 = vpack.c.bf16 %v3484, %v3483
        %v3497 = vpack.c.bf16 %v3486, %v3485
        %v3498 = vpack.c.bf16 %v3488, %v3487
        %v3499 = vpack.c.bf16 %v3490, %v3489
        %v3500 = vperm.slane %v201, 5
        %v3501 = vadd.f32 %v3374, %v3500
        %v3502 = vadd.f32 %v3376, %v3500
        %v3503 = vadd.f32 %v3379, %v3500
        %v3504 = vadd.f32 %v3381, %v3500
        %v3505 = vadd.f32 %v3384, %v3500
        %v3506 = vadd.f32 %v3386, %v3500
        %v3507 = vadd.f32 %v3389, %v3500
        %v3508 = vadd.f32 %v3391, %v3500
        %v3509 = vadd.f32 %v3394, %v3500
        %v3510 = vadd.f32 %v3396, %v3500
        %v3511 = vadd.f32 %v3399, %v3500
        %v3512 = vadd.f32 %v3401, %v3500
        %v3513 = vadd.f32 %v3404, %v3500
        %v3514 = vadd.f32 %v3406, %v3500
        %v3515 = vadd.f32 %v3409, %v3500
        %v3516 = vadd.f32 %v3411, %v3500
        %v3517 = vadd.f32 %v3414, %v3500
        %v3518 = vadd.f32 %v3416, %v3500
        %v3519 = vpack.c.bf16 %v3502, %v3501
        %v3520 = vpack.c.bf16 %v3504, %v3503
        %v3521 = vpack.c.bf16 %v3506, %v3505
        %v3522 = vpack.c.bf16 %v3508, %v3507
        %v3523 = vpack.c.bf16 %v3510, %v3509
        %v3524 = vpack.c.bf16 %v3512, %v3511
        %v3525 = vpack.c.bf16 %v3514, %v3513
        %v3526 = vpack.c.bf16 %v3516, %v3515
        %v3527 = vpack.c.bf16 %v3518, %v3517
        %v3528 = vperm.slane %v201, 6
        %v3529 = vadd.f32 %v3428, %v3528
        %v3530 = vadd.f32 %v3430, %v3528
        %v3531 = vadd.f32 %v3433, %v3528
        %v3532 = vadd.f32 %v3435, %v3528
        %v3533 = vadd.f32 %v3438, %v3528
        %v3534 = vadd.f32 %v3440, %v3528
        %v3535 = vadd.f32 %v3443, %v3528
        %v3536 = vadd.f32 %v3445, %v3528
        %v3537 = vadd.f32 %v3448, %v3528
        %v3538 = vadd.f32 %v3450, %v3528
        %v3539 = vadd.f32 %v3453, %v3528
        %v3540 = vadd.f32 %v3455, %v3528
        %v3541 = vadd.f32 %v3458, %v3528
        %v3542 = vadd.f32 %v3460, %v3528
        %v3543 = vadd.f32 %v3463, %v3528
        %v3544 = vadd.f32 %v3465, %v3528
        %v3545 = vadd.f32 %v3468, %v3528
        %v3546 = vadd.f32 %v3470, %v3528
        %v3547 = vpack.c.bf16 %v3530, %v3529
        %v3548 = vpack.c.bf16 %v3532, %v3531
        %v3549 = vpack.c.bf16 %v3534, %v3533
        %v3550 = vpack.c.bf16 %v3536, %v3535
        %v3551 = vpack.c.bf16 %v3538, %v3537
        %v3552 = vpack.c.bf16 %v3540, %v3539
        %v3553 = vpack.c.bf16 %v3542, %v3541
        %v3554 = vpack.c.bf16 %v3544, %v3543
        %v3555 = vpack.c.bf16 %v3546, %v3545
        %3556 = vmatpush.bf16.xpose.msra.mxu0 %v3526
        %3557 = vmatpush.bf16.xpose.msra.mxu0 %v3525
        %3558 = vmatpush.bf16.xpose.msra.mxu0 %v3524
        %3559 = vmatpush.bf16.xpose.msra.mxu0 %v3523
        %3560 = vmatpush.bf16.xpose.msra.mxu0 %v3522
        %3561 = vmatpush.bf16.xpose.msra.mxu0 %v3521
        %3562 = vmatpush.bf16.xpose.msra.mxu0 %v3520
        %3563 = vmatpush.bf16.xpose.msra.mxu0 %v3519
        %3564 = vmatmul.bf16.gmra.mxu0 %v3491
        %v3565 = vpop.f32.mrf.mxu0
        %v3566 = vadd.f32 0.0, %v3565
        %v3567 = vpop.f32.mrf.mxu0
        %v3568 = vadd.f32 0.0, %v3567
        %3569 = vmatmul.bf16.gmra.mxu0 %v3492
        %v3570 = vpop.f32.mrf.mxu0
        %v3571 = vadd.f32 0.0, %v3570
        %v3572 = vpop.f32.mrf.mxu0
        %v3573 = vadd.f32 0.0, %v3572
        %3574 = vmatmul.bf16.gmra.mxu0 %v3493
        %v3575 = vpop.f32.mrf.mxu0
        %v3576 = vadd.f32 0.0, %v3575
        %v3577 = vpop.f32.mrf.mxu0
        %v3578 = vadd.f32 0.0, %v3577
        %3579 = vmatmul.bf16.gmra.mxu0 %v3494
        %v3580 = vpop.f32.mrf.mxu0
        %v3581 = vadd.f32 0.0, %v3580
        %v3582 = vpop.f32.mrf.mxu0
        %v3583 = vadd.f32 0.0, %v3582
        %3584 = vmatmul.bf16.gmra.mxu0 %v3495
        %v3585 = vpop.f32.mrf.mxu0
        %v3586 = vadd.f32 0.0, %v3585
        %v3587 = vpop.f32.mrf.mxu0
        %v3588 = vadd.f32 0.0, %v3587
        %3589 = vmatmul.bf16.gmra.mxu0 %v3496
        %v3590 = vpop.f32.mrf.mxu0
        %v3591 = vadd.f32 0.0, %v3590
        %v3592 = vpop.f32.mrf.mxu0
        %v3593 = vadd.f32 0.0, %v3592
        %3594 = vmatmul.bf16.gmra.mxu0 %v3497
        %v3595 = vpop.f32.mrf.mxu0
        %v3596 = vadd.f32 0.0, %v3595
        %v3597 = vpop.f32.mrf.mxu0
        %v3598 = vadd.f32 0.0, %v3597
        %3599 = vmatmul.bf16.gmra.mxu0 %v3498
        %v3600 = vpop.f32.mrf.mxu0
        %v3601 = vadd.f32 0.0, %v3600
        %v3602 = vpop.f32.mrf.mxu0
        %v3603 = vadd.f32 0.0, %v3602
        %3604 = vmatmul.bf16.gmra.mxu0 %v3499
        %v3605 = vpop.f32.mrf.mxu0
        %v3606 = vadd.f32 0.0, %v3605
        %v3607 = vpop.f32.mrf.mxu0
        %v3608 = vadd.f32 0.0, %v3607
        %3609 = vdwg.mxu0
        %3610 = vmatpush.bf16.xpose.msra.mxu0 0
        %3611 = vmatpush.bf16.xpose.msra.mxu0 0
        %3612 = vmatpush.bf16.xpose.msra.mxu0 0
        %3613 = vmatpush.bf16.xpose.msra.mxu0 0
        %3614 = vmatpush.bf16.xpose.msra.mxu0 0
        %3615 = vmatpush.bf16.xpose.msra.mxu0 0
        %3616 = vmatpush.bf16.xpose.msra.mxu0 0
        %3617 = vmatpush.bf16.xpose.msra.mxu0 %v3527
        %3618 = vmatmul.bf16.gmra.mxu0 %v3491
        %v3619 = vpop.f32.mrf.mxu0
        %v3620 = vadd.f32 0.0, %v3619
        %v3621 = vpop.f32.mrf.mxu0
        %v3622 = vadd.f32 0.0, %v3621
        %3623 = vmatmul.bf16.gmra.mxu0 %v3492
        %v3624 = vpop.f32.mrf.mxu0
        %v3625 = vadd.f32 0.0, %v3624
        %v3626 = vpop.f32.mrf.mxu0
        %v3627 = vadd.f32 0.0, %v3626
        %3628 = vmatmul.bf16.gmra.mxu0 %v3493
        %v3629 = vpop.f32.mrf.mxu0
        %v3630 = vadd.f32 0.0, %v3629
        %v3631 = vpop.f32.mrf.mxu0
        %v3632 = vadd.f32 0.0, %v3631
        %3633 = vmatmul.bf16.gmra.mxu0 %v3494
        %v3634 = vpop.f32.mrf.mxu0
        %v3635 = vadd.f32 0.0, %v3634
        %v3636 = vpop.f32.mrf.mxu0
        %v3637 = vadd.f32 0.0, %v3636
        %3638 = vmatmul.bf16.gmra.mxu0 %v3495
        %v3639 = vpop.f32.mrf.mxu0
        %v3640 = vadd.f32 0.0, %v3639
        %v3641 = vpop.f32.mrf.mxu0
        %v3642 = vadd.f32 0.0, %v3641
        %3643 = vmatmul.bf16.gmra.mxu0 %v3496
        %v3644 = vpop.f32.mrf.mxu0
        %v3645 = vadd.f32 0.0, %v3644
        %v3646 = vpop.f32.mrf.mxu0
        %v3647 = vadd.f32 0.0, %v3646
        %3648 = vmatmul.bf16.gmra.mxu0 %v3497
        %v3649 = vpop.f32.mrf.mxu0
        %v3650 = vadd.f32 0.0, %v3649
        %v3651 = vpop.f32.mrf.mxu0
        %v3652 = vadd.f32 0.0, %v3651
        %3653 = vmatmul.bf16.gmra.mxu0 %v3498
        %v3654 = vpop.f32.mrf.mxu0
        %v3655 = vadd.f32 0.0, %v3654
        %v3656 = vpop.f32.mrf.mxu0
        %v3657 = vadd.f32 0.0, %v3656
        %3658 = vmatmul.bf16.gmra.mxu0 %v3499
        %v3659 = vpop.f32.mrf.mxu0
        %v3660 = vadd.f32 0.0, %v3659
        %v3661 = vpop.f32.mrf.mxu0
        %v3662 = vadd.f32 0.0, %v3661
        %3663 = vdwg.mxu0
        %vm3664 = vcmask 130048
        %v3665 = vsel %vm3664, %v3620, -inf
        %v3666 = vmax.f32 %v3566, %v3665
        %3667 = vmax.xlane.f32.xlu0 %v3666
        %v3668 = vpop.xlane.xlu0 %3667
        %v3669 = vsel %vm3664, %v3622, -inf
        %v3670 = vmax.f32 %v3568, %v3669
        %3671 = vmax.xlane.f32.xlu0 %v3670
        %v3672 = vpop.xlane.xlu0 %3671
        %v3673 = vsel %vm3664, %v3625, -inf
        %v3674 = vmax.f32 %v3571, %v3673
        %3675 = vmax.xlane.f32.xlu0 %v3674
        %v3676 = vpop.xlane.xlu0 %3675
        %v3677 = vsel %vm3664, %v3627, -inf
        %v3678 = vmax.f32 %v3573, %v3677
        %3679 = vmax.xlane.f32.xlu0 %v3678
        %v3680 = vpop.xlane.xlu0 %3679
        %v3681 = vsel %vm3664, %v3630, -inf
        %v3682 = vmax.f32 %v3576, %v3681
        %3683 = vmax.xlane.f32.xlu0 %v3682
        %v3684 = vpop.xlane.xlu0 %3683
        %v3685 = vsel %vm3664, %v3632, -inf
        %v3686 = vmax.f32 %v3578, %v3685
        %3687 = vmax.xlane.f32.xlu0 %v3686
        %v3688 = vpop.xlane.xlu0 %3687
        %v3689 = vsel %vm3664, %v3635, -inf
        %v3690 = vmax.f32 %v3581, %v3689
        %3691 = vmax.xlane.f32.xlu0 %v3690
        %v3692 = vpop.xlane.xlu0 %3691
        %v3693 = vsel %vm3664, %v3637, -inf
        %v3694 = vmax.f32 %v3583, %v3693
        %3695 = vmax.xlane.f32.xlu0 %v3694
        %v3696 = vpop.xlane.xlu0 %3695
        %v3697 = vsel %vm3664, %v3640, -inf
        %v3698 = vmax.f32 %v3586, %v3697
        %3699 = vmax.xlane.f32.xlu0 %v3698
        %v3700 = vpop.xlane.xlu0 %3699
        %v3701 = vsel %vm3664, %v3642, -inf
        %v3702 = vmax.f32 %v3588, %v3701
        %3703 = vmax.xlane.f32.xlu0 %v3702
        %v3704 = vpop.xlane.xlu0 %3703
        %v3705 = vsel %vm3664, %v3645, -inf
        %v3706 = vmax.f32 %v3591, %v3705
        %3707 = vmax.xlane.f32.xlu0 %v3706
        %v3708 = vpop.xlane.xlu0 %3707
        %v3709 = vsel %vm3664, %v3647, -inf
        %v3710 = vmax.f32 %v3593, %v3709
        %3711 = vmax.xlane.f32.xlu0 %v3710
        %v3712 = vpop.xlane.xlu0 %3711
        %v3713 = vsel %vm3664, %v3650, -inf
        %v3714 = vmax.f32 %v3596, %v3713
        %3715 = vmax.xlane.f32.xlu0 %v3714
        %v3716 = vpop.xlane.xlu0 %3715
        %v3717 = vsel %vm3664, %v3652, -inf
        %v3718 = vmax.f32 %v3598, %v3717
        %3719 = vmax.xlane.f32.xlu0 %v3718
        %v3720 = vpop.xlane.xlu0 %3719
        %v3721 = vsel %vm3664, %v3655, -inf
        %v3722 = vmax.f32 %v3601, %v3721
        %3723 = vmax.xlane.f32.xlu0 %v3722
        %v3724 = vpop.xlane.xlu0 %3723
        %v3725 = vsel %vm3664, %v3657, -inf
        %v3726 = vmax.f32 %v3603, %v3725
        %3727 = vmax.xlane.f32.xlu0 %v3726
        %v3728 = vpop.xlane.xlu0 %3727
        %v3729 = vsel %vm3664, %v3660, -inf
        %v3730 = vmax.f32 %v3606, %v3729
        %3731 = vmax.xlane.f32.xlu0 %v3730
        %v3732 = vpop.xlane.xlu0 %3731
        %v3733 = vsel %vm3664, %v3662, -inf
        %v3734 = vmax.f32 %v3608, %v3733
        %3735 = vmax.xlane.f32.xlu0 %v3734
        %v3736 = vpop.xlane.xlu0 %3735
        %v3737 = vsub.f32 %v3566, %v3668
        %v3738 = vsub.f32 %v3620, %v3668
        %v3739 = vsub.f32 %v3568, %v3672
        %v3740 = vsub.f32 %v3622, %v3672
        %v3741 = vsub.f32 %v3571, %v3676
        %v3742 = vsub.f32 %v3625, %v3676
        %v3743 = vsub.f32 %v3573, %v3680
        %v3744 = vsub.f32 %v3627, %v3680
        %v3745 = vsub.f32 %v3576, %v3684
        %v3746 = vsub.f32 %v3630, %v3684
        %v3747 = vsub.f32 %v3578, %v3688
        %v3748 = vsub.f32 %v3632, %v3688
        %v3749 = vsub.f32 %v3581, %v3692
        %v3750 = vsub.f32 %v3635, %v3692
        %v3751 = vsub.f32 %v3583, %v3696
        %v3752 = vsub.f32 %v3637, %v3696
        %v3753 = vsub.f32 %v3586, %v3700
        %v3754 = vsub.f32 %v3640, %v3700
        %v3755 = vsub.f32 %v3588, %v3704
        %v3756 = vsub.f32 %v3642, %v3704
        %v3757 = vsub.f32 %v3591, %v3708
        %v3758 = vsub.f32 %v3645, %v3708
        %v3759 = vsub.f32 %v3593, %v3712
        %v3760 = vsub.f32 %v3647, %v3712
        %v3761 = vsub.f32 %v3596, %v3716
        %v3762 = vsub.f32 %v3650, %v3716
        %v3763 = vsub.f32 %v3598, %v3720
        %v3764 = vsub.f32 %v3652, %v3720
        %v3765 = vsub.f32 %v3601, %v3724
        %v3766 = vsub.f32 %v3655, %v3724
        %v3767 = vsub.f32 %v3603, %v3728
        %v3768 = vsub.f32 %v3657, %v3728
        %v3769 = vsub.f32 %v3606, %v3732
        %v3770 = vsub.f32 %v3660, %v3732
        %v3771 = vsub.f32 %v3608, %v3736
        %v3772 = vsub.f32 %v3662, %v3736
        %v3773 = vmul.f32 %v3737, 1.442695
        %v3774 = vpow.pop %v3773
        %v3775 = vmul.f32 %v3738, 1.442695
        %v3776 = vpow.pop %v3775
        %v3777 = vmul.f32 %v3739, 1.442695
        %v3778 = vpow.pop %v3777
        %v3779 = vmul.f32 %v3740, 1.442695
        %v3780 = vpow.pop %v3779
        %v3781 = vmul.f32 %v3741, 1.442695
        %v3782 = vpow.pop %v3781
        %v3783 = vmul.f32 %v3742, 1.442695
        %v3784 = vpow.pop %v3783
        %v3785 = vmul.f32 %v3743, 1.442695
        %v3786 = vpow.pop %v3785
        %v3787 = vmul.f32 %v3744, 1.442695
        %v3788 = vpow.pop %v3787
        %v3789 = vmul.f32 %v3745, 1.442695
        %v3790 = vpow.pop %v3789
        %v3791 = vmul.f32 %v3746, 1.442695
        %v3792 = vpow.pop %v3791
        %v3793 = vmul.f32 %v3747, 1.442695
        %v3794 = vpow.pop %v3793
        %v3795 = vmul.f32 %v3748, 1.442695
        %v3796 = vpow.pop %v3795
        %v3797 = vmul.f32 %v3749, 1.442695
        %v3798 = vpow.pop %v3797
        %v3799 = vmul.f32 %v3750, 1.442695
        %v3800 = vpow.pop %v3799
        %v3801 = vmul.f32 %v3751, 1.442695
        %v3802 = vpow.pop %v3801
        %v3803 = vmul.f32 %v3752, 1.442695
        %v3804 = vpow.pop %v3803
        %v3805 = vmul.f32 %v3753, 1.442695
        %v3806 = vpow.pop %v3805
        %v3807 = vmul.f32 %v3754, 1.442695
        %v3808 = vpow.pop %v3807
        %v3809 = vmul.f32 %v3755, 1.442695
        %v3810 = vpow.pop %v3809
        %v3811 = vmul.f32 %v3756, 1.442695
        %v3812 = vpow.pop %v3811
        %v3813 = vmul.f32 %v3757, 1.442695
        %v3814 = vpow.pop %v3813
        %v3815 = vmul.f32 %v3758, 1.442695
        %v3816 = vpow.pop %v3815
        %v3817 = vmul.f32 %v3759, 1.442695
        %v3818 = vpow.pop %v3817
        %v3819 = vmul.f32 %v3760, 1.442695
        %v3820 = vpow.pop %v3819
        %v3821 = vmul.f32 %v3761, 1.442695
        %v3822 = vpow.pop %v3821
        %v3823 = vmul.f32 %v3762, 1.442695
        %v3824 = vpow.pop %v3823
        %v3825 = vmul.f32 %v3763, 1.442695
        %v3826 = vpow.pop %v3825
        %v3827 = vmul.f32 %v3764, 1.442695
        %v3828 = vpow.pop %v3827
        %v3829 = vmul.f32 %v3765, 1.442695
        %v3830 = vpow.pop %v3829
        %v3831 = vmul.f32 %v3766, 1.442695
        %v3832 = vpow.pop %v3831
        %v3833 = vmul.f32 %v3767, 1.442695
        %v3834 = vpow.pop %v3833
        %v3835 = vmul.f32 %v3768, 1.442695
        %v3836 = vpow.pop %v3835
        %v3837 = vmul.f32 %v3769, 1.442695
        %v3838 = vpow.pop %v3837
        %v3839 = vmul.f32 %v3770, 1.442695
        %v3840 = vpow.pop %v3839
        %v3841 = vmul.f32 %v3771, 1.442695
        %v3842 = vpow.pop %v3841
        %v3843 = vmul.f32 %v3772, 1.442695
        %v3844 = vpow.pop %v3843
        %v3845 = vsel %vm3664, %v3776, 0.0
        %v3846 = vadd.f32 %v3774, %v3845
        %3847 = vadd.xlane.f32.xlu0 %v3846
        %v3848 = vpop.xlane.xlu0 %3847
        %v3849 = vsel %vm3664, %v3780, 0.0
        %v3850 = vadd.f32 %v3778, %v3849
        %3851 = vadd.xlane.f32.xlu0 %v3850
        %v3852 = vpop.xlane.xlu0 %3851
        %v3853 = vsel %vm3664, %v3784, 0.0
        %v3854 = vadd.f32 %v3782, %v3853
        %3855 = vadd.xlane.f32.xlu0 %v3854
        %v3856 = vpop.xlane.xlu0 %3855
        %v3857 = vsel %vm3664, %v3788, 0.0
        %v3858 = vadd.f32 %v3786, %v3857
        %3859 = vadd.xlane.f32.xlu0 %v3858
        %v3860 = vpop.xlane.xlu0 %3859
        %v3861 = vsel %vm3664, %v3792, 0.0
        %v3862 = vadd.f32 %v3790, %v3861
        %3863 = vadd.xlane.f32.xlu0 %v3862
        %v3864 = vpop.xlane.xlu0 %3863
        %v3865 = vsel %vm3664, %v3796, 0.0
        %v3866 = vadd.f32 %v3794, %v3865
        %3867 = vadd.xlane.f32.xlu0 %v3866
        %v3868 = vpop.xlane.xlu0 %3867
        %v3869 = vsel %vm3664, %v3800, 0.0
        %v3870 = vadd.f32 %v3798, %v3869
        %3871 = vadd.xlane.f32.xlu0 %v3870
        %v3872 = vpop.xlane.xlu0 %3871
        %v3873 = vsel %vm3664, %v3804, 0.0
        %v3874 = vadd.f32 %v3802, %v3873
        %3875 = vadd.xlane.f32.xlu0 %v3874
        %v3876 = vpop.xlane.xlu0 %3875
        %v3877 = vsel %vm3664, %v3808, 0.0
        %v3878 = vadd.f32 %v3806, %v3877
        %3879 = vadd.xlane.f32.xlu0 %v3878
        %v3880 = vpop.xlane.xlu0 %3879
        %v3881 = vsel %vm3664, %v3812, 0.0
        %v3882 = vadd.f32 %v3810, %v3881
        %3883 = vadd.xlane.f32.xlu0 %v3882
        %v3884 = vpop.xlane.xlu0 %3883
        %v3885 = vsel %vm3664, %v3816, 0.0
        %v3886 = vadd.f32 %v3814, %v3885
        %3887 = vadd.xlane.f32.xlu0 %v3886
        %v3888 = vpop.xlane.xlu0 %3887
        %v3889 = vsel %vm3664, %v3820, 0.0
        %v3890 = vadd.f32 %v3818, %v3889
        %3891 = vadd.xlane.f32.xlu0 %v3890
        %v3892 = vpop.xlane.xlu0 %3891
        %v3893 = vsel %vm3664, %v3824, 0.0
        %v3894 = vadd.f32 %v3822, %v3893
        %3895 = vadd.xlane.f32.xlu0 %v3894
        %v3896 = vpop.xlane.xlu0 %3895
        %v3897 = vsel %vm3664, %v3828, 0.0
        %v3898 = vadd.f32 %v3826, %v3897
        %3899 = vadd.xlane.f32.xlu0 %v3898
        %v3900 = vpop.xlane.xlu0 %3899
        %v3901 = vsel %vm3664, %v3832, 0.0
        %v3902 = vadd.f32 %v3830, %v3901
        %3903 = vadd.xlane.f32.xlu0 %v3902
        %v3904 = vpop.xlane.xlu0 %3903
        %v3905 = vsel %vm3664, %v3836, 0.0
        %v3906 = vadd.f32 %v3834, %v3905
        %3907 = vadd.xlane.f32.xlu0 %v3906
        %v3908 = vpop.xlane.xlu0 %3907
        %v3909 = vsel %vm3664, %v3840, 0.0
        %v3910 = vadd.f32 %v3838, %v3909
        %3911 = vadd.xlane.f32.xlu0 %v3910
        %v3912 = vpop.xlane.xlu0 %3911
        %v3913 = vsel %vm3664, %v3844, 0.0
        %v3914 = vadd.f32 %v3842, %v3913
        %3915 = vadd.xlane.f32.xlu0 %v3914
        %v3916 = vpop.xlane.xlu0 %3915
        %v3917 = vrcp.pop %v3848
        %v3918 = vrcp.pop %v3852
        %v3919 = vrcp.pop %v3856
        %v3920 = vrcp.pop %v3860
        %v3921 = vrcp.pop %v3864
        %v3922 = vrcp.pop %v3868
        %v3923 = vrcp.pop %v3872
        %v3924 = vrcp.pop %v3876
        %v3925 = vrcp.pop %v3880
        %v3926 = vrcp.pop %v3884
        %v3927 = vrcp.pop %v3888
        %v3928 = vrcp.pop %v3892
        %v3929 = vrcp.pop %v3896
        %v3930 = vrcp.pop %v3900
        %v3931 = vrcp.pop %v3904
        %v3932 = vrcp.pop %v3908
        %v3933 = vrcp.pop %v3912
        %v3934 = vrcp.pop %v3916
        %v3935 = vpack.c.bf16 %v3778, %v3774
        %v3936 = vpack.c.bf16 %v3780, %v3776
        %v3937 = vpack.c.bf16 %v3786, %v3782
        %v3938 = vpack.c.bf16 %v3788, %v3784
        %v3939 = vpack.c.bf16 %v3794, %v3790
        %v3940 = vpack.c.bf16 %v3796, %v3792
        %v3941 = vpack.c.bf16 %v3802, %v3798
        %v3942 = vpack.c.bf16 %v3804, %v3800
        %v3943 = vpack.c.bf16 %v3810, %v3806
        %v3944 = vpack.c.bf16 %v3812, %v3808
        %v3945 = vpack.c.bf16 %v3818, %v3814
        %v3946 = vpack.c.bf16 %v3820, %v3816
        %v3947 = vpack.c.bf16 %v3826, %v3822
        %v3948 = vpack.c.bf16 %v3828, %v3824
        %v3949 = vpack.c.bf16 %v3834, %v3830
        %v3950 = vpack.c.bf16 %v3836, %v3832
        %v3951 = vpack.c.bf16 %v3842, %v3838
        %v3952 = vpack.c.bf16 %v3844, %v3840
        %v3954 = vsel %vm3664, %v3936, 0
        %v3957 = vsel %vm3664, %v3938, 0
        %v3960 = vsel %vm3664, %v3940, 0
        %v3963 = vsel %vm3664, %v3942, 0
        %v3966 = vsel %vm3664, %v3944, 0
        %v3969 = vsel %vm3664, %v3946, 0
        %v3972 = vsel %vm3664, %v3948, 0
        %v3975 = vsel %vm3664, %v3950, 0
        %v3978 = vsel %vm3664, %v3952, 0
        %3980 = vmatpush.bf16.msra.mxu0 %v3554
        %3981 = vmatpush.bf16.msra.mxu0 %v3553
        %3982 = vmatpush.bf16.msra.mxu0 %v3552
        %3983 = vmatpush.bf16.msra.mxu0 %v3551
        %3984 = vmatpush.bf16.msra.mxu0 %v3550
        %3985 = vmatpush.bf16.msra.mxu0 %v3549
        %3986 = vmatpush.bf16.msra.mxu0 %v3548
        %3987 = vmatpush.bf16.msra.mxu0 %v3547
        %3988 = vmatmul.bf16.gmra.mxu0 %v3935
        %v3989 = vpop.f32.mrf.mxu0
        %v3990 = vadd.f32 0.0, %v3989
        %v3991 = vpop.f32.mrf.mxu0
        %v3992 = vadd.f32 0.0, %v3991
        %3993 = vmatmul.bf16.gmra.mxu0 %v3937
        %v3994 = vpop.f32.mrf.mxu0
        %v3995 = vadd.f32 0.0, %v3994
        %v3996 = vpop.f32.mrf.mxu0
        %v3997 = vadd.f32 0.0, %v3996
        %3998 = vmatmul.bf16.gmra.mxu0 %v3939
        %v3999 = vpop.f32.mrf.mxu0
        %v4000 = vadd.f32 0.0, %v3999
        %v4001 = vpop.f32.mrf.mxu0
        %v4002 = vadd.f32 0.0, %v4001
        %4003 = vmatmul.bf16.gmra.mxu0 %v3941
        %v4004 = vpop.f32.mrf.mxu0
        %v4005 = vadd.f32 0.0, %v4004
        %v4006 = vpop.f32.mrf.mxu0
        %v4007 = vadd.f32 0.0, %v4006
        %4008 = vmatmul.bf16.gmra.mxu0 %v3943
        %v4009 = vpop.f32.mrf.mxu0
        %v4010 = vadd.f32 0.0, %v4009
        %v4011 = vpop.f32.mrf.mxu0
        %v4012 = vadd.f32 0.0, %v4011
        %4013 = vmatmul.bf16.gmra.mxu0 %v3945
        %v4014 = vpop.f32.mrf.mxu0
        %v4015 = vadd.f32 0.0, %v4014
        %v4016 = vpop.f32.mrf.mxu0
        %v4017 = vadd.f32 0.0, %v4016
        %4018 = vmatmul.bf16.gmra.mxu0 %v3947
        %v4019 = vpop.f32.mrf.mxu0
        %v4020 = vadd.f32 0.0, %v4019
        %v4021 = vpop.f32.mrf.mxu0
        %v4022 = vadd.f32 0.0, %v4021
        %4023 = vmatmul.bf16.gmra.mxu0 %v3949
        %v4024 = vpop.f32.mrf.mxu0
        %v4025 = vadd.f32 0.0, %v4024
        %v4026 = vpop.f32.mrf.mxu0
        %v4027 = vadd.f32 0.0, %v4026
        %4028 = vmatmul.bf16.gmra.mxu0 %v3951
        %v4029 = vpop.f32.mrf.mxu0
        %v4030 = vadd.f32 0.0, %v4029
        %v4031 = vpop.f32.mrf.mxu0
        %v4032 = vadd.f32 0.0, %v4031
        %4033 = vdwg.mxu0
        %4034 = vmatpush.bf16.msra.mxu0 0
        %4035 = vmatpush.bf16.msra.mxu0 0
        %4036 = vmatpush.bf16.msra.mxu0 0
        %4037 = vmatpush.bf16.msra.mxu0 0
        %4038 = vmatpush.bf16.msra.mxu0 0
        %4039 = vmatpush.bf16.msra.mxu0 0
        %4040 = vmatpush.bf16.msra.mxu0 0
        %4041 = vmatpush.bf16.msra.mxu0 %v3555
        %4042 = vmatmul.bf16.gmra.mxu0 %v3954
        %v4043 = vpop.f32.mrf.mxu0
        %v4044 = vadd.f32 %v3990, %v4043
        %v4045 = vpop.f32.mrf.mxu0
        %v4046 = vadd.f32 %v3992, %v4045
        %4047 = vmatmul.bf16.gmra.mxu0 %v3957
        %v4048 = vpop.f32.mrf.mxu0
        %v4049 = vadd.f32 %v3995, %v4048
        %v4050 = vpop.f32.mrf.mxu0
        %v4051 = vadd.f32 %v3997, %v4050
        %4052 = vmatmul.bf16.gmra.mxu0 %v3960
        %v4053 = vpop.f32.mrf.mxu0
        %v4054 = vadd.f32 %v4000, %v4053
        %v4055 = vpop.f32.mrf.mxu0
        %v4056 = vadd.f32 %v4002, %v4055
        %4057 = vmatmul.bf16.gmra.mxu0 %v3963
        %v4058 = vpop.f32.mrf.mxu0
        %v4059 = vadd.f32 %v4005, %v4058
        %v4060 = vpop.f32.mrf.mxu0
        %v4061 = vadd.f32 %v4007, %v4060
        %4062 = vmatmul.bf16.gmra.mxu0 %v3966
        %v4063 = vpop.f32.mrf.mxu0
        %v4064 = vadd.f32 %v4010, %v4063
        %v4065 = vpop.f32.mrf.mxu0
        %v4066 = vadd.f32 %v4012, %v4065
        %4067 = vmatmul.bf16.gmra.mxu0 %v3969
        %v4068 = vpop.f32.mrf.mxu0
        %v4069 = vadd.f32 %v4015, %v4068
        %v4070 = vpop.f32.mrf.mxu0
        %v4071 = vadd.f32 %v4017, %v4070
        %4072 = vmatmul.bf16.gmra.mxu0 %v3972
        %v4073 = vpop.f32.mrf.mxu0
        %v4074 = vadd.f32 %v4020, %v4073
        %v4075 = vpop.f32.mrf.mxu0
        %v4076 = vadd.f32 %v4022, %v4075
        %4077 = vmatmul.bf16.gmra.mxu0 %v3975
        %v4078 = vpop.f32.mrf.mxu0
        %v4079 = vadd.f32 %v4025, %v4078
        %v4080 = vpop.f32.mrf.mxu0
        %v4081 = vadd.f32 %v4027, %v4080
        %4082 = vmatmul.bf16.gmra.mxu0 %v3978
        %v4083 = vpop.f32.mrf.mxu0
        %v4084 = vadd.f32 %v4030, %v4083
        %v4085 = vpop.f32.mrf.mxu0
        %v4086 = vadd.f32 %v4032, %v4085
        %4087 = vdwg.mxu0
        %v4088 = vmul.f32 %v4044, %v3917
        %v4089 = vmul.f32 %v4046, %v3918
        %v4090 = vmul.f32 %v4049, %v3919
        %v4091 = vmul.f32 %v4051, %v3920
        %v4092 = vmul.f32 %v4054, %v3921
        %v4093 = vmul.f32 %v4056, %v3922
        %v4094 = vmul.f32 %v4059, %v3923
        %v4095 = vmul.f32 %v4061, %v3924
        %v4096 = vmul.f32 %v4064, %v3925
        %v4097 = vmul.f32 %v4066, %v3926
        %v4098 = vmul.f32 %v4069, %v3927
        %v4099 = vmul.f32 %v4071, %v3928
        %v4100 = vmul.f32 %v4074, %v3929
        %v4101 = vmul.f32 %v4076, %v3930
        %v4102 = vmul.f32 %v4079, %v3931
        %v4103 = vmul.f32 %v4081, %v3932
        %v4104 = vmul.f32 %v4084, %v3933
        %v4105 = vmul.f32 %v4086, %v3934
        %v4106 = vpack.c.bf16 %v4089, %v4088
        %v4107 = vpack.c.bf16 %v4091, %v4090
        %v4108 = vpack.c.bf16 %v4093, %v4092
        %v4109 = vpack.c.bf16 %v4095, %v4094
        %v4110 = vpack.c.bf16 %v4097, %v4096
        %v4111 = vpack.c.bf16 %v4099, %v4098
        %v4112 = vpack.c.bf16 %v4101, %v4100
        %v4113 = vpack.c.bf16 %v4103, %v4102
        %v4114 = vpack.c.bf16 %v4105, %v4104
        %v4131 = vunpack.c.l.b16 %v459
        %v4132 = vunpack.c.l.b16 %v460
        %v4133 = vunpack.c.l.b16 %v461
        %v4134 = vunpack.c.l.b16 %v462
        %v4135 = vunpack.c.l.b16 %v463
        %v4136 = vunpack.c.l.b16 %v464
        %v4137 = vunpack.c.l.b16 %v465
        %v4138 = vunpack.c.l.b16 %v466
        %v4139 = vunpack.c.l.b16 %v467
        %v4140 = vunpack.c.l.b16 %v468
        %v4141 = vunpack.c.l.b16 %v469
        %v4142 = vunpack.c.l.b16 %v470
        %v4143 = vunpack.c.l.b16 %v471
        %v4144 = vunpack.c.l.b16 %v472
        %v4145 = vunpack.c.l.b16 %v473
        %v4146 = vunpack.c.l.b16 %v474
        %v4147 = vpack.c.b16 %v4132, %v4131
        %v4148 = vpack.c.b16 %v4134, %v4133
        %v4149 = vpack.c.b16 %v4136, %v4135
        %v4150 = vpack.c.b16 %v4138, %v4137
        %v4151 = vpack.c.b16 %v4140, %v4139
        %v4152 = vpack.c.b16 %v4142, %v4141
        %v4153 = vpack.c.b16 %v4144, %v4143
        %v4154 = vpack.c.b16 %v4146, %v4145
        %4163 = vmatpush.bf16.msra.mxu0 %v4154
        %4164 = vmatpush.bf16.msra.mxu0 %v4153
        %4165 = vmatpush.bf16.msra.mxu0 %v4152
        %4166 = vmatpush.bf16.msra.mxu0 %v4151
        %4167 = vmatpush.bf16.msra.mxu0 %v4150
        %4168 = vmatpush.bf16.msra.mxu0 %v4149
        %4169 = vmatpush.bf16.msra.mxu0 %v4148
        %4170 = vmatpush.bf16.msra.mxu0 %v4147
        %4171 = vmatmul.bf16.gmra.mxu0 %v4106
        %v4172 = vpop.f32.mrf.mxu0
        %v4173 = vadd.f32 0.0, %v4172
        %v4174 = vpop.f32.mrf.mxu0
        %v4175 = vadd.f32 0.0, %v4174
        %4176 = vmatmul.bf16.gmra.mxu0 %v4107
        %v4177 = vpop.f32.mrf.mxu0
        %v4178 = vadd.f32 0.0, %v4177
        %v4179 = vpop.f32.mrf.mxu0
        %v4180 = vadd.f32 0.0, %v4179
        %4181 = vmatmul.bf16.gmra.mxu0 %v4108
        %v4182 = vpop.f32.mrf.mxu0
        %v4183 = vadd.f32 0.0, %v4182
        %v4184 = vpop.f32.mrf.mxu0
        %v4185 = vadd.f32 0.0, %v4184
        %4186 = vmatmul.bf16.gmra.mxu0 %v4109
        %v4187 = vpop.f32.mrf.mxu0
        %v4188 = vadd.f32 0.0, %v4187
        %v4189 = vpop.f32.mrf.mxu0
        %v4190 = vadd.f32 0.0, %v4189
        %4191 = vmatmul.bf16.gmra.mxu0 %v4110
        %v4192 = vpop.f32.mrf.mxu0
        %v4193 = vadd.f32 0.0, %v4192
        %v4194 = vpop.f32.mrf.mxu0
        %v4195 = vadd.f32 0.0, %v4194
        %4196 = vmatmul.bf16.gmra.mxu0 %v4111
        %v4197 = vpop.f32.mrf.mxu0
        %v4198 = vadd.f32 0.0, %v4197
        %v4199 = vpop.f32.mrf.mxu0
        %v4200 = vadd.f32 0.0, %v4199
        %4201 = vmatmul.bf16.gmra.mxu0 %v4112
        %v4202 = vpop.f32.mrf.mxu0
        %v4203 = vadd.f32 0.0, %v4202
        %v4204 = vpop.f32.mrf.mxu0
        %v4205 = vadd.f32 0.0, %v4204
        %4206 = vmatmul.bf16.gmra.mxu0 %v4113
        %v4207 = vpop.f32.mrf.mxu0
        %v4208 = vadd.f32 0.0, %v4207
        %v4209 = vpop.f32.mrf.mxu0
        %v4210 = vadd.f32 0.0, %v4209
        %4211 = vmatmul.bf16.gmra.mxu0 %v4114
        %v4212 = vpop.f32.mrf.mxu0
        %v4213 = vadd.f32 0.0, %v4212
        %v4214 = vpop.f32.mrf.mxu0
        %v4215 = vadd.f32 0.0, %v4214
        %4216 = vdwg.mxu0
        %v4217 = vadd.f32 %v2750, %v4173
        %v4218 = vadd.f32 %v2751, %v4175
        %v4219 = vadd.f32 %v2752, %v4178
        %v4220 = vadd.f32 %v2753, %v4180
        %v4221 = vadd.f32 %v2754, %v4183
        %v4222 = vadd.f32 %v2755, %v4185
        %v4223 = vadd.f32 %v2756, %v4188
        %v4224 = vadd.f32 %v2757, %v4190
        %v4225 = vadd.f32 %v2758, %v4193
        %v4226 = vadd.f32 %v2759, %v4195
        %v4227 = vadd.f32 %v2760, %v4198
        %v4228 = vadd.f32 %v2761, %v4200
        %v4229 = vadd.f32 %v2762, %v4203
        %v4230 = vadd.f32 %v2763, %v4205
        %v4231 = vadd.f32 %v2764, %v4208
        %v4232 = vadd.f32 %v2765, %v4210
        %v4233 = vadd.f32 %v2766, %v4213
        %v4234 = vadd.f32 %v2767, %v4215
        %v4235 = vperm.slane %v201, 7
        %v4236 = vadd.f32 %v4217, %v4235
        %v4237 = vadd.f32 %v4218, %v4235
        %v4238 = vadd.f32 %v4219, %v4235
        %v4239 = vadd.f32 %v4220, %v4235
        %v4240 = vadd.f32 %v4221, %v4235
        %v4241 = vadd.f32 %v4222, %v4235
        %v4242 = vadd.f32 %v4223, %v4235
        %v4243 = vadd.f32 %v4224, %v4235
        %v4244 = vadd.f32 %v4225, %v4235
        %v4245 = vadd.f32 %v4226, %v4235
        %v4246 = vadd.f32 %v4227, %v4235
        %v4247 = vadd.f32 %v4228, %v4235
        %v4248 = vadd.f32 %v4229, %v4235
        %v4249 = vadd.f32 %v4230, %v4235
        %v4250 = vadd.f32 %v4231, %v4235
        %v4251 = vadd.f32 %v4232, %v4235
        %v4252 = vadd.f32 %v4233, %v4235
        %v4253 = vadd.f32 %v4234, %v4235
        %v4254 = vsel %vm2768, %v4236, 0.0
        %4255 = vadd.xlane.f32.xlu0 %v4254
        %v4256 = vpop.xlane.xlu0 %4255
        %v4257 = vsel %vm2768, %v4237, 0.0
        %4258 = vadd.xlane.f32.xlu0 %v4257
        %v4259 = vpop.xlane.xlu0 %4258
        %v4260 = vsel %vm2768, %v4238, 0.0
        %4261 = vadd.xlane.f32.xlu0 %v4260
        %v4262 = vpop.xlane.xlu0 %4261
        %v4263 = vsel %vm2768, %v4239, 0.0
        %4264 = vadd.xlane.f32.xlu0 %v4263
        %v4265 = vpop.xlane.xlu0 %4264
        %v4266 = vsel %vm2768, %v4240, 0.0
        %4267 = vadd.xlane.f32.xlu0 %v4266
        %v4268 = vpop.xlane.xlu0 %4267
        %v4269 = vsel %vm2768, %v4241, 0.0
        %4270 = vadd.xlane.f32.xlu0 %v4269
        %v4271 = vpop.xlane.xlu0 %4270
        %v4272 = vsel %vm2768, %v4242, 0.0
        %4273 = vadd.xlane.f32.xlu0 %v4272
        %v4274 = vpop.xlane.xlu0 %4273
        %v4275 = vsel %vm2768, %v4243, 0.0
        %4276 = vadd.xlane.f32.xlu0 %v4275
        %v4277 = vpop.xlane.xlu0 %4276
        %v4278 = vsel %vm2768, %v4244, 0.0
        %4279 = vadd.xlane.f32.xlu0 %v4278
        %v4280 = vpop.xlane.xlu0 %4279
        %v4281 = vsel %vm2768, %v4245, 0.0
        %4282 = vadd.xlane.f32.xlu0 %v4281
        %v4283 = vpop.xlane.xlu0 %4282
        %v4284 = vsel %vm2768, %v4246, 0.0
        %4285 = vadd.xlane.f32.xlu0 %v4284
        %v4286 = vpop.xlane.xlu0 %4285
        %v4287 = vsel %vm2768, %v4247, 0.0
        %4288 = vadd.xlane.f32.xlu0 %v4287
        %v4289 = vpop.xlane.xlu0 %4288
        %v4290 = vsel %vm2768, %v4248, 0.0
        %4291 = vadd.xlane.f32.xlu0 %v4290
        %v4292 = vpop.xlane.xlu0 %4291
        %v4293 = vsel %vm2768, %v4249, 0.0
        %4294 = vadd.xlane.f32.xlu0 %v4293
        %v4295 = vpop.xlane.xlu0 %4294
        %v4296 = vsel %vm2768, %v4250, 0.0
        %4297 = vadd.xlane.f32.xlu0 %v4296
        %v4298 = vpop.xlane.xlu0 %4297
        %v4299 = vsel %vm2768, %v4251, 0.0
        %4300 = vadd.xlane.f32.xlu0 %v4299
        %v4301 = vpop.xlane.xlu0 %4300
        %v4302 = vsel %vm2768, %v4252, 0.0
        %4303 = vadd.xlane.f32.xlu0 %v4302
        %v4304 = vpop.xlane.xlu0 %4303
        %v4305 = vsel %vm2768, %v4253, 0.0
        %4306 = vadd.xlane.f32.xlu0 %v4305
        %v4307 = vpop.xlane.xlu0 %4306
        %v4308 = vmul.f32 %v4256, %v2829
        %v4309 = vmul.f32 %v4259, %v2829
        %v4310 = vmul.f32 %v4262, %v2829
        %v4311 = vmul.f32 %v4265, %v2829
        %v4312 = vmul.f32 %v4268, %v2829
        %v4313 = vmul.f32 %v4271, %v2829
        %v4314 = vmul.f32 %v4274, %v2829
        %v4315 = vmul.f32 %v4277, %v2829
        %v4316 = vmul.f32 %v4280, %v2829
        %v4317 = vmul.f32 %v4283, %v2829
        %v4318 = vmul.f32 %v4286, %v2829
        %v4319 = vmul.f32 %v4289, %v2829
        %v4320 = vmul.f32 %v4292, %v2829
        %v4321 = vmul.f32 %v4295, %v2829
        %v4322 = vmul.f32 %v4298, %v2829
        %v4323 = vmul.f32 %v4301, %v2829
        %v4324 = vmul.f32 %v4304, %v2829
        %v4325 = vmul.f32 %v4307, %v2829
        %v4326 = vsub.f32 %v4236, %v4308
        %v4327 = vsub.f32 %v4237, %v4309
        %v4328 = vsub.f32 %v4238, %v4310
        %v4329 = vsub.f32 %v4239, %v4311
        %v4330 = vsub.f32 %v4240, %v4312
        %v4331 = vsub.f32 %v4241, %v4313
        %v4332 = vsub.f32 %v4242, %v4314
        %v4333 = vsub.f32 %v4243, %v4315
        %v4334 = vsub.f32 %v4244, %v4316
        %v4335 = vsub.f32 %v4245, %v4317
        %v4336 = vsub.f32 %v4246, %v4318
        %v4337 = vsub.f32 %v4247, %v4319
        %v4338 = vsub.f32 %v4248, %v4320
        %v4339 = vsub.f32 %v4249, %v4321
        %v4340 = vsub.f32 %v4250, %v4322
        %v4341 = vsub.f32 %v4251, %v4323
        %v4342 = vsub.f32 %v4252, %v4324
        %v4343 = vsub.f32 %v4253, %v4325
        %v4344 = vmul.f32 %v4326, %v4326
        %v4345 = vmul.f32 %v4327, %v4327
        %v4346 = vmul.f32 %v4328, %v4328
        %v4347 = vmul.f32 %v4329, %v4329
        %v4348 = vmul.f32 %v4330, %v4330
        %v4349 = vmul.f32 %v4331, %v4331
        %v4350 = vmul.f32 %v4332, %v4332
        %v4351 = vmul.f32 %v4333, %v4333
        %v4352 = vmul.f32 %v4334, %v4334
        %v4353 = vmul.f32 %v4335, %v4335
        %v4354 = vmul.f32 %v4336, %v4336
        %v4355 = vmul.f32 %v4337, %v4337
        %v4356 = vmul.f32 %v4338, %v4338
        %v4357 = vmul.f32 %v4339, %v4339
        %v4358 = vmul.f32 %v4340, %v4340
        %v4359 = vmul.f32 %v4341, %v4341
        %v4360 = vmul.f32 %v4342, %v4342
        %v4361 = vmul.f32 %v4343, %v4343
        %v4362 = vsel %vm2768, %v4344, 0.0
        %4363 = vadd.xlane.f32.xlu0 %v4362
        %v4364 = vpop.xlane.xlu0 %4363
        %v4365 = vsel %vm2768, %v4345, 0.0
        %4366 = vadd.xlane.f32.xlu0 %v4365
        %v4367 = vpop.xlane.xlu0 %4366
        %v4368 = vsel %vm2768, %v4346, 0.0
        %4369 = vadd.xlane.f32.xlu0 %v4368
        %v4370 = vpop.xlane.xlu0 %4369
        %v4371 = vsel %vm2768, %v4347, 0.0
        %4372 = vadd.xlane.f32.xlu0 %v4371
        %v4373 = vpop.xlane.xlu0 %4372
        %v4374 = vsel %vm2768, %v4348, 0.0
        %4375 = vadd.xlane.f32.xlu0 %v4374
        %v4376 = vpop.xlane.xlu0 %4375
        %v4377 = vsel %vm2768, %v4349, 0.0
        %4378 = vadd.xlane.f32.xlu0 %v4377
        %v4379 = vpop.xlane.xlu0 %4378
        %v4380 = vsel %vm2768, %v4350, 0.0
        %4381 = vadd.xlane.f32.xlu0 %v4380
        %v4382 = vpop.xlane.xlu0 %4381
        %v4383 = vsel %vm2768, %v4351, 0.0
        %4384 = vadd.xlane.f32.xlu0 %v4383
        %v4385 = vpop.xlane.xlu0 %4384
        %v4386 = vsel %vm2768, %v4352, 0.0
        %4387 = vadd.xlane.f32.xlu0 %v4386
        %v4388 = vpop.xlane.xlu0 %4387
        %v4389 = vsel %vm2768, %v4353, 0.0
        %4390 = vadd.xlane.f32.xlu0 %v4389
        %v4391 = vpop.xlane.xlu0 %4390
        %v4392 = vsel %vm2768, %v4354, 0.0
        %4393 = vadd.xlane.f32.xlu0 %v4392
        %v4394 = vpop.xlane.xlu0 %4393
        %v4395 = vsel %vm2768, %v4355, 0.0
        %4396 = vadd.xlane.f32.xlu0 %v4395
        %v4397 = vpop.xlane.xlu0 %4396
        %v4398 = vsel %vm2768, %v4356, 0.0
        %4399 = vadd.xlane.f32.xlu0 %v4398
        %v4400 = vpop.xlane.xlu0 %4399
        %v4401 = vsel %vm2768, %v4357, 0.0
        %4402 = vadd.xlane.f32.xlu0 %v4401
        %v4403 = vpop.xlane.xlu0 %4402
        %v4404 = vsel %vm2768, %v4358, 0.0
        %4405 = vadd.xlane.f32.xlu0 %v4404
        %v4406 = vpop.xlane.xlu0 %4405
        %v4407 = vsel %vm2768, %v4359, 0.0
        %4408 = vadd.xlane.f32.xlu0 %v4407
        %v4409 = vpop.xlane.xlu0 %4408
        %v4410 = vsel %vm2768, %v4360, 0.0
        %4411 = vadd.xlane.f32.xlu0 %v4410
        %v4412 = vpop.xlane.xlu0 %4411
        %v4413 = vsel %vm2768, %v4361, 0.0
        %4414 = vadd.xlane.f32.xlu0 %v4413
        %v4415 = vpop.xlane.xlu0 %4414
        %v4416 = vmul.f32 %v4364, %v2829
        %v4417 = vmul.f32 %v4367, %v2829
        %v4418 = vmul.f32 %v4370, %v2829
        %v4419 = vmul.f32 %v4373, %v2829
        %v4420 = vmul.f32 %v4376, %v2829
        %v4421 = vmul.f32 %v4379, %v2829
        %v4422 = vmul.f32 %v4382, %v2829
        %v4423 = vmul.f32 %v4385, %v2829
        %v4424 = vmul.f32 %v4388, %v2829
        %v4425 = vmul.f32 %v4391, %v2829
        %v4426 = vmul.f32 %v4394, %v2829
        %v4427 = vmul.f32 %v4397, %v2829
        %v4428 = vmul.f32 %v4400, %v2829
        %v4429 = vmul.f32 %v4403, %v2829
        %v4430 = vmul.f32 %v4406, %v2829
        %v4431 = vmul.f32 %v4409, %v2829
        %v4432 = vmul.f32 %v4412, %v2829
        %v4433 = vmul.f32 %v4415, %v2829
        %v4434 = vadd.f32 %v4416, 1e-05
        %v4435 = vadd.f32 %v4417, 1e-05
        %v4436 = vadd.f32 %v4418, 1e-05
        %v4437 = vadd.f32 %v4419, 1e-05
        %v4438 = vadd.f32 %v4420, 1e-05
        %v4439 = vadd.f32 %v4421, 1e-05
        %v4440 = vadd.f32 %v4422, 1e-05
        %v4441 = vadd.f32 %v4423, 1e-05
        %v4442 = vadd.f32 %v4424, 1e-05
        %v4443 = vadd.f32 %v4425, 1e-05
        %v4444 = vadd.f32 %v4426, 1e-05
        %v4445 = vadd.f32 %v4427, 1e-05
        %v4446 = vadd.f32 %v4428, 1e-05
        %v4447 = vadd.f32 %v4429, 1e-05
        %v4448 = vadd.f32 %v4430, 1e-05
        %v4449 = vadd.f32 %v4431, 1e-05
        %v4450 = vadd.f32 %v4432, 1e-05
        %v4451 = vadd.f32 %v4433, 1e-05
        %v4452 = vrsqrt.pop %v4434
        %v4453 = vmul.f32 %v4452, %v4434
        %v4454 = vmul.f32 %v4453, %v4452
        %v4455 = vmul.f32 0.5, %v4454
        %v4456 = vsub.f32 1.5, %v4455
        %v4457 = vmul.f32 %v4452, %v4456
        %vm4458 = vweird.f32 %v4434
        %vm4459 = vweird.f32 %v4452
        %vm4460 = vmor %vm4458, %vm4459
        %v4461 = vsel %vm4460, %v4452, %v4457
        %v4462 = vrsqrt.pop %v4435
        %v4463 = vmul.f32 %v4462, %v4435
        %v4464 = vmul.f32 %v4463, %v4462
        %v4465 = vmul.f32 0.5, %v4464
        %v4466 = vsub.f32 1.5, %v4465
        %v4467 = vmul.f32 %v4462, %v4466
        %vm4468 = vweird.f32 %v4435
        %vm4469 = vweird.f32 %v4462
        %vm4470 = vmor %vm4468, %vm4469
        %v4471 = vsel %vm4470, %v4462, %v4467
        %v4472 = vrsqrt.pop %v4436
        %v4473 = vmul.f32 %v4472, %v4436
        %v4474 = vmul.f32 %v4473, %v4472
        %v4475 = vmul.f32 0.5, %v4474
        %v4476 = vsub.f32 1.5, %v4475
        %v4477 = vmul.f32 %v4472, %v4476
        %vm4478 = vweird.f32 %v4436
        %vm4479 = vweird.f32 %v4472
        %vm4480 = vmor %vm4478, %vm4479
        %v4481 = vsel %vm4480, %v4472, %v4477
        %v4482 = vrsqrt.pop %v4437
        %v4483 = vmul.f32 %v4482, %v4437
        %v4484 = vmul.f32 %v4483, %v4482
        %v4485 = vmul.f32 0.5, %v4484
        %v4486 = vsub.f32 1.5, %v4485
        %v4487 = vmul.f32 %v4482, %v4486
        %vm4488 = vweird.f32 %v4437
        %vm4489 = vweird.f32 %v4482
        %vm4490 = vmor %vm4488, %vm4489
        %v4491 = vsel %vm4490, %v4482, %v4487
        %v4492 = vrsqrt.pop %v4438
        %v4493 = vmul.f32 %v4492, %v4438
        %v4494 = vmul.f32 %v4493, %v4492
        %v4495 = vmul.f32 0.5, %v4494
        %v4496 = vsub.f32 1.5, %v4495
        %v4497 = vmul.f32 %v4492, %v4496
        %vm4498 = vweird.f32 %v4438
        %vm4499 = vweird.f32 %v4492
        %vm4500 = vmor %vm4498, %vm4499
        %v4501 = vsel %vm4500, %v4492, %v4497
        %v4502 = vrsqrt.pop %v4439
        %v4503 = vmul.f32 %v4502, %v4439
        %v4504 = vmul.f32 %v4503, %v4502
        %v4505 = vmul.f32 0.5, %v4504
        %v4506 = vsub.f32 1.5, %v4505
        %v4507 = vmul.f32 %v4502, %v4506
        %vm4508 = vweird.f32 %v4439
        %vm4509 = vweird.f32 %v4502
        %vm4510 = vmor %vm4508, %vm4509
        %v4511 = vsel %vm4510, %v4502, %v4507
        %v4512 = vrsqrt.pop %v4440
        %v4513 = vmul.f32 %v4512, %v4440
        %v4514 = vmul.f32 %v4513, %v4512
        %v4515 = vmul.f32 0.5, %v4514
        %v4516 = vsub.f32 1.5, %v4515
        %v4517 = vmul.f32 %v4512, %v4516
        %vm4518 = vweird.f32 %v4440
        %vm4519 = vweird.f32 %v4512
        %vm4520 = vmor %vm4518, %vm4519
        %v4521 = vsel %vm4520, %v4512, %v4517
        %v4522 = vrsqrt.pop %v4441
        %v4523 = vmul.f32 %v4522, %v4441
        %v4524 = vmul.f32 %v4523, %v4522
        %v4525 = vmul.f32 0.5, %v4524
        %v4526 = vsub.f32 1.5, %v4525
        %v4527 = vmul.f32 %v4522, %v4526
        %vm4528 = vweird.f32 %v4441
        %vm4529 = vweird.f32 %v4522
        %vm4530 = vmor %vm4528, %vm4529
        %v4531 = vsel %vm4530, %v4522, %v4527
        %v4532 = vrsqrt.pop %v4442
        %v4533 = vmul.f32 %v4532, %v4442
        %v4534 = vmul.f32 %v4533, %v4532
        %v4535 = vmul.f32 0.5, %v4534
        %v4536 = vsub.f32 1.5, %v4535
        %v4537 = vmul.f32 %v4532, %v4536
        %vm4538 = vweird.f32 %v4442
        %vm4539 = vweird.f32 %v4532
        %vm4540 = vmor %vm4538, %vm4539
        %v4541 = vsel %vm4540, %v4532, %v4537
        %v4542 = vrsqrt.pop %v4443
        %v4543 = vmul.f32 %v4542, %v4443
        %v4544 = vmul.f32 %v4543, %v4542
        %v4545 = vmul.f32 0.5, %v4544
        %v4546 = vsub.f32 1.5, %v4545
        %v4547 = vmul.f32 %v4542, %v4546
        %vm4548 = vweird.f32 %v4443
        %vm4549 = vweird.f32 %v4542
        %vm4550 = vmor %vm4548, %vm4549
        %v4551 = vsel %vm4550, %v4542, %v4547
        %v4552 = vrsqrt.pop %v4444
        %v4553 = vmul.f32 %v4552, %v4444
        %v4554 = vmul.f32 %v4553, %v4552
        %v4555 = vmul.f32 0.5, %v4554
        %v4556 = vsub.f32 1.5, %v4555
        %v4557 = vmul.f32 %v4552, %v4556
        %vm4558 = vweird.f32 %v4444
        %vm4559 = vweird.f32 %v4552
        %vm4560 = vmor %vm4558, %vm4559
        %v4561 = vsel %vm4560, %v4552, %v4557
        %v4562 = vrsqrt.pop %v4445
        %v4563 = vmul.f32 %v4562, %v4445
        %v4564 = vmul.f32 %v4563, %v4562
        %v4565 = vmul.f32 0.5, %v4564
        %v4566 = vsub.f32 1.5, %v4565
        %v4567 = vmul.f32 %v4562, %v4566
        %vm4568 = vweird.f32 %v4445
        %vm4569 = vweird.f32 %v4562
        %vm4570 = vmor %vm4568, %vm4569
        %v4571 = vsel %vm4570, %v4562, %v4567
        %v4572 = vrsqrt.pop %v4446
        %v4573 = vmul.f32 %v4572, %v4446
        %v4574 = vmul.f32 %v4573, %v4572
        %v4575 = vmul.f32 0.5, %v4574
        %v4576 = vsub.f32 1.5, %v4575
        %v4577 = vmul.f32 %v4572, %v4576
        %vm4578 = vweird.f32 %v4446
        %vm4579 = vweird.f32 %v4572
        %vm4580 = vmor %vm4578, %vm4579
        %v4581 = vsel %vm4580, %v4572, %v4577
        %v4582 = vrsqrt.pop %v4447
        %v4583 = vmul.f32 %v4582, %v4447
        %v4584 = vmul.f32 %v4583, %v4582
        %v4585 = vmul.f32 0.5, %v4584
        %v4586 = vsub.f32 1.5, %v4585
        %v4587 = vmul.f32 %v4582, %v4586
        %vm4588 = vweird.f32 %v4447
        %vm4589 = vweird.f32 %v4582
        %vm4590 = vmor %vm4588, %vm4589
        %v4591 = vsel %vm4590, %v4582, %v4587
        %v4592 = vrsqrt.pop %v4448
        %v4593 = vmul.f32 %v4592, %v4448
        %v4594 = vmul.f32 %v4593, %v4592
        %v4595 = vmul.f32 0.5, %v4594
        %v4596 = vsub.f32 1.5, %v4595
        %v4597 = vmul.f32 %v4592, %v4596
        %vm4598 = vweird.f32 %v4448
        %vm4599 = vweird.f32 %v4592
        %vm4600 = vmor %vm4598, %vm4599
        %v4601 = vsel %vm4600, %v4592, %v4597
        %v4602 = vrsqrt.pop %v4449
        %v4603 = vmul.f32 %v4602, %v4449
        %v4604 = vmul.f32 %v4603, %v4602
        %v4605 = vmul.f32 0.5, %v4604
        %v4606 = vsub.f32 1.5, %v4605
        %v4607 = vmul.f32 %v4602, %v4606
        %vm4608 = vweird.f32 %v4449
        %vm4609 = vweird.f32 %v4602
        %vm4610 = vmor %vm4608, %vm4609
        %v4611 = vsel %vm4610, %v4602, %v4607
        %v4612 = vrsqrt.pop %v4450
        %v4613 = vmul.f32 %v4612, %v4450
        %v4614 = vmul.f32 %v4613, %v4612
        %v4615 = vmul.f32 0.5, %v4614
        %v4616 = vsub.f32 1.5, %v4615
        %v4617 = vmul.f32 %v4612, %v4616
        %vm4618 = vweird.f32 %v4450
        %vm4619 = vweird.f32 %v4612
        %vm4620 = vmor %vm4618, %vm4619
        %v4621 = vsel %vm4620, %v4612, %v4617
        %v4622 = vrsqrt.pop %v4451
        %v4623 = vmul.f32 %v4622, %v4451
        %v4624 = vmul.f32 %v4623, %v4622
        %v4625 = vmul.f32 0.5, %v4624
        %v4626 = vsub.f32 1.5, %v4625
        %v4627 = vmul.f32 %v4622, %v4626
        %vm4628 = vweird.f32 %v4451
        %vm4629 = vweird.f32 %v4622
        %vm4630 = vmor %vm4628, %vm4629
        %v4631 = vsel %vm4630, %v4622, %v4627
        %v4632 = vmul.f32 %v4326, %v4461
        %v4633 = vmul.f32 %v4327, %v4471
        %v4634 = vmul.f32 %v4328, %v4481
        %v4635 = vmul.f32 %v4329, %v4491
        %v4636 = vmul.f32 %v4330, %v4501
        %v4637 = vmul.f32 %v4331, %v4511
        %v4638 = vmul.f32 %v4332, %v4521
        %v4639 = vmul.f32 %v4333, %v4531
        %v4640 = vmul.f32 %v4334, %v4541
        %v4641 = vmul.f32 %v4335, %v4551
        %v4642 = vmul.f32 %v4336, %v4561
        %v4643 = vmul.f32 %v4337, %v4571
        %v4644 = vmul.f32 %v4338, %v4581
        %v4645 = vmul.f32 %v4339, %v4591
        %v4646 = vmul.f32 %v4340, %v4601
        %v4647 = vmul.f32 %v4341, %v4611
        %v4648 = vmul.f32 %v4342, %v4621
        %v4649 = vmul.f32 %v4343, %v4631
        %v4650 = vperm.slane %v201, 2
        %v4651 = vmul.f32 %v4632, %v4650
        %v4652 = vmul.f32 %v4633, %v4650
        %v4653 = vmul.f32 %v4634, %v4650
        %v4654 = vmul.f32 %v4635, %v4650
        %v4655 = vmul.f32 %v4636, %v4650
        %v4656 = vmul.f32 %v4637, %v4650
        %v4657 = vmul.f32 %v4638, %v4650
        %v4658 = vmul.f32 %v4639, %v4650
        %v4659 = vmul.f32 %v4640, %v4650
        %v4660 = vmul.f32 %v4641, %v4650
        %v4661 = vmul.f32 %v4642, %v4650
        %v4662 = vmul.f32 %v4643, %v4650
        %v4663 = vmul.f32 %v4644, %v4650
        %v4664 = vmul.f32 %v4645, %v4650
        %v4665 = vmul.f32 %v4646, %v4650
        %v4666 = vmul.f32 %v4647, %v4650
        %v4667 = vmul.f32 %v4648, %v4650
        %v4668 = vmul.f32 %v4649, %v4650
        %v4669 = vperm.slane %v201, 3
        %v4670 = vadd.f32 %v4651, %v4669
        %v4671 = vadd.f32 %v4652, %v4669
        %v4672 = vadd.f32 %v4653, %v4669
        %v4673 = vadd.f32 %v4654, %v4669
        %v4674 = vadd.f32 %v4655, %v4669
        %v4675 = vadd.f32 %v4656, %v4669
        %v4676 = vadd.f32 %v4657, %v4669
        %v4677 = vadd.f32 %v4658, %v4669
        %v4678 = vadd.f32 %v4659, %v4669
        %v4679 = vadd.f32 %v4660, %v4669
        %v4680 = vadd.f32 %v4661, %v4669
        %v4681 = vadd.f32 %v4662, %v4669
        %v4682 = vadd.f32 %v4663, %v4669
        %v4683 = vadd.f32 %v4664, %v4669
        %v4684 = vadd.f32 %v4665, %v4669
        %v4685 = vadd.f32 %v4666, %v4669
        %v4686 = vadd.f32 %v4667, %v4669
        %v4687 = vadd.f32 %v4668, %v4669
        %v4688 = vpack.c.bf16 %v4671, %v4670
        %v4689 = vpack.c.bf16 %v4673, %v4672
        %v4690 = vpack.c.bf16 %v4675, %v4674
        %v4691 = vpack.c.bf16 %v4677, %v4676
        %v4692 = vpack.c.bf16 %v4679, %v4678
        %v4693 = vpack.c.bf16 %v4681, %v4680
        %v4694 = vpack.c.bf16 %v4683, %v4682
        %v4695 = vpack.c.bf16 %v4685, %v4684
        %v4696 = vpack.c.bf16 %v4687, %v4686
        %v4697 = vperm.slane %v202, 0
        %v4706 = vunpack.c.l.b16 %v363
        %v4707 = vunpack.c.l.b16 %v364
        %v4708 = vunpack.c.l.b16 %v365
        %v4709 = vunpack.c.l.b16 %v366
        %v4710 = vunpack.c.l.b16 %v367
        %v4711 = vunpack.c.l.b16 %v368
        %v4712 = vunpack.c.l.b16 %v369
        %v4713 = vunpack.c.l.b16 %v370
        %v4714 = vpack.c.b16 %v4707, %v4706
        %v4715 = vpack.c.b16 %v4709, %v4708
        %v4716 = vpack.c.b16 %v4711, %v4710
        %v4717 = vpack.c.b16 %v4713, %v4712
        %v4723 = vsel %vm2768, %v4688, 0
        %v4726 = vsel %vm2768, %v4689, 0
        %v4729 = vsel %vm2768, %v4690, 0
        %v4732 = vsel %vm2768, %v4691, 0
        %v4735 = vsel %vm2768, %v4692, 0
        %v4738 = vsel %vm2768, %v4693, 0
        %v4741 = vsel %vm2768, %v4694, 0
        %v4744 = vsel %vm2768, %v4695, 0
        %v4747 = vsel %vm2768, %v4696, 0
        %4749 = vmatpush.bf16.msra.mxu0 0
        %4750 = vmatpush.bf16.msra.mxu0 0
        %4751 = vmatpush.bf16.msra.mxu0 0
        %4752 = vmatpush.bf16.msra.mxu0 0
        %4753 = vmatpush.bf16.msra.mxu0 %v4717
        %4754 = vmatpush.bf16.msra.mxu0 %v4716
        %4755 = vmatpush.bf16.msra.mxu0 %v4715
        %4756 = vmatpush.bf16.msra.mxu0 %v4714
        %4757 = vmatmul.bf16.gmra.mxu0 %v4723
        %v4758 = vpop.f32.mrf.mxu0
        %v4759 = vadd.f32 %v4697, %v4758
        %v4760 = vpop.f32.mrf.mxu0
        %v4761 = vadd.f32 %v4697, %v4760
        %4762 = vmatmul.bf16.gmra.mxu0 %v4726
        %v4763 = vpop.f32.mrf.mxu0
        %v4764 = vadd.f32 %v4697, %v4763
        %v4765 = vpop.f32.mrf.mxu0
        %v4766 = vadd.f32 %v4697, %v4765
        %4767 = vmatmul.bf16.gmra.mxu0 %v4729
        %v4768 = vpop.f32.mrf.mxu0
        %v4769 = vadd.f32 %v4697, %v4768
        %v4770 = vpop.f32.mrf.mxu0
        %v4771 = vadd.f32 %v4697, %v4770
        %4772 = vmatmul.bf16.gmra.mxu0 %v4732
        %v4773 = vpop.f32.mrf.mxu0
        %v4774 = vadd.f32 %v4697, %v4773
        %v4775 = vpop.f32.mrf.mxu0
        %v4776 = vadd.f32 %v4697, %v4775
        %4777 = vmatmul.bf16.gmra.mxu0 %v4735
        %v4778 = vpop.f32.mrf.mxu0
        %v4779 = vadd.f32 %v4697, %v4778
        %v4780 = vpop.f32.mrf.mxu0
        %v4781 = vadd.f32 %v4697, %v4780
        %4782 = vmatmul.bf16.gmra.mxu0 %v4738
        %v4783 = vpop.f32.mrf.mxu0
        %v4784 = vadd.f32 %v4697, %v4783
        %v4785 = vpop.f32.mrf.mxu0
        %v4786 = vadd.f32 %v4697, %v4785
        %4787 = vmatmul.bf16.gmra.mxu0 %v4741
        %v4788 = vpop.f32.mrf.mxu0
        %v4789 = vadd.f32 %v4697, %v4788
        %v4790 = vpop.f32.mrf.mxu0
        %v4791 = vadd.f32 %v4697, %v4790
        %4792 = vmatmul.bf16.gmra.mxu0 %v4744
        %v4793 = vpop.f32.mrf.mxu0
        %v4794 = vadd.f32 %v4697, %v4793
        %v4795 = vpop.f32.mrf.mxu0
        %v4796 = vadd.f32 %v4697, %v4795
        %4797 = vmatmul.bf16.gmra.mxu0 %v4747
        %v4798 = vpop.f32.mrf.mxu0
        %v4799 = vadd.f32 %v4697, %v4798
        %v4800 = vpop.f32.mrf.mxu0
        %v4801 = vadd.f32 %v4697, %v4800
        %4802 = vdwg.mxu0
        %v4803 = vmul.f32 %v4759, %v4759
        %v4804 = vmul.f32 %v4761, %v4761
        %v4805 = vmul.f32 %v4764, %v4764
        %v4806 = vmul.f32 %v4766, %v4766
        %v4807 = vmul.f32 %v4769, %v4769
        %v4808 = vmul.f32 %v4771, %v4771
        %v4809 = vmul.f32 %v4774, %v4774
        %v4810 = vmul.f32 %v4776, %v4776
        %v4811 = vmul.f32 %v4779, %v4779
        %v4812 = vmul.f32 %v4781, %v4781
        %v4813 = vmul.f32 %v4784, %v4784
        %v4814 = vmul.f32 %v4786, %v4786
        %v4815 = vmul.f32 %v4789, %v4789
        %v4816 = vmul.f32 %v4791, %v4791
        %v4817 = vmul.f32 %v4794, %v4794
        %v4818 = vmul.f32 %v4796, %v4796
        %v4819 = vmul.f32 %v4799, %v4799
        %v4820 = vmul.f32 %v4801, %v4801
        %v4821 = vmul.f32 %v4759, %v4803
        %v4822 = vmul.f32 %v4761, %v4804
        %v4823 = vmul.f32 %v4764, %v4805
        %v4824 = vmul.f32 %v4766, %v4806
        %v4825 = vmul.f32 %v4769, %v4807
        %v4826 = vmul.f32 %v4771, %v4808
        %v4827 = vmul.f32 %v4774, %v4809
        %v4828 = vmul.f32 %v4776, %v4810
        %v4829 = vmul.f32 %v4779, %v4811
        %v4830 = vmul.f32 %v4781, %v4812
        %v4831 = vmul.f32 %v4784, %v4813
        %v4832 = vmul.f32 %v4786, %v4814
        %v4833 = vmul.f32 %v4789, %v4815
        %v4834 = vmul.f32 %v4791, %v4816
        %v4835 = vmul.f32 %v4794, %v4817
        %v4836 = vmul.f32 %v4796, %v4818
        %v4837 = vmul.f32 %v4799, %v4819
        %v4838 = vmul.f32 %v4801, %v4820
        %v4839 = vmul.f32 %v4821, 0.044715
        %v4840 = vmul.f32 %v4822, 0.044715
        %v4841 = vmul.f32 %v4823, 0.044715
        %v4842 = vmul.f32 %v4824, 0.044715
        %v4843 = vmul.f32 %v4825, 0.044715
        %v4844 = vmul.f32 %v4826, 0.044715
        %v4845 = vmul.f32 %v4827, 0.044715
        %v4846 = vmul.f32 %v4828, 0.044715
        %v4847 = vmul.f32 %v4829, 0.044715
        %v4848 = vmul.f32 %v4830, 0.044715
        %v4849 = vmul.f32 %v4831, 0.044715
        %v4850 = vmul.f32 %v4832, 0.044715
        %v4851 = vmul.f32 %v4833, 0.044715
        %v4852 = vmul.f32 %v4834, 0.044715
        %v4853 = vmul.f32 %v4835, 0.044715
        %v4854 = vmul.f32 %v4836, 0.044715
        %v4855 = vmul.f32 %v4837, 0.044715
        %v4856 = vmul.f32 %v4838, 0.044715
        %v4857 = vadd.f32 %v4759, %v4839
        %v4858 = vadd.f32 %v4761, %v4840
        %v4859 = vadd.f32 %v4764, %v4841
        %v4860 = vadd.f32 %v4766, %v4842
        %v4861 = vadd.f32 %v4769, %v4843
        %v4862 = vadd.f32 %v4771, %v4844
        %v4863 = vadd.f32 %v4774, %v4845
        %v4864 = vadd.f32 %v4776, %v4846
        %v4865 = vadd.f32 %v4779, %v4847
        %v4866 = vadd.f32 %v4781, %v4848
        %v4867 = vadd.f32 %v4784, %v4849
        %v4868 = vadd.f32 %v4786, %v4850
        %v4869 = vadd.f32 %v4789, %v4851
        %v4870 = vadd.f32 %v4791, %v4852
        %v4871 = vadd.f32 %v4794, %v4853
        %v4872 = vadd.f32 %v4796, %v4854
        %v4873 = vadd.f32 %v4799, %v4855
        %v4874 = vadd.f32 %v4801, %v4856
        %v4875 = vmul.f32 %v4857, 0.7978846
        %v4876 = vmul.f32 %v4858, 0.7978846
        %v4877 = vmul.f32 %v4859, 0.7978846
        %v4878 = vmul.f32 %v4860, 0.7978846
        %v4879 = vmul.f32 %v4861, 0.7978846
        %v4880 = vmul.f32 %v4862, 0.7978846
        %v4881 = vmul.f32 %v4863, 0.7978846
        %v4882 = vmul.f32 %v4864, 0.7978846
        %v4883 = vmul.f32 %v4865, 0.7978846
        %v4884 = vmul.f32 %v4866, 0.7978846
        %v4885 = vmul.f32 %v4867, 0.7978846
        %v4886 = vmul.f32 %v4868, 0.7978846
        %v4887 = vmul.f32 %v4869, 0.7978846
        %v4888 = vmul.f32 %v4870, 0.7978846
        %v4889 = vmul.f32 %v4871, 0.7978846
        %v4890 = vmul.f32 %v4872, 0.7978846
        %v4891 = vmul.f32 %v4873, 0.7978846
        %v4892 = vmul.f32 %v4874, 0.7978846
        %v4893 = vtanh.pop %v4875
        %v4894 = vtanh.pop %v4876
        %v4895 = vtanh.pop %v4877
        %v4896 = vtanh.pop %v4878
        %v4897 = vtanh.pop %v4879
        %v4898 = vtanh.pop %v4880
        %v4899 = vtanh.pop %v4881
        %v4900 = vtanh.pop %v4882
        %v4901 = vtanh.pop %v4883
        %v4902 = vtanh.pop %v4884
        %v4903 = vtanh.pop %v4885
        %v4904 = vtanh.pop %v4886
        %v4905 = vtanh.pop %v4887
        %v4906 = vtanh.pop %v4888
        %v4907 = vtanh.pop %v4889
        %v4908 = vtanh.pop %v4890
        %v4909 = vtanh.pop %v4891
        %v4910 = vtanh.pop %v4892
        %v4911 = vadd.f32 %v4893, 1.0
        %v4912 = vadd.f32 %v4894, 1.0
        %v4913 = vadd.f32 %v4895, 1.0
        %v4914 = vadd.f32 %v4896, 1.0
        %v4915 = vadd.f32 %v4897, 1.0
        %v4916 = vadd.f32 %v4898, 1.0
        %v4917 = vadd.f32 %v4899, 1.0
        %v4918 = vadd.f32 %v4900, 1.0
        %v4919 = vadd.f32 %v4901, 1.0
        %v4920 = vadd.f32 %v4902, 1.0
        %v4921 = vadd.f32 %v4903, 1.0
        %v4922 = vadd.f32 %v4904, 1.0
        %v4923 = vadd.f32 %v4905, 1.0
        %v4924 = vadd.f32 %v4906, 1.0
        %v4925 = vadd.f32 %v4907, 1.0
        %v4926 = vadd.f32 %v4908, 1.0
        %v4927 = vadd.f32 %v4909, 1.0
        %v4928 = vadd.f32 %v4910, 1.0
        %v4929 = vmul.f32 %v4911, 0.5
        %v4930 = vmul.f32 %v4912, 0.5
        %v4931 = vmul.f32 %v4913, 0.5
        %v4932 = vmul.f32 %v4914, 0.5
        %v4933 = vmul.f32 %v4915, 0.5
        %v4934 = vmul.f32 %v4916, 0.5
        %v4935 = vmul.f32 %v4917, 0.5
        %v4936 = vmul.f32 %v4918, 0.5
        %v4937 = vmul.f32 %v4919, 0.5
        %v4938 = vmul.f32 %v4920, 0.5
        %v4939 = vmul.f32 %v4921, 0.5
        %v4940 = vmul.f32 %v4922, 0.5
        %v4941 = vmul.f32 %v4923, 0.5
        %v4942 = vmul.f32 %v4924, 0.5
        %v4943 = vmul.f32 %v4925, 0.5
        %v4944 = vmul.f32 %v4926, 0.5
        %v4945 = vmul.f32 %v4927, 0.5
        %v4946 = vmul.f32 %v4928, 0.5
        %v4947 = vmul.f32 %v4759, %v4929
        %v4948 = vmul.f32 %v4761, %v4930
        %v4949 = vmul.f32 %v4764, %v4931
        %v4950 = vmul.f32 %v4766, %v4932
        %v4951 = vmul.f32 %v4769, %v4933
        %v4952 = vmul.f32 %v4771, %v4934
        %v4953 = vmul.f32 %v4774, %v4935
        %v4954 = vmul.f32 %v4776, %v4936
        %v4955 = vmul.f32 %v4779, %v4937
        %v4956 = vmul.f32 %v4781, %v4938
        %v4957 = vmul.f32 %v4784, %v4939
        %v4958 = vmul.f32 %v4786, %v4940
        %v4959 = vmul.f32 %v4789, %v4941
        %v4960 = vmul.f32 %v4791, %v4942
        %v4961 = vmul.f32 %v4794, %v4943
        %v4962 = vmul.f32 %v4796, %v4944
        %v4963 = vmul.f32 %v4799, %v4945
        %v4964 = vmul.f32 %v4801, %v4946
        %v4965 = vpack.c.bf16 %v4948, %v4947
        %v4966 = vpack.c.bf16 %v4950, %v4949
        %v4967 = vpack.c.bf16 %v4952, %v4951
        %v4968 = vpack.c.bf16 %v4954, %v4953
        %v4969 = vpack.c.bf16 %v4956, %v4955
        %v4970 = vpack.c.bf16 %v4958, %v4957
        %v4971 = vpack.c.bf16 %v4960, %v4959
        %v4972 = vpack.c.bf16 %v4962, %v4961
        %v4973 = vpack.c.bf16 %v4964, %v4963
        %v4990 = vunpack.c.l.b16 %v475
        %v4991 = vunpack.c.l.b16 %v476
        %v4992 = vunpack.c.l.b16 %v477
        %v4993 = vunpack.c.l.b16 %v478
        %v4994 = vunpack.c.l.b16 %v479
        %v4995 = vunpack.c.l.b16 %v480
        %v4996 = vunpack.c.l.b16 %v481
        %v4997 = vunpack.c.l.b16 %v482
        %v4998 = vunpack.c.l.b16 %v483
        %v4999 = vunpack.c.l.b16 %v484
        %v5000 = vunpack.c.l.b16 %v485
        %v5001 = vunpack.c.l.b16 %v486
        %v5002 = vunpack.c.l.b16 %v487
        %v5003 = vunpack.c.l.b16 %v488
        %v5004 = vunpack.c.l.b16 %v489
        %v5005 = vunpack.c.l.b16 %v490
        %v5006 = vpack.c.b16 %v4991, %v4990
        %v5007 = vpack.c.b16 %v4993, %v4992
        %v5008 = vpack.c.b16 %v4995, %v4994
        %v5009 = vpack.c.b16 %v4997, %v4996
        %v5010 = vpack.c.b16 %v4999, %v4998
        %v5011 = vpack.c.b16 %v5001, %v5000
        %v5012 = vpack.c.b16 %v5003, %v5002
        %v5013 = vpack.c.b16 %v5005, %v5004
        %5022 = vmatpush.bf16.msra.mxu0 %v5013
        %5023 = vmatpush.bf16.msra.mxu0 %v5012
        %5024 = vmatpush.bf16.msra.mxu0 %v5011
        %5025 = vmatpush.bf16.msra.mxu0 %v5010
        %5026 = vmatpush.bf16.msra.mxu0 %v5009
        %5027 = vmatpush.bf16.msra.mxu0 %v5008
        %5028 = vmatpush.bf16.msra.mxu0 %v5007
        %5029 = vmatpush.bf16.msra.mxu0 %v5006
        %5030 = vmatmul.bf16.gmra.mxu0 %v4965
        %v5031 = vpop.f32.mrf.mxu0
        %v5032 = vadd.f32 0.0, %v5031
        %v5033 = vpop.f32.mrf.mxu0
        %v5034 = vadd.f32 0.0, %v5033
        %5035 = vmatmul.bf16.gmra.mxu0 %v4966
        %v5036 = vpop.f32.mrf.mxu0
        %v5037 = vadd.f32 0.0, %v5036
        %v5038 = vpop.f32.mrf.mxu0
        %v5039 = vadd.f32 0.0, %v5038
        %5040 = vmatmul.bf16.gmra.mxu0 %v4967
        %v5041 = vpop.f32.mrf.mxu0
        %v5042 = vadd.f32 0.0, %v5041
        %v5043 = vpop.f32.mrf.mxu0
        %v5044 = vadd.f32 0.0, %v5043
        %5045 = vmatmul.bf16.gmra.mxu0 %v4968
        %v5046 = vpop.f32.mrf.mxu0
        %v5047 = vadd.f32 0.0, %v5046
        %v5048 = vpop.f32.mrf.mxu0
        %v5049 = vadd.f32 0.0, %v5048
        %5050 = vmatmul.bf16.gmra.mxu0 %v4969
        %v5051 = vpop.f32.mrf.mxu0
        %v5052 = vadd.f32 0.0, %v5051
        %v5053 = vpop.f32.mrf.mxu0
        %v5054 = vadd.f32 0.0, %v5053
        %5055 = vmatmul.bf16.gmra.mxu0 %v4970
        %v5056 = vpop.f32.mrf.mxu0
        %v5057 = vadd.f32 0.0, %v5056
        %v5058 = vpop.f32.mrf.mxu0
        %v5059 = vadd.f32 0.0, %v5058
        %5060 = vmatmul.bf16.gmra.mxu0 %v4971
        %v5061 = vpop.f32.mrf.mxu0
        %v5062 = vadd.f32 0.0, %v5061
        %v5063 = vpop.f32.mrf.mxu0
        %v5064 = vadd.f32 0.0, %v5063
        %5065 = vmatmul.bf16.gmra.mxu0 %v4972
        %v5066 = vpop.f32.mrf.mxu0
        %v5067 = vadd.f32 0.0, %v5066
        %v5068 = vpop.f32.mrf.mxu0
        %v5069 = vadd.f32 0.0, %v5068
        %5070 = vmatmul.bf16.gmra.mxu0 %v4973
        %v5071 = vpop.f32.mrf.mxu0
        %v5072 = vadd.f32 0.0, %v5071
        %v5073 = vpop.f32.mrf.mxu0
        %v5074 = vadd.f32 0.0, %v5073
        %5075 = vdwg.mxu0
        %v5076 = vadd.f32 %v4236, %v5032
        %v5077 = vadd.f32 %v4237, %v5034
        %v5078 = vadd.f32 %v4238, %v5037
        %v5079 = vadd.f32 %v4239, %v5039
        %v5080 = vadd.f32 %v4240, %v5042
        %v5081 = vadd.f32 %v4241, %v5044
        %v5082 = vadd.f32 %v4242, %v5047
        %v5083 = vadd.f32 %v4243, %v5049
        %v5084 = vadd.f32 %v4244, %v5052
        %v5085 = vadd.f32 %v4245, %v5054
        %v5086 = vadd.f32 %v4246, %v5057
        %v5087 = vadd.f32 %v4247, %v5059
        %v5088 = vadd.f32 %v4248, %v5062
        %v5089 = vadd.f32 %v4249, %v5064
        %v5090 = vadd.f32 %v4250, %v5067
        %v5091 = vadd.f32 %v4251, %v5069
        %v5092 = vadd.f32 %v4252, %v5072
        %v5093 = vadd.f32 %v4253, %v5074
        %v5094 = vperm.slane %v202, 1
        %v5095 = vadd.f32 %v5076, %v5094
        %v5096 = vadd.f32 %v5077, %v5094
        %v5097 = vadd.f32 %v5078, %v5094
        %v5098 = vadd.f32 %v5079, %v5094
        %v5099 = vadd.f32 %v5080, %v5094
        %v5100 = vadd.f32 %v5081, %v5094
        %v5101 = vadd.f32 %v5082, %v5094
        %v5102 = vadd.f32 %v5083, %v5094
        %v5103 = vadd.f32 %v5084, %v5094
        %v5104 = vadd.f32 %v5085, %v5094
        %v5105 = vadd.f32 %v5086, %v5094
        %v5106 = vadd.f32 %v5087, %v5094
        %v5107 = vadd.f32 %v5088, %v5094
        %v5108 = vadd.f32 %v5089, %v5094
        %v5109 = vadd.f32 %v5090, %v5094
        %v5110 = vadd.f32 %v5091, %v5094
        %v5111 = vadd.f32 %v5092, %v5094
        %v5112 = vadd.f32 %v5093, %v5094
        %v5113 = vsel %vm2768, %v5095, 0.0
        %v5114 = vsel %vm2768, %v5096, 0.0
        %v5115 = vadd.f32 %v5113, %v5114
        %v5116 = vsel %vm2768, %v5097, 0.0
        %v5117 = vadd.f32 %v5115, %v5116
        %v5118 = vsel %vm2768, %v5098, 0.0
        %v5119 = vadd.f32 %v5117, %v5118
        %v5120 = vsel %vm2768, %v5099, 0.0
        %v5121 = vadd.f32 %v5119, %v5120
        %v5122 = vsel %vm2768, %v5100, 0.0
        %v5123 = vadd.f32 %v5121, %v5122
        %v5124 = vsel %vm2768, %v5101, 0.0
        %v5125 = vadd.f32 %v5123, %v5124
        %v5126 = vsel %vm2768, %v5102, 0.0
        %v5127 = vadd.f32 %v5125, %v5126
        %v5128 = vsel %vm2768, %v5103, 0.0
        %v5129 = vadd.f32 %v5127, %v5128
        %v5130 = vsel %vm2768, %v5104, 0.0
        %v5131 = vadd.f32 %v5129, %v5130
        %v5132 = vsel %vm2768, %v5105, 0.0
        %v5133 = vadd.f32 %v5131, %v5132
        %v5134 = vsel %vm2768, %v5106, 0.0
        %v5135 = vadd.f32 %v5133, %v5134
        %v5136 = vsel %vm2768, %v5107, 0.0
        %v5137 = vadd.f32 %v5135, %v5136
        %v5138 = vsel %vm2768, %v5108, 0.0
        %v5139 = vadd.f32 %v5137, %v5138
        %v5140 = vsel %vm2768, %v5109, 0.0
        %v5141 = vadd.f32 %v5139, %v5140
        %v5142 = vsel %vm2768, %v5110, 0.0
        %v5143 = vadd.f32 %v5141, %v5142
        %v5144 = vsel %vm2768, %v5111, 0.0
        %v5145 = vadd.f32 %v5143, %v5144
        %v5146 = vsel %vm2768, %v5112, 0.0
        %v5147 = vadd.f32 %v5145, %v5146
        %v5148 = vrot.slane %v5147, 4
        %v5149 = vadd.f32 %v5147, %v5148
        %v5150 = vrot.slane %v5149, 2
        %v5151 = vadd.f32 %v5149, %v5150
        %v5152 = vrot.slane %v5151, 1
        %v5153 = vadd.f32 %v5151, %v5152
        %v5154 = vmul.f32 %v5153, 0.0069444445
        %v5155 = vpack.c.bf16 %v5154, %v5154
        %v5164 = vunpack.c.l.b16 %v371
        %v5165 = vunpack.c.l.b16 %v372
        %v5166 = vunpack.c.l.b16 %v373
        %v5167 = vunpack.c.l.b16 %v374
        %v5168 = vunpack.c.l.b16 %v375
        %v5169 = vunpack.c.l.b16 %v376
        %v5170 = vunpack.c.l.b16 %v377
        %v5171 = vunpack.c.l.b16 %v378
        %v5172 = vpack.c.b16 %v5165, %v5164
        %v5173 = vpack.c.b16 %v5167, %v5166
        %v5174 = vpack.c.b16 %v5169, %v5168
        %v5175 = vpack.c.b16 %v5171, %v5170
        %v5181 = vrot.slane %v202, 2
        %v5184 = vsel %vm2768, %v5155, 0
        %5186 = vmatpush.bf16.msra.mxu0 0
        %5187 = vmatpush.bf16.msra.mxu0 0
        %5188 = vmatpush.bf16.msra.mxu0 0
        %5189 = vmatpush.bf16.msra.mxu0 0
        %5190 = vmatpush.bf16.msra.mxu0 %v5175
        %5191 = vmatpush.bf16.msra.mxu0 %v5174
        %5192 = vmatpush.bf16.msra.mxu0 %v5173
        %5193 = vmatpush.bf16.msra.mxu0 %v5172
        %5194 = vmatmul.bf16.gmra.mxu0 %v5184
        %v5195 = vpop.f32.mrf.mxu0
        %v5196 = vadd.f32 %v5181, %v5195
        %v5197 = vpop.f32.mrf.mxu0
        %5198 = vdwg.mxu0
        %5199 = vst [vmem:[%s192] sm:$0x1] %v5196
        %s5200 = sand.u32 %s115, 1
        %s5201 = scalar_lea.sflag [#allocation3], %s5200
        %s5202 = sand.u32 %s115, 1
        %s5203 = scalar_lea.vmem [#allocation2], %s5202
        // Predicated region
        $region37: #{_lambda_.1} parent=35 // pred_check
          %p5204 = pneg %p125
        $region38: #{_lambda_.1} parent=35 // pred_check_branch
          %5206 = sbr.rel (%p5204) target = $region40
        $region39: #{_lambda_.1} parent=35 // pred_region
          %5208 = vsyncadd %s5201, 0
          %s5209 = scalar_lea.hbm %s4, %s18
          %s5211 = sshll.u32 %s5203, 4
          %s5212 = int_to_ptr.vmem [resolvable:$true] %s5211
          %s5213 = sshll.u32 %s5209, 4
          %s5214 = int_to_ptr.hbm [resolvable:$true] %s5213
          %5216 = dma.vmem_to_hbm [thread:$0]  %s5212, 16, %s5214, %s5201
        $region40: #{_lambda_.1} parent=35 // pred_fallthru
          _
      $region36: #{_lambda_.1} parent=5 // pred_fallthru
        _
      %p5217 = scmp.le.s32.totalorder 2, %s13
      // Predicated region
      $region41: #{_lambda_.1} parent=5 // pred_check
        %p5218 = pneg %p5217
      $region42: #{_lambda_.1} parent=5 // pred_check_branch
        %5220 = sbr.rel (%p5218) target = $region44
      $region43: #{_lambda_.1} parent=5 // pred_region
        %s5221 = ssub.s32 %s13, 2
        // Predicated region
        $region45: #{_lambda_.1} parent=43 // pred_check
          %p5222 = pneg %p131
        $region46: #{_lambda_.1} parent=43 // pred_check_branch
          %5224 = sbr.rel (%p5222) target = $region48
        $region47: #{_lambda_.1} parent=43 // pred_region
          %s5225 = sand.u32 %s116, 1
          %s5226 = scalar_lea.sflag [#allocation3], %s5225
          %s5227 = sand.u32 %s116, 1
          %s5228 = scalar_lea.vmem [#allocation2], %s5227
          %5230 = dma.done %s5226, 16
        $region48: #{_lambda_.1} parent=43 // pred_fallthru
          _
      $region44: #{_lambda_.1} parent=5 // pred_fallthru
        _
    $region6: #{_lambda_.1} parent=1 // loop_footer
      %s17 = sadd.s32 1, %s13
    $region7: #{_lambda_.1} parent=1 // loop_footer_branch
      %12 = sbr.rel target = $region3
    $region8: #{_lambda_.1} parent=1 // loop_exit
      _
    %5231 = vsyncpa [#allocation3], 1
    %s5232 = scalar_lea.sflag [#allocation3], 1
    %5233 = vsyncpa %s5232, 1

</llo_original>
